<compile_context>
chip_gen: v7x
topology: tpu7x:2x2x1
jax: 0.10.0
libtpu: 0.0.40
codegen_flags: <defaults>
</compile_context>

<pallas_src>
import functools
import math

import jax
import jax.numpy as jnp
from jax.experimental import pallas as pl
from jax.experimental.pallas import tpu as pltpu


def _round_up(x, m):
    return ((x + m - 1) // m) * m


# --------------------------- row-tiled linear kernel -------------------------

def _linear_kernel(x_ref, w_ref, b_ref, o_ref):
    o_ref[...] = (jnp.dot(x_ref[...], w_ref[...],
                          preferred_element_type=jnp.float32)
                  + b_ref[...]).astype(o_ref.dtype)


def pallas_linear(x, w, b, tile_m=512):
    """y = x @ w + b.   x:(M,K)  w:(K,Nout)  b:(Nout,)  -> (M,Nout) f32."""
    M, K = x.shape
    Nout = w.shape[1]
    tm = min(tile_m, _round_up(M, 8))
    Mp = _round_up(M, tm)
    if Mp != M:
        x = jnp.pad(x, ((0, Mp - M), (0, 0)))
    out = pl.pallas_call(
        _linear_kernel,
        out_shape=jax.ShapeDtypeStruct((Mp, Nout), jnp.float32),
        grid=(Mp // tm,),
        in_specs=[
            pl.BlockSpec((tm, K), lambda i: (i, 0)),
            pl.BlockSpec((K, Nout), lambda i: (0, 0)),
            pl.BlockSpec((1, Nout), lambda i: (0, 0)),
        ],
        out_specs=pl.BlockSpec((tm, Nout), lambda i: (i, 0)),
        compiler_params=pltpu.CompilerParams(
            dimension_semantics=("parallel",)),
    )(x, w, b.reshape(1, Nout))
    return out[:M]


# --------------------------- deformable aggregation kernel -------------------

def _deform_agg_kernel(idx_ref, w_ref, v_ref, o_ref, acc_ref, *,
                       n_heads, d_head, n_corners, s_tile):
    # idx_ref : (1, tq, H*C) int32   corner spatial indices (clipped in-range)
    # w_ref   : (1, tq, H*C) float32 bilinear*attention weights (masked in f32)
    # v_ref   : (1, H, ts, d_head)   bf16 values for the current S tile
    # o_ref   : (1, tq, H*d_head)    f32 output (lane-dense, head-major columns)
    # acc_ref : (tq, H*d_head)       f32 accumulator across S tiles
    k = pl.program_id(2)

    @pl.when(k == 0)
    def _init():
        acc_ref[...] = jnp.zeros_like(acc_ref)

    idx = idx_ref[0]                      # (tq, H*C)
    wts = w_ref[0]                        # (tq, H*C)
    q_tile = idx.shape[0]
    s_base = k * s_tile
    s_ids = jax.lax.broadcasted_iota(jnp.int32, (q_tile, s_tile), 1) + s_base

    head_outs = []
    for h in range(n_heads):
        # rebuild the sparse A tile for this head inside VMEM (never in HBM)
        a_tile = jnp.zeros((q_tile, s_tile), jnp.float32)
        for c in range(n_corners):
            col = h * n_corners + c
            a_tile = a_tile + jnp.where(idx[:, col:col + 1] == s_ids,
                                        wts[:, col:col + 1], 0.0)
        v_h = v_ref[0, h]                 # (ts, d_head) bf16
        head_outs.append(jnp.dot(a_tile.astype(v_h.dtype), v_h,
                                 preferred_element_type=jnp.float32))
    acc_ref[...] += jnp.concatenate(head_outs, axis=-1)

    @pl.when(k == pl.num_programs(2) - 1)
    def _store():
        o_ref[0] = acc_ref[...].astype(o_ref.dtype)


def pallas_deform_aggregate(idx, wts, values, *, n_heads, d_head,
                            tile_q=128, tile_s=512):
    """Deformable attention gather+weighted-sum.

    idx, wts : (B, Lq, H*C)       compact corner tables
    values   : (B, H, S, d_head)  bf16
    returns  : (B, Lq, H*d_head)  f32   (head-major channel layout)
    """
    B, Lq, HC = idx.shape
    S = values.shape[2]
    d_model = n_heads * d_head
    n_corners = HC // n_heads

    tq = min(tile_q, _round_up(Lq, 8))
    Lq_p = _round_up(Lq, tq)
    ts = min(tile_s, _round_up(S, 8))
    S_p = _round_up(S, ts)
    if Lq_p != Lq:
        idx = jnp.pad(idx, ((0, 0), (0, Lq_p - Lq), (0, 0)))
        wts = jnp.pad(wts, ((0, 0), (0, Lq_p - Lq), (0, 0)))
    if S_p != S:
        values = jnp.pad(values, ((0, 0), (0, 0), (0, S_p - S), (0, 0)))

    kernel = functools.partial(_deform_agg_kernel, n_heads=n_heads,
                               d_head=d_head, n_corners=n_corners, s_tile=ts)
    out = pl.pallas_call(
        kernel,
        out_shape=jax.ShapeDtypeStruct((B, Lq_p, d_model), jnp.float32),
        grid=(B, Lq_p // tq, S_p // ts),
        in_specs=[
            pl.BlockSpec((1, tq, HC), lambda b, q, k: (b, q, 0)),
            pl.BlockSpec((1, tq, HC), lambda b, q, k: (b, q, 0)),
            pl.BlockSpec((1, n_heads, ts, d_head), lambda b, q, k: (b, 0, k, 0)),
        ],
        out_specs=pl.BlockSpec((1, tq, d_model), lambda b, q, k: (b, q, 0)),
        scratch_shapes=[pltpu.VMEM((tq, d_model), jnp.float32)],
        compiler_params=pltpu.CompilerParams(
            dimension_semantics=("parallel", "parallel", "arbitrary"),
            vmem_limit_bytes=48 * 1024 * 1024),
    )(idx, wts, values)
    return out[:, :Lq]


# --------------------------- parameters (mirror _reset_parameters) -----------

def init_params(key, d_model, n_levels, n_heads, n_points, num_iter):
    kv, ko, ka = jax.random.split(key, 3)
    n_off = n_heads * n_levels * n_points * 2
    n_aw = n_heads * n_levels * n_points

    # sampling_offsets: weight = 0, bias = directional grid
    w_off = jnp.zeros((n_off, d_model), jnp.float32)
    thetas = jnp.arange(n_heads, dtype=jnp.float32) * (2.0 * math.pi / n_heads)
    grid = jnp.stack([jnp.cos(thetas), jnp.sin(thetas)], axis=-1)
    grid = grid / jnp.max(jnp.abs(grid), axis=-1, keepdims=True)
    grid = jnp.tile(grid.reshape(n_heads, 1, 1, 2), (1, n_levels, n_points, 1))
    grid = grid * jnp.arange(1, n_points + 1,
                             dtype=jnp.float32).reshape(1, 1, n_points, 1)
    b_off = grid.reshape(-1)

    # attention_weights: weight = 0, bias = 0
    w_aw = jnp.zeros((n_aw, d_model), jnp.float32)
    b_aw = jnp.zeros((n_aw,), jnp.float32)

    def xavier(k, shape):
        bound = math.sqrt(6.0 / (shape[0] + shape[1]))
        return jax.random.uniform(k, shape, jnp.float32, -bound, bound)

    w_val = xavier(kv, (d_model, d_model))
    w_out = xavier(ko, (d_model, d_model))
    w_agg = xavier(ka, (d_model, d_model * num_iter))
    zeros = jnp.zeros((d_model,), jnp.float32)
    return dict(w_off=w_off, b_off=b_off, w_aw=w_aw, b_aw=b_aw,
                w_val=w_val, b_val=zeros, w_out=w_out, b_out=zeros,
                w_agg=w_agg, b_agg=zeros)


# --------------------------- shared glue --------------------------------------

def _jnp_linear(x, w, b):
    return x @ w + b


def _projections(params, cfg, query_list, input_flatten_list,
                 input_padding_mask, linear_fn):
    T = cfg["num_iter"]
    d_model, Hh = cfg["d_model"], cfg["n_heads"]
    L, P = cfg["n_levels"], cfg["n_points"]
    N, Lq, _ = query_list[0].shape
    _, Len_in, _ = input_flatten_list[0].shape

    q_all = jnp.stack(query_list, 0).reshape(T * N * Lq, d_model)
    x_all = jnp.stack(input_flatten_list, 0).reshape(T * N * Len_in, d_model)

    v_all = linear_fn(x_all, params["w_val"].T,
                      params["b_val"]).reshape(T, N, Len_in, d_model)
    if input_padding_mask is not None:
        v_all = jnp.where(input_padding_mask[None, :, :, None], 0.0, v_all)

    off_all = linear_fn(q_all, params["w_off"].T,
                        params["b_off"]).reshape(T, N, Lq, Hh, L, P, 2)
    aw_all = linear_fn(q_all, params["w_aw"].T,
                       params["b_aw"]).reshape(T, N, Lq, Hh, L * P)

    # joint softmax over (frame, level, point) in frame-major order (= torch.cat)
    aw_cat = jnp.transpose(aw_all, (1, 2, 3, 0, 4)).reshape(N, Lq, Hh, T * L * P)
    aw_soft = jax.nn.softmax(aw_cat, axis=-1).reshape(N, Lq, Hh, T, L, P)
    attn_all = jnp.transpose(aw_soft, (3, 0, 1, 2, 4, 5))   # (T,N,Lq,H,L,P)
    return v_all, off_all, attn_all


def _sampling_locations(off_all, reference_points, input_spatial_shapes):
    # reference_points: (N, Lq, L, 2); off_all: (T, N, Lq, H, L, P, 2)
    offset_normalizer = jnp.stack(
        [input_spatial_shapes[..., 1], input_spatial_shapes[..., 0]],
        axis=-1).astype(jnp.float32)                         # (L, 2) -> (W,H)
    return (reference_points[None, :, :, None, :, None, :]
            + off_all / offset_normalizer[None, None, None, None, :, None, :])


def _corner_tables(sampling_locations, attn, spatial_shapes_py, level_start_py):
    """Compact bilinear corner tables (no dense one-hot / A matrix).

    sampling_locations : (B, Lq, H, L, P, 2)
    attn               : (B, Lq, H, L, P)
    returns idx, wts   : (B, Lq, H * L*P*4)   int32 / float32
    """
    B, Lq, Hh, L, P, _ = sampling_locations.shape
    idx_levels, w_levels = [], []
    for l, (Hl, Wl) in enumerate(spatial_shapes_py):
        start = level_start_py[l]
        loc = sampling_locations[:, :, :, l]                 # (B,Lq,H,P,2)
        aw = attn[:, :, :, l]                                # (B,Lq,H,P)
        ix = loc[..., 0] * Wl - 0.5
        iy = loc[..., 1] * Hl - 0.5
        x0f = jnp.floor(ix)
        y0f = jnp.floor(iy)
        fx = ix - x0f
        fy = iy - y0f
        x0 = x0f.astype(jnp.int32)
        y0 = y0f.astype(jnp.int32)
        c_idx, c_w = [], []
        for yy, xx, wgt in ((y0, x0, (1 - fy) * (1 - fx)),
                            (y0, x0 + 1, (1 - fy) * fx),
                            (y0 + 1, x0, fy * (1 - fx)),
                            (y0 + 1, x0 + 1, fy * fx)):
            valid = (yy >= 0) & (yy < Hl) & (xx >= 0) & (xx < Wl)
            # mask applied in f32 BEFORE any cast so clipped/aliased indices
            # can never leak a non-zero weight
            c_w.append(jnp.where(valid, wgt, 0.0) * aw)
            c_idx.append(jnp.clip(yy, 0, Hl - 1) * Wl
                         + jnp.clip(xx, 0, Wl - 1) + start)
        idx_levels.append(jnp.stack(c_idx, axis=-1))          # (B,Lq,H,P,4)
        w_levels.append(jnp.stack(c_w, axis=-1))
    idx = jnp.stack(idx_levels, axis=3)                       # (B,Lq,H,L,P,4)
    wts = jnp.stack(w_levels, axis=3)
    C = L * P * 4
    return (idx.reshape(B, Lq, Hh * C).astype(jnp.int32),
            wts.reshape(B, Lq, Hh * C).astype(jnp.float32))


# --------------------------- forward (Pallas) ---------------------------------

def msdeform_attn_statrans_forward(params, cfg, query_list, reference_points,
                                   input_flatten_list, input_spatial_shapes,
                                   input_level_start_index, spatial_shapes_py,
                                   level_start_py, input_padding_mask=None):
    del input_level_start_index  # static python copy (level_start_py) is used
    T = cfg["num_iter"]
    assert cfg["seq_length"] == T
    d_model, Hh = cfg["d_model"], cfg["n_heads"]
    L, P = cfg["n_levels"], cfg["n_points"]
    Dh = d_model // Hh
    N, Lq, _ = query_list[0].shape
    _, Len_in, _ = input_flatten_list[0].shape
    B = T * N

    v_all, off_all, attn_all = _projections(
        params, cfg, query_list, input_flatten_list, input_padding_mask,
        pallas_linear)
    sampling_locations = _sampling_locations(off_all, reference_points,
                                             input_spatial_shapes)

    # compact corner tables -- the dense A matrix never touches HBM
    idx_b, w_b = _corner_tables(sampling_locations.reshape(B, Lq, Hh, L, P, 2),
                                attn_all.reshape(B, Lq, Hh, L, P),
                                spatial_shapes_py, level_start_py)

    # values (B, H, S, d_head) in bf16: full MXU rate + half the DMA bytes
    v_b = (v_all.reshape(B, Len_in, Hh, Dh)
                .transpose(0, 2, 1, 3)
                .astype(jnp.bfloat16))

    # fused gather + weighted sum; output already in (B, Lq, H*d_head) layout
    agg = pallas_deform_aggregate(idx_b, w_b, v_b, n_heads=Hh, d_head=Dh)

    # per-frame output_proj (all frames in one tiled matmul)
    o_proj = pallas_linear(agg.reshape(B * Lq, d_model),
                           params["w_out"].T,
                           params["b_out"]).reshape(T, N, Lq, d_model)
    # frame-major channel concat, then spatio_temporal_agg
    o_cat = jnp.transpose(o_proj, (1, 2, 0, 3)).reshape(N * Lq, T * d_model)
    out = pallas_linear(o_cat, params["w_agg"].T, params["b_agg"])
    return out.reshape(N, Lq, d_model)


# --------------------------- pure-JAX reference (gather-based) ----------------

def reference_forward(params, cfg, query_list, reference_points,
                      input_flatten_list, input_spatial_shapes,
                      spatial_shapes_py, level_start_py,
                      input_padding_mask=None):
    T = cfg["num_iter"]
    d_model, Hh = cfg["d_model"], cfg["n_heads"]
    Dh = d_model // Hh
    N, Lq, _ = query_list[0].shape
    _, Len_in, _ = input_flatten_list[0].shape

    v_all, off_all, attn_all = _projections(
        params, cfg, query_list, input_flatten_list, input_padding_mask,
        _jnp_linear)
    sampling_locations = _sampling_locations(off_all, reference_points,
                                             input_spatial_shapes)

    n_idx = jnp.arange(N).reshape(N, 1, 1, 1)
    h_idx = jnp.arange(Hh).reshape(1, 1, Hh, 1)
    out_frames = []
    for t in range(T):
        v_t = v_all[t].reshape(N, Len_in, Hh, Dh)
        acc = jnp.zeros((N, Lq, Hh, Dh), jnp.float32)
        for l, (Hl, Wl) in enumerate(spatial_shapes_py):
            start = level_start_py[l]
            v_l = v_t[:, start:start + Hl * Wl]
            loc = sampling_locations[t][:, :, :, l]
            aw = attn_all[t][:, :, :, l]
            ix = loc[..., 0] * Wl - 0.5
            iy = loc[..., 1] * Hl - 0.5
            x0f = jnp.floor(ix)
            y0f = jnp.floor(iy)
            fx = ix - x0f
            fy = iy - y0f
            x0 = x0f.astype(jnp.int32)
            y0 = y0f.astype(jnp.int32)
            for yy, xx, wgt in ((y0, x0, (1 - fy) * (1 - fx)),
                                (y0, x0 + 1, (1 - fy) * fx),
                                (y0 + 1, x0, fy * (1 - fx)),
                                (y0 + 1, x0 + 1, fy * fx)):
                valid = (yy >= 0) & (yy < Hl) & (xx >= 0) & (xx < Wl)
                flat = jnp.clip(yy, 0, Hl - 1) * Wl + jnp.clip(xx, 0, Wl - 1)
                sampled = v_l[n_idx, flat, h_idx]            # (N,Lq,H,P,Dh)
                w_eff = (jnp.where(valid, wgt, 0.0) * aw)[..., None]
                acc = acc + jnp.sum(w_eff * sampled, axis=3)
        out_t = acc.reshape(N * Lq, d_model)
        out_frames.append(_jnp_linear(out_t, params["w_out"].T,
                                      params["b_out"]).reshape(N, Lq, d_model))
    o_cat = jnp.concatenate(out_frames, axis=-1)
    out = _jnp_linear(o_cat.reshape(N * Lq, T * d_model),
                      params["w_agg"].T, params["b_agg"])
    return out.reshape(N, Lq, d_model)


# --------------------------- main ---------------------------------------------

if __name__ == "__main__":
    key = jax.random.PRNGKey(0)
    N, Len_q = 2, 8
    d_model, n_heads, n_levels, n_points = 32, 4, 2, 4
    seq_length = num_iter = 2
    spatial_shapes_py = [(8, 8), (4, 4)]
    level_start_py = [0, 64]
    Len_in = sum(h * w for h, w in spatial_shapes_py)        # 80

    cfg = dict(d_model=d_model, n_levels=n_levels, n_heads=n_heads,
               n_points=n_points, num_iter=num_iter, seq_length=seq_length)

    keys = jax.random.split(key, 10)
    params = init_params(keys[0], d_model, n_levels, n_heads, n_points, num_iter)

    query_list = [jax.random.normal(keys[1 + t], (N, Len_q, d_model), jnp.float32)
                  for t in range(num_iter)]
    input_flatten_list = [jax.random.normal(keys[4 + t], (N, Len_in, d_model),
                                            jnp.float32)
                          for t in range(num_iter)]
    reference_points = jax.random.uniform(
        keys[8], (N, Len_q, n_levels, 2), jnp.float32)
    input_spatial_shapes = jnp.array(spatial_shapes_py, dtype=jnp.int32)
    input_level_start_index = jnp.array(level_start_py, dtype=jnp.int32)
    # mask the last few positions of the second level (True = padding)
    input_padding_mask = jnp.zeros((N, Len_in), bool).at[:, Len_in - 6:].set(True)

    @jax.jit
    def run(params, query_list, reference_points, input_flatten_list, mask):
        return msdeform_attn_statrans_forward(
            params, cfg, query_list, reference_points, input_flatten_list,
            input_spatial_shapes, input_level_start_index,
            spatial_shapes_py, level_start_py, input_padding_mask=mask)

    out = run(params, query_list, reference_points, input_flatten_list,
              input_padding_mask)
    out = jax.block_until_ready(out)

    ref = reference_forward(
        params, cfg, query_list, reference_points, input_flatten_list,
        input_spatial_shapes, spatial_shapes_py, level_start_py,
        input_padding_mask=input_padding_mask)
    ref = jax.block_until_ready(ref)

    assert out.shape == (N, Len_q, d_model), out.shape
    # bf16 A/V on the MXU (f32 accumulation) -> slightly relaxed tolerance
    assert jnp.allclose(out, ref, atol=1e-2, rtol=1e-2), \
        float(jnp.max(jnp.abs(out - ref)))
    print("KERNEL_OK")
</pallas_src>

<mosaic_0001>
module attributes {stable_mosaic.version = 11 : i64} {
  func.func @_linear_kernel(%arg0: i32, %arg1: memref<32x32xf32, #tpu.memory_space<vmem>>, %arg2: memref<32x32xf32, #tpu.memory_space<vmem>>, %arg3: memref<1x32xf32, #tpu.memory_space<vmem>>, %arg4: memref<32x32xf32, #tpu.memory_space<vmem>>) attributes {dimension_semantics = [#tpu.dimension_semantics<parallel>], iteration_bounds = array<i64: 1>, scalar_prefetch = 0 : i64, scratch_operands = 0 : i64, tpu.core_type = #tpu.core_type<tc>, window_params = [{transform_indices = @transform_0, window_bounds = array<i64: 32, 32>}, {pipeline_mode = #tpu.pipeline_mode<synchronous>, transform_indices = @transform_1, window_bounds = array<i64: 32, 32>}, {pipeline_mode = #tpu.pipeline_mode<synchronous>, transform_indices = @transform_2, window_bounds = array<i64: 1, 32>}, {transform_indices = @transform_3, window_bounds = array<i64: 32, 32>}]} {
    %c0 = arith.constant 0 : index
    %c0_0 = arith.constant 0 : index
    %0 = vector.load %arg1[%c0, %c0_0] : memref<32x32xf32, #tpu.memory_space<vmem>>, vector<32x32xf32>
    %c0_1 = arith.constant 0 : index
    %c0_2 = arith.constant 0 : index
    %1 = vector.load %arg2[%c0_1, %c0_2] : memref<32x32xf32, #tpu.memory_space<vmem>>, vector<32x32xf32>
    %cst = arith.constant dense<0.000000e+00> : vector<32x32xf32>
    %2 = tpu.matmul %0, %1, %cst {dimension_numbers = #tpu.dot_dimension_numbers<[1], [0], [0], [1], [0, 0, 1, 1], [], []>} : vector<32x32xf32>, vector<32x32xf32>, vector<32x32xf32> -> vector<32x32xf32>
    %c0_3 = arith.constant 0 : index
    %c0_4 = arith.constant 0 : index
    %3 = vector.load %arg3[%c0_3, %c0_4] : memref<1x32xf32, #tpu.memory_space<vmem>>, vector<1x32xf32>
    %4 = vector.broadcast %3 : vector<1x32xf32> to vector<32x32xf32>
    %5 = arith.addf %2, %4 : vector<32x32xf32>
    %c0_5 = arith.constant 0 : index
    %c0_6 = arith.constant 0 : index
    %6 = vector.load %arg4[%c0_5, %c0_6] : memref<32x32xf32, #tpu.memory_space<vmem>>, vector<32x32xf32>
    tpu.vector_store %arg4[%c0_5, %c0_6], %5 {strides = array<i32>} : memref<32x32xf32, #tpu.memory_space<vmem>>, vector<32x32xf32>,
    return
  }
  func.func @transform_0(%arg0: i32) -> (i32, i32) {
    %c0_i32 = arith.constant 0 : i32
    %c0_i32_0 = arith.constant 0 : i32
    return %arg0, %c0_i32 : i32, i32
  }
  func.func @transform_1(%arg0: i32) -> (i32, i32) {
    %c0_i32 = arith.constant 0 : i32
    %c0_i32_0 = arith.constant 0 : i32
    %c0_i32_1 = arith.constant 0 : i32
    return %c0_i32, %c0_i32_0 : i32, i32
  }
  func.func @transform_2(%arg0: i32) -> (i32, i32) {
    %c0_i32 = arith.constant 0 : i32
    %c0_i32_0 = arith.constant 0 : i32
    %c0_i32_1 = arith.constant 0 : i32
    return %c0_i32, %c0_i32_0 : i32, i32
  }
  func.func @transform_3(%arg0: i32) -> (i32, i32) {
    %c0_i32 = arith.constant 0 : i32
    %c0_i32_0 = arith.constant 0 : i32
    return %arg0, %c0_i32 : i32, i32
  }
}

module attributes {stable_mosaic.version = 11 : i64} {
  func.func @_linear_kernel(%arg0: i32, %arg1: memref<32x32xf32, #tpu.memory_space<vmem>>, %arg2: memref<32x64xf32, #tpu.memory_space<vmem>>, %arg3: memref<1x64xf32, #tpu.memory_space<vmem>>, %arg4: memref<32x64xf32, #tpu.memory_space<vmem>>) attributes {dimension_semantics = [#tpu.dimension_semantics<parallel>], iteration_bounds = array<i64: 1>, scalar_prefetch = 0 : i64, scratch_operands = 0 : i64, tpu.core_type = #tpu.core_type<tc>, window_params = [{transform_indices = @transform_0, window_bounds = array<i64: 32, 32>}, {pipeline_mode = #tpu.pipeline_mode<synchronous>, transform_indices = @transform_1, window_bounds = array<i64: 32, 64>}, {pipeline_mode = #tpu.pipeline_mode<synchronous>, transform_indices = @transform_2, window_bounds = array<i64: 1, 64>}, {transform_indices = @transform_3, window_bounds = array<i64: 32, 64>}]} {
    %c0 = arith.constant 0 : index
    %c0_0 = arith.constant 0 : index
    %0 = vector.load %arg1[%c0, %c0_0] : memref<32x32xf32, #tpu.memory_space<vmem>>, vector<32x32xf32>
    %c0_1 = arith.constant 0 : index
    %c0_2 = arith.constant 0 : index
    %1 = vector.load %arg2[%c0_1, %c0_2] : memref<32x64xf32, #tpu.memory_space<vmem>>, vector<32x64xf32>
    %cst = arith.constant dense<0.000000e+00> : vector<32x64xf32>
    %2 = tpu.matmul %0, %1, %cst {dimension_numbers = #tpu.dot_dimension_numbers<[1], [0], [0], [1], [0, 0, 1, 1], [], []>} : vector<32x32xf32>, vector<32x64xf32>, vector<32x64xf32> -> vector<32x64xf32>
    %c0_3 = arith.constant 0 : index
    %c0_4 = arith.constant 0 : index
    %3 = vector.load %arg3[%c0_3, %c0_4] : memref<1x64xf32, #tpu.memory_space<vmem>>, vector<1x64xf32>
    %4 = vector.broadcast %3 : vector<1x64xf32> to vector<32x64xf32>
    %5 = arith.addf %2, %4 : vector<32x64xf32>
    %c0_5 = arith.constant 0 : index
    %c0_6 = arith.constant 0 : index
    %6 = vector.load %arg4[%c0_5, %c0_6] : memref<32x64xf32, #tpu.memory_space<vmem>>, vector<32x64xf32>
    tpu.vector_store %arg4[%c0_5, %c0_6], %5 {strides = array<i32>} : memref<32x64xf32, #tpu.memory_space<vmem>>, vector<32x64xf32>,
    return
  }
  func.func @transform_0(%arg0: i32) -> (i32, i32) {
    %c0_i32 = arith.constant 0 : i32
    %c0_i32_0 = arith.constant 0 : i32
    return %arg0, %c0_i32 : i32, i32
  }
  func.func @transform_1(%arg0: i32) -> (i32, i32) {
    %c0_i32 = arith.constant 0 : i32
    %c0_i32_0 = arith.constant 0 : i32
    %c0_i32_1 = arith.constant 0 : i32
    return %c0_i32, %c0_i32_0 : i32, i32
  }
  func.func @transform_2(%arg0: i32) -> (i32, i32) {
    %c0_i32 = arith.constant 0 : i32
    %c0_i32_0 = arith.constant 0 : i32
    %c0_i32_1 = arith.constant 0 : i32
    return %c0_i32, %c0_i32_0 : i32, i32
  }
  func.func @transform_3(%arg0: i32) -> (i32, i32) {
    %c0_i32 = arith.constant 0 : i32
    %c0_i32_0 = arith.constant 0 : i32
    return %arg0, %c0_i32 : i32, i32
  }
}

module attributes {stable_mosaic.version = 11 : i64} {
  func.func @_linear_kernel(%arg0: i32, %arg1: memref<320x32xf32, #tpu.memory_space<vmem>>, %arg2: memref<32x32xf32, #tpu.memory_space<vmem>>, %arg3: memref<1x32xf32, #tpu.memory_space<vmem>>, %arg4: memref<320x32xf32, #tpu.memory_space<vmem>>) attributes {dimension_semantics = [#tpu.dimension_semantics<parallel>], iteration_bounds = array<i64: 1>, scalar_prefetch = 0 : i64, scratch_operands = 0 : i64, tpu.core_type = #tpu.core_type<tc>, window_params = [{transform_indices = @transform_0, window_bounds = array<i64: 320, 32>}, {pipeline_mode = #tpu.pipeline_mode<synchronous>, transform_indices = @transform_1, window_bounds = array<i64: 32, 32>}, {pipeline_mode = #tpu.pipeline_mode<synchronous>, transform_indices = @transform_2, window_bounds = array<i64: 1, 32>}, {transform_indices = @transform_3, window_bounds = array<i64: 320, 32>}]} {
    %c0 = arith.constant 0 : index
    %c0_0 = arith.constant 0 : index
    %0 = vector.load %arg1[%c0, %c0_0] : memref<320x32xf32, #tpu.memory_space<vmem>>, vector<320x32xf32>
    %c0_1 = arith.constant 0 : index
    %c0_2 = arith.constant 0 : index
    %1 = vector.load %arg2[%c0_1, %c0_2] : memref<32x32xf32, #tpu.memory_space<vmem>>, vector<32x32xf32>
    %cst = arith.constant dense<0.000000e+00> : vector<320x32xf32>
    %2 = tpu.matmul %0, %1, %cst {dimension_numbers = #tpu.dot_dimension_numbers<[1], [0], [0], [1], [0, 0, 1, 1], [], []>} : vector<320x32xf32>, vector<32x32xf32>, vector<320x32xf32> -> vector<320x32xf32>
    %c0_3 = arith.constant 0 : index
    %c0_4 = arith.constant 0 : index
    %3 = vector.load %arg3[%c0_3, %c0_4] : memref<1x32xf32, #tpu.memory_space<vmem>>, vector<1x32xf32>
    %4 = vector.broadcast %3 : vector<1x32xf32> to vector<320x32xf32>
    %5 = arith.addf %2, %4 : vector<320x32xf32>
    %c0_5 = arith.constant 0 : index
    %c0_6 = arith.constant 0 : index
    %6 = vector.load %arg4[%c0_5, %c0_6] : memref<320x32xf32, #tpu.memory_space<vmem>>, vector<320x32xf32>
    tpu.vector_store %arg4[%c0_5, %c0_6], %5 {strides = array<i32>} : memref<320x32xf32, #tpu.memory_space<vmem>>, vector<320x32xf32>,
    return
  }
  func.func @transform_0(%arg0: i32) -> (i32, i32) {
    %c0_i32 = arith.constant 0 : i32
    %c0_i32_0 = arith.constant 0 : i32
    return %arg0, %c0_i32 : i32, i32
  }
  func.func @transform_1(%arg0: i32) -> (i32, i32) {
    %c0_i32 = arith.constant 0 : i32
    %c0_i32_0 = arith.constant 0 : i32
    %c0_i32_1 = arith.constant 0 : i32
    return %c0_i32, %c0_i32_0 : i32, i32
  }
  func.func @transform_2(%arg0: i32) -> (i32, i32) {
    %c0_i32 = arith.constant 0 : i32
    %c0_i32_0 = arith.constant 0 : i32
    %c0_i32_1 = arith.constant 0 : i32
    return %c0_i32, %c0_i32_0 : i32, i32
  }
  func.func @transform_3(%arg0: i32) -> (i32, i32) {
    %c0_i32 = arith.constant 0 : i32
    %c0_i32_0 = arith.constant 0 : i32
    return %arg0, %c0_i32 : i32, i32
  }
}

module attributes {stable_mosaic.version = 11 : i64} {
  func.func @_deform_agg_kernel(%arg0: i32, %arg1: i32, %arg2: i32, %arg3: memref<1x8x128xi32, #tpu.memory_space<vmem>>, %arg4: memref<1x8x128xf32, #tpu.memory_space<vmem>>, %arg5: memref<1x4x80x8xbf16, #tpu.memory_space<vmem>>, %arg6: memref<1x8x32xf32, #tpu.memory_space<vmem>>, %arg7: memref<8x32xf32, #tpu.memory_space<vmem>>) attributes {dimension_semantics = [#tpu.dimension_semantics<parallel>, #tpu.dimension_semantics<parallel>, #tpu.dimension_semantics<arbitrary>], iteration_bounds = array<i64: 4, 1, 1>, scalar_prefetch = 0 : i64, scratch_operands = 1 : i64, tpu.core_type = #tpu.core_type<tc>, window_params = [{transform_indices = @transform_0, window_bounds = array<i64: 1, 8, 128>}, {transform_indices = @transform_1, window_bounds = array<i64: 1, 8, 128>}, {transform_indices = @transform_2, window_bounds = array<i64: 1, 4, 80, 8>}, {transform_indices = @transform_3, window_bounds = array<i64: 1, 8, 32>}]} {
    %c0_i32 = arith.constant 0 : i32
    %0 = arith.cmpi eq, %arg2, %c0_i32 : i32
    %1 = arith.extui %0 : i1 to i32
    %c0_i32_0 = arith.constant 0 : i32
    %2 = arith.cmpi ne, %1, %c0_i32_0 : i32
    scf.if %2 {
      %cst_160 = arith.constant 0.000000e+00 : f32
      %1190 = vector.broadcast %cst_160 : f32 to vector<8x32xf32>
      %c0_161 = arith.constant 0 : index
      %c0_162 = arith.constant 0 : index
      %1191 = vector.load %arg7[%c0_161, %c0_162] : memref<8x32xf32, #tpu.memory_space<vmem>>, vector<8x32xf32>
      tpu.vector_store %arg7[%c0_161, %c0_162], %1190 {strides = array<i32>} : memref<8x32xf32, #tpu.memory_space<vmem>>, vector<8x32xf32>,
    } else {
    }
    %c0 = arith.constant 0 : index
    %c0_1 = arith.constant 0 : index
    %c0_2 = arith.constant 0 : index
    %3 = vector.load %arg3[%c0, %c0_1, %c0_2] : memref<1x8x128xi32, #tpu.memory_space<vmem>>, vector<1x8x128xi32>
    %4 = vector.shape_cast %3 : vector<1x8x128xi32> to vector<8x128xi32>
    %c0_3 = arith.constant 0 : index
    %c0_4 = arith.constant 0 : index
    %c0_5 = arith.constant 0 : index
    %5 = vector.load %arg4[%c0_3, %c0_4, %c0_5] : memref<1x8x128xf32, #tpu.memory_space<vmem>>, vector<1x8x128xf32>
    %6 = vector.shape_cast %5 : vector<1x8x128xf32> to vector<8x128xf32>
    %c80_i32 = arith.constant 80 : i32
    %7 = arith.muli %arg2, %c80_i32 : i32
    %8 = tpu.iota {dimensions = array<i32: 1>} : vector<8x80xi32>
    %9 = vector.broadcast %7 : i32 to vector<8x80xi32>
    %10 = arith.addi %8, %9 : vector<8x80xi32>
    %cst = arith.constant 0.000000e+00 : f32
    %11 = vector.broadcast %cst : f32 to vector<8x80xf32>
    %12 = vector.extract_strided_slice %4 {offsets = [0, 0], sizes = [8, 1], strides = [1, 1]} : vector<8x128xi32> to vector<8x1xi32>
    %13 = vector.broadcast %12 : vector<8x1xi32> to vector<8x80xi32>
    %14 = arith.cmpi eq, %13, %10 : vector<8x80xi32>
    %15 = vector.extract_strided_slice %6 {offsets = [0, 0], sizes = [8, 1], strides = [1, 1]} : vector<8x128xf32> to vector<8x1xf32>
    %cst_6 = arith.constant 0.000000e+00 : f32
    %16 = vector.shape_cast %15 : vector<8x1xf32> to vector<8x1xf32>
    %17 = vector.broadcast %16 : vector<8x1xf32> to vector<8x80xf32>
    %18 = vector.broadcast %cst_6 : f32 to vector<8x80xf32>
    %19 = arith.select %14, %17, %18 : vector<8x80xi1>, vector<8x80xf32>
    %20 = arith.addf %11, %19 : vector<8x80xf32>
    %21 = vector.extract_strided_slice %4 {offsets = [0, 1], sizes = [8, 1], strides = [1, 1]} : vector<8x128xi32> to vector<8x1xi32>
    %22 = vector.broadcast %21 : vector<8x1xi32> to vector<8x80xi32>
    %23 = arith.cmpi eq, %22, %10 : vector<8x80xi32>
    %24 = vector.extract_strided_slice %6 {offsets = [0, 1], sizes = [8, 1], strides = [1, 1]} : vector<8x128xf32> to vector<8x1xf32>
    %cst_7 = arith.constant 0.000000e+00 : f32
    %25 = vector.shape_cast %24 : vector<8x1xf32> to vector<8x1xf32>
    %26 = vector.broadcast %25 : vector<8x1xf32> to vector<8x80xf32>
    %27 = vector.broadcast %cst_7 : f32 to vector<8x80xf32>
    %28 = arith.select %23, %26, %27 : vector<8x80xi1>, vector<8x80xf32>
    %29 = arith.addf %20, %28 : vector<8x80xf32>
    %30 = vector.extract_strided_slice %4 {offsets = [0, 2], sizes = [8, 1], strides = [1, 1]} : vector<8x128xi32> to vector<8x1xi32>
    %31 = vector.broadcast %30 : vector<8x1xi32> to vector<8x80xi32>
    %32 = arith.cmpi eq, %31, %10 : vector<8x80xi32>
    %33 = vector.extract_strided_slice %6 {offsets = [0, 2], sizes = [8, 1], strides = [1, 1]} : vector<8x128xf32> to vector<8x1xf32>
    %cst_8 = arith.constant 0.000000e+00 : f32
    %34 = vector.shape_cast %33 : vector<8x1xf32> to vector<8x1xf32>
    %35 = vector.broadcast %34 : vector<8x1xf32> to vector<8x80xf32>
    %36 = vector.broadcast %cst_8 : f32 to vector<8x80xf32>
    %37 = arith.select %32, %35, %36 : vector<8x80xi1>, vector<8x80xf32>
    %38 = arith.addf %29, %37 : vector<8x80xf32>
    %39 = vector.extract_strided_slice %4 {offsets = [0, 3], sizes = [8, 1], strides = [1, 1]} : vector<8x128xi32> to vector<8x1xi32>
    %40 = vector.broadcast %39 : vector<8x1xi32> to vector<8x80xi32>
    %41 = arith.cmpi eq, %40, %10 : vector<8x80xi32>
    %42 = vector.extract_strided_slice %6 {offsets = [0, 3], sizes = [8, 1], strides = [1, 1]} : vector<8x128xf32> to vector<8x1xf32>
    %cst_9 = arith.constant 0.000000e+00 : f32
    %43 = vector.shape_cast %42 : vector<8x1xf32> to vector<8x1xf32>
    %44 = vector.broadcast %43 : vector<8x1xf32> to vector<8x80xf32>
    %45 = vector.broadcast %cst_9 : f32 to vector<8x80xf32>
    %46 = arith.select %41, %44, %45 : vector<8x80xi1>, vector<8x80xf32>
    %47 = arith.addf %38, %46 : vector<8x80xf32>
    %48 = vector.extract_strided_slice %4 {offsets = [0, 4], sizes = [8, 1], strides = [1, 1]} : vector<8x128xi32> to vector<8x1xi32>
    %49 = vector.broadcast %48 : vector<8x1xi32> to vector<8x80xi32>
    %50 = arith.cmpi eq, %49, %10 : vector<8x80xi32>
    %51 = vector.extract_strided_slice %6 {offsets = [0, 4], sizes = [8, 1], strides = [1, 1]} : vector<8x128xf32> to vector<8x1xf32>
    %cst_10 = arith.constant 0.000000e+00 : f32
    %52 = vector.shape_cast %51 : vector<8x1xf32> to vector<8x1xf32>
    %53 = vector.broadcast %52 : vector<8x1xf32> to vector<8x80xf32>
    %54 = vector.broadcast %cst_10 : f32 to vector<8x80xf32>
    %55 = arith.select %50, %53, %54 : vector<8x80xi1>, vector<8x80xf32>
    %56 = arith.addf %47, %55 : vector<8x80xf32>
    %57 = vector.extract_strided_slice %4 {offsets = [0, 5], sizes = [8, 1], strides = [1, 1]} : vector<8x128xi32> to vector<8x1xi32>
    %58 = vector.broadcast %57 : vector<8x1xi32> to vector<8x80xi32>
    %59 = arith.cmpi eq, %58, %10 : vector<8x80xi32>
    %60 = vector.extract_strided_slice %6 {offsets = [0, 5], sizes = [8, 1], strides = [1, 1]} : vector<8x128xf32> to vector<8x1xf32>
    %cst_11 = arith.constant 0.000000e+00 : f32
    %61 = vector.shape_cast %60 : vector<8x1xf32> to vector<8x1xf32>
    %62 = vector.broadcast %61 : vector<8x1xf32> to vector<8x80xf32>
    %63 = vector.broadcast %cst_11 : f32 to vector<8x80xf32>
    %64 = arith.select %59, %62, %63 : vector<8x80xi1>, vector<8x80xf32>
    %65 = arith.addf %56, %64 : vector<8x80xf32>
    %66 = vector.extract_strided_slice %4 {offsets = [0, 6], sizes = [8, 1], strides = [1, 1]} : vector<8x128xi32> to vector<8x1xi32>
    %67 = vector.broadcast %66 : vector<8x1xi32> to vector<8x80xi32>
    %68 = arith.cmpi eq, %67, %10 : vector<8x80xi32>
    %69 = vector.extract_strided_slice %6 {offsets = [0, 6], sizes = [8, 1], strides = [1, 1]} : vector<8x128xf32> to vector<8x1xf32>
    %cst_12 = arith.constant 0.000000e+00 : f32
    %70 = vector.shape_cast %69 : vector<8x1xf32> to vector<8x1xf32>
    %71 = vector.broadcast %70 : vector<8x1xf32> to vector<8x80xf32>
    %72 = vector.broadcast %cst_12 : f32 to vector<8x80xf32>
    %73 = arith.select %68, %71, %72 : vector<8x80xi1>, vector<8x80xf32>
    %74 = arith.addf %65, %73 : vector<8x80xf32>
    %75 = vector.extract_strided_slice %4 {offsets = [0, 7], sizes = [8, 1], strides = [1, 1]} : vector<8x128xi32> to vector<8x1xi32>
    %76 = vector.broadcast %75 : vector<8x1xi32> to vector<8x80xi32>
    %77 = arith.cmpi eq, %76, %10 : vector<8x80xi32>
    %78 = vector.extract_strided_slice %6 {offsets = [0, 7], sizes = [8, 1], strides = [1, 1]} : vector<8x128xf32> to vector<8x1xf32>
    %cst_13 = arith.constant 0.000000e+00 : f32
    %79 = vector.shape_cast %78 : vector<8x1xf32> to vector<8x1xf32>
    %80 = vector.broadcast %79 : vector<8x1xf32> to vector<8x80xf32>
    %81 = vector.broadcast %cst_13 : f32 to vector<8x80xf32>
    %82 = arith.select %77, %80, %81 : vector<8x80xi1>, vector<8x80xf32>
    %83 = arith.addf %74, %82 : vector<8x80xf32>
    %84 = vector.extract_strided_slice %4 {offsets = [0, 8], sizes = [8, 1], strides = [1, 1]} : vector<8x128xi32> to vector<8x1xi32>
    %85 = vector.broadcast %84 : vector<8x1xi32> to vector<8x80xi32>
    %86 = arith.cmpi eq, %85, %10 : vector<8x80xi32>
    %87 = vector.extract_strided_slice %6 {offsets = [0, 8], sizes = [8, 1], strides = [1, 1]} : vector<8x128xf32> to vector<8x1xf32>
    %cst_14 = arith.constant 0.000000e+00 : f32
    %88 = vector.shape_cast %87 : vector<8x1xf32> to vector<8x1xf32>
    %89 = vector.broadcast %88 : vector<8x1xf32> to vector<8x80xf32>
    %90 = vector.broadcast %cst_14 : f32 to vector<8x80xf32>
    %91 = arith.select %86, %89, %90 : vector<8x80xi1>, vector<8x80xf32>
    %92 = arith.addf %83, %91 : vector<8x80xf32>
    %93 = vector.extract_strided_slice %4 {offsets = [0, 9], sizes = [8, 1], strides = [1, 1]} : vector<8x128xi32> to vector<8x1xi32>
    %94 = vector.broadcast %93 : vector<8x1xi32> to vector<8x80xi32>
    %95 = arith.cmpi eq, %94, %10 : vector<8x80xi32>
    %96 = vector.extract_strided_slice %6 {offsets = [0, 9], sizes = [8, 1], strides = [1, 1]} : vector<8x128xf32> to vector<8x1xf32>
    %cst_15 = arith.constant 0.000000e+00 : f32
    %97 = vector.shape_cast %96 : vector<8x1xf32> to vector<8x1xf32>
    %98 = vector.broadcast %97 : vector<8x1xf32> to vector<8x80xf32>
    %99 = vector.broadcast %cst_15 : f32 to vector<8x80xf32>
    %100 = arith.select %95, %98, %99 : vector<8x80xi1>, vector<8x80xf32>
    %101 = arith.addf %92, %100 : vector<8x80xf32>
    %102 = vector.extract_strided_slice %4 {offsets = [0, 10], sizes = [8, 1], strides = [1, 1]} : vector<8x128xi32> to vector<8x1xi32>
    %103 = vector.broadcast %102 : vector<8x1xi32> to vector<8x80xi32>
    %104 = arith.cmpi eq, %103, %10 : vector<8x80xi32>
    %105 = vector.extract_strided_slice %6 {offsets = [0, 10], sizes = [8, 1], strides = [1, 1]} : vector<8x128xf32> to vector<8x1xf32>
    %cst_16 = arith.constant 0.000000e+00 : f32
    %106 = vector.shape_cast %105 : vector<8x1xf32> to vector<8x1xf32>
    %107 = vector.broadcast %106 : vector<8x1xf32> to vector<8x80xf32>
    %108 = vector.broadcast %cst_16 : f32 to vector<8x80xf32>
    %109 = arith.select %104, %107, %108 : vector<8x80xi1>, vector<8x80xf32>
    %110 = arith.addf %101, %109 : vector<8x80xf32>
    %111 = vector.extract_strided_slice %4 {offsets = [0, 11], sizes = [8, 1], strides = [1, 1]} : vector<8x128xi32> to vector<8x1xi32>
    %112 = vector.broadcast %111 : vector<8x1xi32> to vector<8x80xi32>
    %113 = arith.cmpi eq, %112, %10 : vector<8x80xi32>
    %114 = vector.extract_strided_slice %6 {offsets = [0, 11], sizes = [8, 1], strides = [1, 1]} : vector<8x128xf32> to vector<8x1xf32>
    %cst_17 = arith.constant 0.000000e+00 : f32
    %115 = vector.shape_cast %114 : vector<8x1xf32> to vector<8x1xf32>
    %116 = vector.broadcast %115 : vector<8x1xf32> to vector<8x80xf32>
    %117 = vector.broadcast %cst_17 : f32 to vector<8x80xf32>
    %118 = arith.select %113, %116, %117 : vector<8x80xi1>, vector<8x80xf32>
    %119 = arith.addf %110, %118 : vector<8x80xf32>
    %120 = vector.extract_strided_slice %4 {offsets = [0, 12], sizes = [8, 1], strides = [1, 1]} : vector<8x128xi32> to vector<8x1xi32>
    %121 = vector.broadcast %120 : vector<8x1xi32> to vector<8x80xi32>
    %122 = arith.cmpi eq, %121, %10 : vector<8x80xi32>
    %123 = vector.extract_strided_slice %6 {offsets = [0, 12], sizes = [8, 1], strides = [1, 1]} : vector<8x128xf32> to vector<8x1xf32>
    %cst_18 = arith.constant 0.000000e+00 : f32
    %124 = vector.shape_cast %123 : vector<8x1xf32> to vector<8x1xf32>
    %125 = vector.broadcast %124 : vector<8x1xf32> to vector<8x80xf32>
    %126 = vector.broadcast %cst_18 : f32 to vector<8x80xf32>
    %127 = arith.select %122, %125, %126 : vector<8x80xi1>, vector<8x80xf32>
    %128 = arith.addf %119, %127 : vector<8x80xf32>
    %129 = vector.extract_strided_slice %4 {offsets = [0, 13], sizes = [8, 1], strides = [1, 1]} : vector<8x128xi32> to vector<8x1xi32>
    %130 = vector.broadcast %129 : vector<8x1xi32> to vector<8x80xi32>
    %131 = arith.cmpi eq, %130, %10 : vector<8x80xi32>
    %132 = vector.extract_strided_slice %6 {offsets = [0, 13], sizes = [8, 1], strides = [1, 1]} : vector<8x128xf32> to vector<8x1xf32>
    %cst_19 = arith.constant 0.000000e+00 : f32
    %133 = vector.shape_cast %132 : vector<8x1xf32> to vector<8x1xf32>
    %134 = vector.broadcast %133 : vector<8x1xf32> to vector<8x80xf32>
    %135 = vector.broadcast %cst_19 : f32 to vector<8x80xf32>
    %136 = arith.select %131, %134, %135 : vector<8x80xi1>, vector<8x80xf32>
    %137 = arith.addf %128, %136 : vector<8x80xf32>
    %138 = vector.extract_strided_slice %4 {offsets = [0, 14], sizes = [8, 1], strides = [1, 1]} : vector<8x128xi32> to vector<8x1xi32>
    %139 = vector.broadcast %138 : vector<8x1xi32> to vector<8x80xi32>
    %140 = arith.cmpi eq, %139, %10 : vector<8x80xi32>
    %141 = vector.extract_strided_slice %6 {offsets = [0, 14], sizes = [8, 1], strides = [1, 1]} : vector<8x128xf32> to vector<8x1xf32>
    %cst_20 = arith.constant 0.000000e+00 : f32
    %142 = vector.shape_cast %141 : vector<8x1xf32> to vector<8x1xf32>
    %143 = vector.broadcast %142 : vector<8x1xf32> to vector<8x80xf32>
    %144 = vector.broadcast %cst_20 : f32 to vector<8x80xf32>
    %145 = arith.select %140, %143, %144 : vector<8x80xi1>, vector<8x80xf32>
    %146 = arith.addf %137, %145 : vector<8x80xf32>
    %147 = vector.extract_strided_slice %4 {offsets = [0, 15], sizes = [8, 1], strides = [1, 1]} : vector<8x128xi32> to vector<8x1xi32>
    %148 = vector.broadcast %147 : vector<8x1xi32> to vector<8x80xi32>
    %149 = arith.cmpi eq, %148, %10 : vector<8x80xi32>
    %150 = vector.extract_strided_slice %6 {offsets = [0, 15], sizes = [8, 1], strides = [1, 1]} : vector<8x128xf32> to vector<8x1xf32>
    %cst_21 = arith.constant 0.000000e+00 : f32
    %151 = vector.shape_cast %150 : vector<8x1xf32> to vector<8x1xf32>
    %152 = vector.broadcast %151 : vector<8x1xf32> to vector<8x80xf32>
    %153 = vector.broadcast %cst_21 : f32 to vector<8x80xf32>
    %154 = arith.select %149, %152, %153 : vector<8x80xi1>, vector<8x80xf32>
    %155 = arith.addf %146, %154 : vector<8x80xf32>
    %156 = vector.extract_strided_slice %4 {offsets = [0, 16], sizes = [8, 1], strides = [1, 1]} : vector<8x128xi32> to vector<8x1xi32>
    %157 = vector.broadcast %156 : vector<8x1xi32> to vector<8x80xi32>
    %158 = arith.cmpi eq, %157, %10 : vector<8x80xi32>
    %159 = vector.extract_strided_slice %6 {offsets = [0, 16], sizes = [8, 1], strides = [1, 1]} : vector<8x128xf32> to vector<8x1xf32>
    %cst_22 = arith.constant 0.000000e+00 : f32
    %160 = vector.shape_cast %159 : vector<8x1xf32> to vector<8x1xf32>
    %161 = vector.broadcast %160 : vector<8x1xf32> to vector<8x80xf32>
    %162 = vector.broadcast %cst_22 : f32 to vector<8x80xf32>
    %163 = arith.select %158, %161, %162 : vector<8x80xi1>, vector<8x80xf32>
    %164 = arith.addf %155, %163 : vector<8x80xf32>
    %165 = vector.extract_strided_slice %4 {offsets = [0, 17], sizes = [8, 1], strides = [1, 1]} : vector<8x128xi32> to vector<8x1xi32>
    %166 = vector.broadcast %165 : vector<8x1xi32> to vector<8x80xi32>
    %167 = arith.cmpi eq, %166, %10 : vector<8x80xi32>
    %168 = vector.extract_strided_slice %6 {offsets = [0, 17], sizes = [8, 1], strides = [1, 1]} : vector<8x128xf32> to vector<8x1xf32>
    %cst_23 = arith.constant 0.000000e+00 : f32
    %169 = vector.shape_cast %168 : vector<8x1xf32> to vector<8x1xf32>
    %170 = vector.broadcast %169 : vector<8x1xf32> to vector<8x80xf32>
    %171 = vector.broadcast %cst_23 : f32 to vector<8x80xf32>
    %172 = arith.select %167, %170, %171 : vector<8x80xi1>, vector<8x80xf32>
    %173 = arith.addf %164, %172 : vector<8x80xf32>
    %174 = vector.extract_strided_slice %4 {offsets = [0, 18], sizes = [8, 1], strides = [1, 1]} : vector<8x128xi32> to vector<8x1xi32>
    %175 = vector.broadcast %174 : vector<8x1xi32> to vector<8x80xi32>
    %176 = arith.cmpi eq, %175, %10 : vector<8x80xi32>
    %177 = vector.extract_strided_slice %6 {offsets = [0, 18], sizes = [8, 1], strides = [1, 1]} : vector<8x128xf32> to vector<8x1xf32>
    %cst_24 = arith.constant 0.000000e+00 : f32
    %178 = vector.shape_cast %177 : vector<8x1xf32> to vector<8x1xf32>
    %179 = vector.broadcast %178 : vector<8x1xf32> to vector<8x80xf32>
    %180 = vector.broadcast %cst_24 : f32 to vector<8x80xf32>
    %181 = arith.select %176, %179, %180 : vector<8x80xi1>, vector<8x80xf32>
    %182 = arith.addf %173, %181 : vector<8x80xf32>
    %183 = vector.extract_strided_slice %4 {offsets = [0, 19], sizes = [8, 1], strides = [1, 1]} : vector<8x128xi32> to vector<8x1xi32>
    %184 = vector.broadcast %183 : vector<8x1xi32> to vector<8x80xi32>
    %185 = arith.cmpi eq, %184, %10 : vector<8x80xi32>
    %186 = vector.extract_strided_slice %6 {offsets = [0, 19], sizes = [8, 1], strides = [1, 1]} : vector<8x128xf32> to vector<8x1xf32>
    %cst_25 = arith.constant 0.000000e+00 : f32
    %187 = vector.shape_cast %186 : vector<8x1xf32> to vector<8x1xf32>
    %188 = vector.broadcast %187 : vector<8x1xf32> to vector<8x80xf32>
    %189 = vector.broadcast %cst_25 : f32 to vector<8x80xf32>
    %190 = arith.select %185, %188, %189 : vector<8x80xi1>, vector<8x80xf32>
    %191 = arith.addf %182, %190 : vector<8x80xf32>
    %192 = vector.extract_strided_slice %4 {offsets = [0, 20], sizes = [8, 1], strides = [1, 1]} : vector<8x128xi32> to vector<8x1xi32>
    %193 = vector.broadcast %192 : vector<8x1xi32> to vector<8x80xi32>
    %194 = arith.cmpi eq, %193, %10 : vector<8x80xi32>
    %195 = vector.extract_strided_slice %6 {offsets = [0, 20], sizes = [8, 1], strides = [1, 1]} : vector<8x128xf32> to vector<8x1xf32>
    %cst_26 = arith.constant 0.000000e+00 : f32
    %196 = vector.shape_cast %195 : vector<8x1xf32> to vector<8x1xf32>
    %197 = vector.broadcast %196 : vector<8x1xf32> to vector<8x80xf32>
    %198 = vector.broadcast %cst_26 : f32 to vector<8x80xf32>
    %199 = arith.select %194, %197, %198 : vector<8x80xi1>, vector<8x80xf32>
    %200 = arith.addf %191, %199 : vector<8x80xf32>
    %201 = vector.extract_strided_slice %4 {offsets = [0, 21], sizes = [8, 1], strides = [1, 1]} : vector<8x128xi32> to vector<8x1xi32>
    %202 = vector.broadcast %201 : vector<8x1xi32> to vector<8x80xi32>
    %203 = arith.cmpi eq, %202, %10 : vector<8x80xi32>
    %204 = vector.extract_strided_slice %6 {offsets = [0, 21], sizes = [8, 1], strides = [1, 1]} : vector<8x128xf32> to vector<8x1xf32>
    %cst_27 = arith.constant 0.000000e+00 : f32
    %205 = vector.shape_cast %204 : vector<8x1xf32> to vector<8x1xf32>
    %206 = vector.broadcast %205 : vector<8x1xf32> to vector<8x80xf32>
    %207 = vector.broadcast %cst_27 : f32 to vector<8x80xf32>
    %208 = arith.select %203, %206, %207 : vector<8x80xi1>, vector<8x80xf32>
    %209 = arith.addf %200, %208 : vector<8x80xf32>
    %210 = vector.extract_strided_slice %4 {offsets = [0, 22], sizes = [8, 1], strides = [1, 1]} : vector<8x128xi32> to vector<8x1xi32>
    %211 = vector.broadcast %210 : vector<8x1xi32> to vector<8x80xi32>
    %212 = arith.cmpi eq, %211, %10 : vector<8x80xi32>
    %213 = vector.extract_strided_slice %6 {offsets = [0, 22], sizes = [8, 1], strides = [1, 1]} : vector<8x128xf32> to vector<8x1xf32>
    %cst_28 = arith.constant 0.000000e+00 : f32
    %214 = vector.shape_cast %213 : vector<8x1xf32> to vector<8x1xf32>
    %215 = vector.broadcast %214 : vector<8x1xf32> to vector<8x80xf32>
    %216 = vector.broadcast %cst_28 : f32 to vector<8x80xf32>
    %217 = arith.select %212, %215, %216 : vector<8x80xi1>, vector<8x80xf32>
    %218 = arith.addf %209, %217 : vector<8x80xf32>
    %219 = vector.extract_strided_slice %4 {offsets = [0, 23], sizes = [8, 1], strides = [1, 1]} : vector<8x128xi32> to vector<8x1xi32>
    %220 = vector.broadcast %219 : vector<8x1xi32> to vector<8x80xi32>
    %221 = arith.cmpi eq, %220, %10 : vector<8x80xi32>
    %222 = vector.extract_strided_slice %6 {offsets = [0, 23], sizes = [8, 1], strides = [1, 1]} : vector<8x128xf32> to vector<8x1xf32>
    %cst_29 = arith.constant 0.000000e+00 : f32
    %223 = vector.shape_cast %222 : vector<8x1xf32> to vector<8x1xf32>
    %224 = vector.broadcast %223 : vector<8x1xf32> to vector<8x80xf32>
    %225 = vector.broadcast %cst_29 : f32 to vector<8x80xf32>
    %226 = arith.select %221, %224, %225 : vector<8x80xi1>, vector<8x80xf32>
    %227 = arith.addf %218, %226 : vector<8x80xf32>
    %228 = vector.extract_strided_slice %4 {offsets = [0, 24], sizes = [8, 1], strides = [1, 1]} : vector<8x128xi32> to vector<8x1xi32>
    %229 = vector.broadcast %228 : vector<8x1xi32> to vector<8x80xi32>
    %230 = arith.cmpi eq, %229, %10 : vector<8x80xi32>
    %231 = vector.extract_strided_slice %6 {offsets = [0, 24], sizes = [8, 1], strides = [1, 1]} : vector<8x128xf32> to vector<8x1xf32>
    %cst_30 = arith.constant 0.000000e+00 : f32
    %232 = vector.shape_cast %231 : vector<8x1xf32> to vector<8x1xf32>
    %233 = vector.broadcast %232 : vector<8x1xf32> to vector<8x80xf32>
    %234 = vector.broadcast %cst_30 : f32 to vector<8x80xf32>
    %235 = arith.select %230, %233, %234 : vector<8x80xi1>, vector<8x80xf32>
    %236 = arith.addf %227, %235 : vector<8x80xf32>
    %237 = vector.extract_strided_slice %4 {offsets = [0, 25], sizes = [8, 1], strides = [1, 1]} : vector<8x128xi32> to vector<8x1xi32>
    %238 = vector.broadcast %237 : vector<8x1xi32> to vector<8x80xi32>
    %239 = arith.cmpi eq, %238, %10 : vector<8x80xi32>
    %240 = vector.extract_strided_slice %6 {offsets = [0, 25], sizes = [8, 1], strides = [1, 1]} : vector<8x128xf32> to vector<8x1xf32>
    %cst_31 = arith.constant 0.000000e+00 : f32
    %241 = vector.shape_cast %240 : vector<8x1xf32> to vector<8x1xf32>
    %242 = vector.broadcast %241 : vector<8x1xf32> to vector<8x80xf32>
    %243 = vector.broadcast %cst_31 : f32 to vector<8x80xf32>
    %244 = arith.select %239, %242, %243 : vector<8x80xi1>, vector<8x80xf32>
    %245 = arith.addf %236, %244 : vector<8x80xf32>
    %246 = vector.extract_strided_slice %4 {offsets = [0, 26], sizes = [8, 1], strides = [1, 1]} : vector<8x128xi32> to vector<8x1xi32>
    %247 = vector.broadcast %246 : vector<8x1xi32> to vector<8x80xi32>
    %248 = arith.cmpi eq, %247, %10 : vector<8x80xi32>
    %249 = vector.extract_strided_slice %6 {offsets = [0, 26], sizes = [8, 1], strides = [1, 1]} : vector<8x128xf32> to vector<8x1xf32>
    %cst_32 = arith.constant 0.000000e+00 : f32
    %250 = vector.shape_cast %249 : vector<8x1xf32> to vector<8x1xf32>
    %251 = vector.broadcast %250 : vector<8x1xf32> to vector<8x80xf32>
    %252 = vector.broadcast %cst_32 : f32 to vector<8x80xf32>
    %253 = arith.select %248, %251, %252 : vector<8x80xi1>, vector<8x80xf32>
    %254 = arith.addf %245, %253 : vector<8x80xf32>
    %255 = vector.extract_strided_slice %4 {offsets = [0, 27], sizes = [8, 1], strides = [1, 1]} : vector<8x128xi32> to vector<8x1xi32>
    %256 = vector.broadcast %255 : vector<8x1xi32> to vector<8x80xi32>
    %257 = arith.cmpi eq, %256, %10 : vector<8x80xi32>
    %258 = vector.extract_strided_slice %6 {offsets = [0, 27], sizes = [8, 1], strides = [1, 1]} : vector<8x128xf32> to vector<8x1xf32>
    %cst_33 = arith.constant 0.000000e+00 : f32
    %259 = vector.shape_cast %258 : vector<8x1xf32> to vector<8x1xf32>
    %260 = vector.broadcast %259 : vector<8x1xf32> to vector<8x80xf32>
    %261 = vector.broadcast %cst_33 : f32 to vector<8x80xf32>
    %262 = arith.select %257, %260, %261 : vector<8x80xi1>, vector<8x80xf32>
    %263 = arith.addf %254, %262 : vector<8x80xf32>
    %264 = vector.extract_strided_slice %4 {offsets = [0, 28], sizes = [8, 1], strides = [1, 1]} : vector<8x128xi32> to vector<8x1xi32>
    %265 = vector.broadcast %264 : vector<8x1xi32> to vector<8x80xi32>
    %266 = arith.cmpi eq, %265, %10 : vector<8x80xi32>
    %267 = vector.extract_strided_slice %6 {offsets = [0, 28], sizes = [8, 1], strides = [1, 1]} : vector<8x128xf32> to vector<8x1xf32>
    %cst_34 = arith.constant 0.000000e+00 : f32
    %268 = vector.shape_cast %267 : vector<8x1xf32> to vector<8x1xf32>
    %269 = vector.broadcast %268 : vector<8x1xf32> to vector<8x80xf32>
    %270 = vector.broadcast %cst_34 : f32 to vector<8x80xf32>
    %271 = arith.select %266, %269, %270 : vector<8x80xi1>, vector<8x80xf32>
    %272 = arith.addf %263, %271 : vector<8x80xf32>
    %273 = vector.extract_strided_slice %4 {offsets = [0, 29], sizes = [8, 1], strides = [1, 1]} : vector<8x128xi32> to vector<8x1xi32>
    %274 = vector.broadcast %273 : vector<8x1xi32> to vector<8x80xi32>
    %275 = arith.cmpi eq, %274, %10 : vector<8x80xi32>
    %276 = vector.extract_strided_slice %6 {offsets = [0, 29], sizes = [8, 1], strides = [1, 1]} : vector<8x128xf32> to vector<8x1xf32>
    %cst_35 = arith.constant 0.000000e+00 : f32
    %277 = vector.shape_cast %276 : vector<8x1xf32> to vector<8x1xf32>
    %278 = vector.broadcast %277 : vector<8x1xf32> to vector<8x80xf32>
    %279 = vector.broadcast %cst_35 : f32 to vector<8x80xf32>
    %280 = arith.select %275, %278, %279 : vector<8x80xi1>, vector<8x80xf32>
    %281 = arith.addf %272, %280 : vector<8x80xf32>
    %282 = vector.extract_strided_slice %4 {offsets = [0, 30], sizes = [8, 1], strides = [1, 1]} : vector<8x128xi32> to vector<8x1xi32>
    %283 = vector.broadcast %282 : vector<8x1xi32> to vector<8x80xi32>
    %284 = arith.cmpi eq, %283, %10 : vector<8x80xi32>
    %285 = vector.extract_strided_slice %6 {offsets = [0, 30], sizes = [8, 1], strides = [1, 1]} : vector<8x128xf32> to vector<8x1xf32>
    %cst_36 = arith.constant 0.000000e+00 : f32
    %286 = vector.shape_cast %285 : vector<8x1xf32> to vector<8x1xf32>
    %287 = vector.broadcast %286 : vector<8x1xf32> to vector<8x80xf32>
    %288 = vector.broadcast %cst_36 : f32 to vector<8x80xf32>
    %289 = arith.select %284, %287, %288 : vector<8x80xi1>, vector<8x80xf32>
    %290 = arith.addf %281, %289 : vector<8x80xf32>
    %291 = vector.extract_strided_slice %4 {offsets = [0, 31], sizes = [8, 1], strides = [1, 1]} : vector<8x128xi32> to vector<8x1xi32>
    %292 = vector.broadcast %291 : vector<8x1xi32> to vector<8x80xi32>
    %293 = arith.cmpi eq, %292, %10 : vector<8x80xi32>
    %294 = vector.extract_strided_slice %6 {offsets = [0, 31], sizes = [8, 1], strides = [1, 1]} : vector<8x128xf32> to vector<8x1xf32>
    %cst_37 = arith.constant 0.000000e+00 : f32
    %295 = vector.shape_cast %294 : vector<8x1xf32> to vector<8x1xf32>
    %296 = vector.broadcast %295 : vector<8x1xf32> to vector<8x80xf32>
    %297 = vector.broadcast %cst_37 : f32 to vector<8x80xf32>
    %298 = arith.select %293, %296, %297 : vector<8x80xi1>, vector<8x80xf32>
    %299 = arith.addf %290, %298 : vector<8x80xf32>
    %c0_38 = arith.constant 0 : index
    %c0_39 = arith.constant 0 : index
    %c0_40 = arith.constant 0 : index
    %c0_41 = arith.constant 0 : index
    %300 = vector.load %arg5[%c0_38, %c0_39, %c0_40, %c0_41] : memref<1x4x80x8xbf16, #tpu.memory_space<vmem>>, vector<1x1x80x8xbf16>
    %301 = vector.shape_cast %300 : vector<1x1x80x8xbf16> to vector<80x8xbf16>
    %302 = arith.truncf %299 : vector<8x80xf32> to vector<8x80xbf16>
    %cst_42 = arith.constant dense<0.000000e+00> : vector<8x8xf32>
    %303 = tpu.matmul %302, %301, %cst_42 {dimension_numbers = #tpu.dot_dimension_numbers<[1], [0], [0], [1], [0, 0, 1, 1], [], []>} : vector<8x80xbf16>, vector<80x8xbf16>, vector<8x8xf32> -> vector<8x8xf32>
    %cst_43 = arith.constant 0.000000e+00 : f32
    %304 = vector.broadcast %cst_43 : f32 to vector<8x80xf32>
    %305 = vector.extract_strided_slice %4 {offsets = [0, 32], sizes = [8, 1], strides = [1, 1]} : vector<8x128xi32> to vector<8x1xi32>
    %306 = vector.broadcast %305 : vector<8x1xi32> to vector<8x80xi32>
    %307 = arith.cmpi eq, %306, %10 : vector<8x80xi32>
    %308 = vector.extract_strided_slice %6 {offsets = [0, 32], sizes = [8, 1], strides = [1, 1]} : vector<8x128xf32> to vector<8x1xf32>
    %cst_44 = arith.constant 0.000000e+00 : f32
    %309 = vector.shape_cast %308 : vector<8x1xf32> to vector<8x1xf32>
    %310 = vector.broadcast %309 : vector<8x1xf32> to vector<8x80xf32>
    %311 = vector.broadcast %cst_44 : f32 to vector<8x80xf32>
    %312 = arith.select %307, %310, %311 : vector<8x80xi1>, vector<8x80xf32>
    %313 = arith.addf %304, %312 : vector<8x80xf32>
    %314 = vector.extract_strided_slice %4 {offsets = [0, 33], sizes = [8, 1], strides = [1, 1]} : vector<8x128xi32> to vector<8x1xi32>
    %315 = vector.broadcast %314 : vector<8x1xi32> to vector<8x80xi32>
    %316 = arith.cmpi eq, %315, %10 : vector<8x80xi32>
    %317 = vector.extract_strided_slice %6 {offsets = [0, 33], sizes = [8, 1], strides = [1, 1]} : vector<8x128xf32> to vector<8x1xf32>
    %cst_45 = arith.constant 0.000000e+00 : f32
    %318 = vector.shape_cast %317 : vector<8x1xf32> to vector<8x1xf32>
    %319 = vector.broadcast %318 : vector<8x1xf32> to vector<8x80xf32>
    %320 = vector.broadcast %cst_45 : f32 to vector<8x80xf32>
    %321 = arith.select %316, %319, %320 : vector<8x80xi1>, vector<8x80xf32>
    %322 = arith.addf %313, %321 : vector<8x80xf32>
    %323 = vector.extract_strided_slice %4 {offsets = [0, 34], sizes = [8, 1], strides = [1, 1]} : vector<8x128xi32> to vector<8x1xi32>
    %324 = vector.broadcast %323 : vector<8x1xi32> to vector<8x80xi32>
    %325 = arith.cmpi eq, %324, %10 : vector<8x80xi32>
    %326 = vector.extract_strided_slice %6 {offsets = [0, 34], sizes = [8, 1], strides = [1, 1]} : vector<8x128xf32> to vector<8x1xf32>
    %cst_46 = arith.constant 0.000000e+00 : f32
    %327 = vector.shape_cast %326 : vector<8x1xf32> to vector<8x1xf32>
    %328 = vector.broadcast %327 : vector<8x1xf32> to vector<8x80xf32>
    %329 = vector.broadcast %cst_46 : f32 to vector<8x80xf32>
    %330 = arith.select %325, %328, %329 : vector<8x80xi1>, vector<8x80xf32>
    %331 = arith.addf %322, %330 : vector<8x80xf32>
    %332 = vector.extract_strided_slice %4 {offsets = [0, 35], sizes = [8, 1], strides = [1, 1]} : vector<8x128xi32> to vector<8x1xi32>
    %333 = vector.broadcast %332 : vector<8x1xi32> to vector<8x80xi32>
    %334 = arith.cmpi eq, %333, %10 : vector<8x80xi32>
    %335 = vector.extract_strided_slice %6 {offsets = [0, 35], sizes = [8, 1], strides = [1, 1]} : vector<8x128xf32> to vector<8x1xf32>
    %cst_47 = arith.constant 0.000000e+00 : f32
    %336 = vector.shape_cast %335 : vector<8x1xf32> to vector<8x1xf32>
    %337 = vector.broadcast %336 : vector<8x1xf32> to vector<8x80xf32>
    %338 = vector.broadcast %cst_47 : f32 to vector<8x80xf32>
    %339 = arith.select %334, %337, %338 : vector<8x80xi1>, vector<8x80xf32>
    %340 = arith.addf %331, %339 : vector<8x80xf32>
    %341 = vector.extract_strided_slice %4 {offsets = [0, 36], sizes = [8, 1], strides = [1, 1]} : vector<8x128xi32> to vector<8x1xi32>
    %342 = vector.broadcast %341 : vector<8x1xi32> to vector<8x80xi32>
    %343 = arith.cmpi eq, %342, %10 : vector<8x80xi32>
    %344 = vector.extract_strided_slice %6 {offsets = [0, 36], sizes = [8, 1], strides = [1, 1]} : vector<8x128xf32> to vector<8x1xf32>
    %cst_48 = arith.constant 0.000000e+00 : f32
    %345 = vector.shape_cast %344 : vector<8x1xf32> to vector<8x1xf32>
    %346 = vector.broadcast %345 : vector<8x1xf32> to vector<8x80xf32>
    %347 = vector.broadcast %cst_48 : f32 to vector<8x80xf32>
    %348 = arith.select %343, %346, %347 : vector<8x80xi1>, vector<8x80xf32>
    %349 = arith.addf %340, %348 : vector<8x80xf32>
    %350 = vector.extract_strided_slice %4 {offsets = [0, 37], sizes = [8, 1], strides = [1, 1]} : vector<8x128xi32> to vector<8x1xi32>
    %351 = vector.broadcast %350 : vector<8x1xi32> to vector<8x80xi32>
    %352 = arith.cmpi eq, %351, %10 : vector<8x80xi32>
    %353 = vector.extract_strided_slice %6 {offsets = [0, 37], sizes = [8, 1], strides = [1, 1]} : vector<8x128xf32> to vector<8x1xf32>
    %cst_49 = arith.constant 0.000000e+00 : f32
    %354 = vector.shape_cast %353 : vector<8x1xf32> to vector<8x1xf32>
    %355 = vector.broadcast %354 : vector<8x1xf32> to vector<8x80xf32>
    %356 = vector.broadcast %cst_49 : f32 to vector<8x80xf32>
    %357 = arith.select %352, %355, %356 : vector<8x80xi1>, vector<8x80xf32>
    %358 = arith.addf %349, %357 : vector<8x80xf32>
    %359 = vector.extract_strided_slice %4 {offsets = [0, 38], sizes = [8, 1], strides = [1, 1]} : vector<8x128xi32> to vector<8x1xi32>
    %360 = vector.broadcast %359 : vector<8x1xi32> to vector<8x80xi32>
    %361 = arith.cmpi eq, %360, %10 : vector<8x80xi32>
    %362 = vector.extract_strided_slice %6 {offsets = [0, 38], sizes = [8, 1], strides = [1, 1]} : vector<8x128xf32> to vector<8x1xf32>
    %cst_50 = arith.constant 0.000000e+00 : f32
    %363 = vector.shape_cast %362 : vector<8x1xf32> to vector<8x1xf32>
    %364 = vector.broadcast %363 : vector<8x1xf32> to vector<8x80xf32>
    %365 = vector.broadcast %cst_50 : f32 to vector<8x80xf32>
    %366 = arith.select %361, %364, %365 : vector<8x80xi1>, vector<8x80xf32>
    %367 = arith.addf %358, %366 : vector<8x80xf32>
    %368 = vector.extract_strided_slice %4 {offsets = [0, 39], sizes = [8, 1], strides = [1, 1]} : vector<8x128xi32> to vector<8x1xi32>
    %369 = vector.broadcast %368 : vector<8x1xi32> to vector<8x80xi32>
    %370 = arith.cmpi eq, %369, %10 : vector<8x80xi32>
    %371 = vector.extract_strided_slice %6 {offsets = [0, 39], sizes = [8, 1], strides = [1, 1]} : vector<8x128xf32> to vector<8x1xf32>
    %cst_51 = arith.constant 0.000000e+00 : f32
    %372 = vector.shape_cast %371 : vector<8x1xf32> to vector<8x1xf32>
    %373 = vector.broadcast %372 : vector<8x1xf32> to vector<8x80xf32>
    %374 = vector.broadcast %cst_51 : f32 to vector<8x80xf32>
    %375 = arith.select %370, %373, %374 : vector<8x80xi1>, vector<8x80xf32>
    %376 = arith.addf %367, %375 : vector<8x80xf32>
    %377 = vector.extract_strided_slice %4 {offsets = [0, 40], sizes = [8, 1], strides = [1, 1]} : vector<8x128xi32> to vector<8x1xi32>
    %378 = vector.broadcast %377 : vector<8x1xi32> to vector<8x80xi32>
    %379 = arith.cmpi eq, %378, %10 : vector<8x80xi32>
    %380 = vector.extract_strided_slice %6 {offsets = [0, 40], sizes = [8, 1], strides = [1, 1]} : vector<8x128xf32> to vector<8x1xf32>
    %cst_52 = arith.constant 0.000000e+00 : f32
    %381 = vector.shape_cast %380 : vector<8x1xf32> to vector<8x1xf32>
    %382 = vector.broadcast %381 : vector<8x1xf32> to vector<8x80xf32>
    %383 = vector.broadcast %cst_52 : f32 to vector<8x80xf32>
    %384 = arith.select %379, %382, %383 : vector<8x80xi1>, vector<8x80xf32>
    %385 = arith.addf %376, %384 : vector<8x80xf32>
    %386 = vector.extract_strided_slice %4 {offsets = [0, 41], sizes = [8, 1], strides = [1, 1]} : vector<8x128xi32> to vector<8x1xi32>
    %387 = vector.broadcast %386 : vector<8x1xi32> to vector<8x80xi32>
    %388 = arith.cmpi eq, %387, %10 : vector<8x80xi32>
    %389 = vector.extract_strided_slice %6 {offsets = [0, 41], sizes = [8, 1], strides = [1, 1]} : vector<8x128xf32> to vector<8x1xf32>
    %cst_53 = arith.constant 0.000000e+00 : f32
    %390 = vector.shape_cast %389 : vector<8x1xf32> to vector<8x1xf32>
    %391 = vector.broadcast %390 : vector<8x1xf32> to vector<8x80xf32>
    %392 = vector.broadcast %cst_53 : f32 to vector<8x80xf32>
    %393 = arith.select %388, %391, %392 : vector<8x80xi1>, vector<8x80xf32>
    %394 = arith.addf %385, %393 : vector<8x80xf32>
    %395 = vector.extract_strided_slice %4 {offsets = [0, 42], sizes = [8, 1], strides = [1, 1]} : vector<8x128xi32> to vector<8x1xi32>
    %396 = vector.broadcast %395 : vector<8x1xi32> to vector<8x80xi32>
    %397 = arith.cmpi eq, %396, %10 : vector<8x80xi32>
    %398 = vector.extract_strided_slice %6 {offsets = [0, 42], sizes = [8, 1], strides = [1, 1]} : vector<8x128xf32> to vector<8x1xf32>
    %cst_54 = arith.constant 0.000000e+00 : f32
    %399 = vector.shape_cast %398 : vector<8x1xf32> to vector<8x1xf32>
    %400 = vector.broadcast %399 : vector<8x1xf32> to vector<8x80xf32>
    %401 = vector.broadcast %cst_54 : f32 to vector<8x80xf32>
    %402 = arith.select %397, %400, %401 : vector<8x80xi1>, vector<8x80xf32>
    %403 = arith.addf %394, %402 : vector<8x80xf32>
    %404 = vector.extract_strided_slice %4 {offsets = [0, 43], sizes = [8, 1], strides = [1, 1]} : vector<8x128xi32> to vector<8x1xi32>
    %405 = vector.broadcast %404 : vector<8x1xi32> to vector<8x80xi32>
    %406 = arith.cmpi eq, %405, %10 : vector<8x80xi32>
    %407 = vector.extract_strided_slice %6 {offsets = [0, 43], sizes = [8, 1], strides = [1, 1]} : vector<8x128xf32> to vector<8x1xf32>
    %cst_55 = arith.constant 0.000000e+00 : f32
    %408 = vector.shape_cast %407 : vector<8x1xf32> to vector<8x1xf32>
    %409 = vector.broadcast %408 : vector<8x1xf32> to vector<8x80xf32>
    %410 = vector.broadcast %cst_55 : f32 to vector<8x80xf32>
    %411 = arith.select %406, %409, %410 : vector<8x80xi1>, vector<8x80xf32>
    %412 = arith.addf %403, %411 : vector<8x80xf32>
    %413 = vector.extract_strided_slice %4 {offsets = [0, 44], sizes = [8, 1], strides = [1, 1]} : vector<8x128xi32> to vector<8x1xi32>
    %414 = vector.broadcast %413 : vector<8x1xi32> to vector<8x80xi32>
    %415 = arith.cmpi eq, %414, %10 : vector<8x80xi32>
    %416 = vector.extract_strided_slice %6 {offsets = [0, 44], sizes = [8, 1], strides = [1, 1]} : vector<8x128xf32> to vector<8x1xf32>
    %cst_56 = arith.constant 0.000000e+00 : f32
    %417 = vector.shape_cast %416 : vector<8x1xf32> to vector<8x1xf32>
    %418 = vector.broadcast %417 : vector<8x1xf32> to vector<8x80xf32>
    %419 = vector.broadcast %cst_56 : f32 to vector<8x80xf32>
    %420 = arith.select %415, %418, %419 : vector<8x80xi1>, vector<8x80xf32>
    %421 = arith.addf %412, %420 : vector<8x80xf32>
    %422 = vector.extract_strided_slice %4 {offsets = [0, 45], sizes = [8, 1], strides = [1, 1]} : vector<8x128xi32> to vector<8x1xi32>
    %423 = vector.broadcast %422 : vector<8x1xi32> to vector<8x80xi32>
    %424 = arith.cmpi eq, %423, %10 : vector<8x80xi32>
    %425 = vector.extract_strided_slice %6 {offsets = [0, 45], sizes = [8, 1], strides = [1, 1]} : vector<8x128xf32> to vector<8x1xf32>
    %cst_57 = arith.constant 0.000000e+00 : f32
    %426 = vector.shape_cast %425 : vector<8x1xf32> to vector<8x1xf32>
    %427 = vector.broadcast %426 : vector<8x1xf32> to vector<8x80xf32>
    %428 = vector.broadcast %cst_57 : f32 to vector<8x80xf32>
    %429 = arith.select %424, %427, %428 : vector<8x80xi1>, vector<8x80xf32>
    %430 = arith.addf %421, %429 : vector<8x80xf32>
    %431 = vector.extract_strided_slice %4 {offsets = [0, 46], sizes = [8, 1], strides = [1, 1]} : vector<8x128xi32> to vector<8x1xi32>
    %432 = vector.broadcast %431 : vector<8x1xi32> to vector<8x80xi32>
    %433 = arith.cmpi eq, %432, %10 : vector<8x80xi32>
    %434 = vector.extract_strided_slice %6 {offsets = [0, 46], sizes = [8, 1], strides = [1, 1]} : vector<8x128xf32> to vector<8x1xf32>
    %cst_58 = arith.constant 0.000000e+00 : f32
    %435 = vector.shape_cast %434 : vector<8x1xf32> to vector<8x1xf32>
    %436 = vector.broadcast %435 : vector<8x1xf32> to vector<8x80xf32>
    %437 = vector.broadcast %cst_58 : f32 to vector<8x80xf32>
    %438 = arith.select %433, %436, %437 : vector<8x80xi1>, vector<8x80xf32>
    %439 = arith.addf %430, %438 : vector<8x80xf32>
    %440 = vector.extract_strided_slice %4 {offsets = [0, 47], sizes = [8, 1], strides = [1, 1]} : vector<8x128xi32> to vector<8x1xi32>
    %441 = vector.broadcast %440 : vector<8x1xi32> to vector<8x80xi32>
    %442 = arith.cmpi eq, %441, %10 : vector<8x80xi32>
    %443 = vector.extract_strided_slice %6 {offsets = [0, 47], sizes = [8, 1], strides = [1, 1]} : vector<8x128xf32> to vector<8x1xf32>
    %cst_59 = arith.constant 0.000000e+00 : f32
    %444 = vector.shape_cast %443 : vector<8x1xf32> to vector<8x1xf32>
    %445 = vector.broadcast %444 : vector<8x1xf32> to vector<8x80xf32>
    %446 = vector.broadcast %cst_59 : f32 to vector<8x80xf32>
    %447 = arith.select %442, %445, %446 : vector<8x80xi1>, vector<8x80xf32>
    %448 = arith.addf %439, %447 : vector<8x80xf32>
    %449 = vector.extract_strided_slice %4 {offsets = [0, 48], sizes = [8, 1], strides = [1, 1]} : vector<8x128xi32> to vector<8x1xi32>
    %450 = vector.broadcast %449 : vector<8x1xi32> to vector<8x80xi32>
    %451 = arith.cmpi eq, %450, %10 : vector<8x80xi32>
    %452 = vector.extract_strided_slice %6 {offsets = [0, 48], sizes = [8, 1], strides = [1, 1]} : vector<8x128xf32> to vector<8x1xf32>
    %cst_60 = arith.constant 0.000000e+00 : f32
    %453 = vector.shape_cast %452 : vector<8x1xf32> to vector<8x1xf32>
    %454 = vector.broadcast %453 : vector<8x1xf32> to vector<8x80xf32>
    %455 = vector.broadcast %cst_60 : f32 to vector<8x80xf32>
    %456 = arith.select %451, %454, %455 : vector<8x80xi1>, vector<8x80xf32>
    %457 = arith.addf %448, %456 : vector<8x80xf32>
    %458 = vector.extract_strided_slice %4 {offsets = [0, 49], sizes = [8, 1], strides = [1, 1]} : vector<8x128xi32> to vector<8x1xi32>
    %459 = vector.broadcast %458 : vector<8x1xi32> to vector<8x80xi32>
    %460 = arith.cmpi eq, %459, %10 : vector<8x80xi32>
    %461 = vector.extract_strided_slice %6 {offsets = [0, 49], sizes = [8, 1], strides = [1, 1]} : vector<8x128xf32> to vector<8x1xf32>
    %cst_61 = arith.constant 0.000000e+00 : f32
    %462 = vector.shape_cast %461 : vector<8x1xf32> to vector<8x1xf32>
    %463 = vector.broadcast %462 : vector<8x1xf32> to vector<8x80xf32>
    %464 = vector.broadcast %cst_61 : f32 to vector<8x80xf32>
    %465 = arith.select %460, %463, %464 : vector<8x80xi1>, vector<8x80xf32>
    %466 = arith.addf %457, %465 : vector<8x80xf32>
    %467 = vector.extract_strided_slice %4 {offsets = [0, 50], sizes = [8, 1], strides = [1, 1]} : vector<8x128xi32> to vector<8x1xi32>
    %468 = vector.broadcast %467 : vector<8x1xi32> to vector<8x80xi32>
    %469 = arith.cmpi eq, %468, %10 : vector<8x80xi32>
    %470 = vector.extract_strided_slice %6 {offsets = [0, 50], sizes = [8, 1], strides = [1, 1]} : vector<8x128xf32> to vector<8x1xf32>
    %cst_62 = arith.constant 0.000000e+00 : f32
    %471 = vector.shape_cast %470 : vector<8x1xf32> to vector<8x1xf32>
    %472 = vector.broadcast %471 : vector<8x1xf32> to vector<8x80xf32>
    %473 = vector.broadcast %cst_62 : f32 to vector<8x80xf32>
    %474 = arith.select %469, %472, %473 : vector<8x80xi1>, vector<8x80xf32>
    %475 = arith.addf %466, %474 : vector<8x80xf32>
    %476 = vector.extract_strided_slice %4 {offsets = [0, 51], sizes = [8, 1], strides = [1, 1]} : vector<8x128xi32> to vector<8x1xi32>
    %477 = vector.broadcast %476 : vector<8x1xi32> to vector<8x80xi32>
    %478 = arith.cmpi eq, %477, %10 : vector<8x80xi32>
    %479 = vector.extract_strided_slice %6 {offsets = [0, 51], sizes = [8, 1], strides = [1, 1]} : vector<8x128xf32> to vector<8x1xf32>
    %cst_63 = arith.constant 0.000000e+00 : f32
    %480 = vector.shape_cast %479 : vector<8x1xf32> to vector<8x1xf32>
    %481 = vector.broadcast %480 : vector<8x1xf32> to vector<8x80xf32>
    %482 = vector.broadcast %cst_63 : f32 to vector<8x80xf32>
    %483 = arith.select %478, %481, %482 : vector<8x80xi1>, vector<8x80xf32>
    %484 = arith.addf %475, %483 : vector<8x80xf32>
    %485 = vector.extract_strided_slice %4 {offsets = [0, 52], sizes = [8, 1], strides = [1, 1]} : vector<8x128xi32> to vector<8x1xi32>
    %486 = vector.broadcast %485 : vector<8x1xi32> to vector<8x80xi32>
    %487 = arith.cmpi eq, %486, %10 : vector<8x80xi32>
    %488 = vector.extract_strided_slice %6 {offsets = [0, 52], sizes = [8, 1], strides = [1, 1]} : vector<8x128xf32> to vector<8x1xf32>
    %cst_64 = arith.constant 0.000000e+00 : f32
    %489 = vector.shape_cast %488 : vector<8x1xf32> to vector<8x1xf32>
    %490 = vector.broadcast %489 : vector<8x1xf32> to vector<8x80xf32>
    %491 = vector.broadcast %cst_64 : f32 to vector<8x80xf32>
    %492 = arith.select %487, %490, %491 : vector<8x80xi1>, vector<8x80xf32>
    %493 = arith.addf %484, %492 : vector<8x80xf32>
    %494 = vector.extract_strided_slice %4 {offsets = [0, 53], sizes = [8, 1], strides = [1, 1]} : vector<8x128xi32> to vector<8x1xi32>
    %495 = vector.broadcast %494 : vector<8x1xi32> to vector<8x80xi32>
    %496 = arith.cmpi eq, %495, %10 : vector<8x80xi32>
    %497 = vector.extract_strided_slice %6 {offsets = [0, 53], sizes = [8, 1], strides = [1, 1]} : vector<8x128xf32> to vector<8x1xf32>
    %cst_65 = arith.constant 0.000000e+00 : f32
    %498 = vector.shape_cast %497 : vector<8x1xf32> to vector<8x1xf32>
    %499 = vector.broadcast %498 : vector<8x1xf32> to vector<8x80xf32>
    %500 = vector.broadcast %cst_65 : f32 to vector<8x80xf32>
    %501 = arith.select %496, %499, %500 : vector<8x80xi1>, vector<8x80xf32>
    %502 = arith.addf %493, %501 : vector<8x80xf32>
    %503 = vector.extract_strided_slice %4 {offsets = [0, 54], sizes = [8, 1], strides = [1, 1]} : vector<8x128xi32> to vector<8x1xi32>
    %504 = vector.broadcast %503 : vector<8x1xi32> to vector<8x80xi32>
    %505 = arith.cmpi eq, %504, %10 : vector<8x80xi32>
    %506 = vector.extract_strided_slice %6 {offsets = [0, 54], sizes = [8, 1], strides = [1, 1]} : vector<8x128xf32> to vector<8x1xf32>
    %cst_66 = arith.constant 0.000000e+00 : f32
    %507 = vector.shape_cast %506 : vector<8x1xf32> to vector<8x1xf32>
    %508 = vector.broadcast %507 : vector<8x1xf32> to vector<8x80xf32>
    %509 = vector.broadcast %cst_66 : f32 to vector<8x80xf32>
    %510 = arith.select %505, %508, %509 : vector<8x80xi1>, vector<8x80xf32>
    %511 = arith.addf %502, %510 : vector<8x80xf32>
    %512 = vector.extract_strided_slice %4 {offsets = [0, 55], sizes = [8, 1], strides = [1, 1]} : vector<8x128xi32> to vector<8x1xi32>
    %513 = vector.broadcast %512 : vector<8x1xi32> to vector<8x80xi32>
    %514 = arith.cmpi eq, %513, %10 : vector<8x80xi32>
    %515 = vector.extract_strided_slice %6 {offsets = [0, 55], sizes = [8, 1], strides = [1, 1]} : vector<8x128xf32> to vector<8x1xf32>
    %cst_67 = arith.constant 0.000000e+00 : f32
    %516 = vector.shape_cast %515 : vector<8x1xf32> to vector<8x1xf32>
    %517 = vector.broadcast %516 : vector<8x1xf32> to vector<8x80xf32>
    %518 = vector.broadcast %cst_67 : f32 to vector<8x80xf32>
    %519 = arith.select %514, %517, %518 : vector<8x80xi1>, vector<8x80xf32>
    %520 = arith.addf %511, %519 : vector<8x80xf32>
    %521 = vector.extract_strided_slice %4 {offsets = [0, 56], sizes = [8, 1], strides = [1, 1]} : vector<8x128xi32> to vector<8x1xi32>
    %522 = vector.broadcast %521 : vector<8x1xi32> to vector<8x80xi32>
    %523 = arith.cmpi eq, %522, %10 : vector<8x80xi32>
    %524 = vector.extract_strided_slice %6 {offsets = [0, 56], sizes = [8, 1], strides = [1, 1]} : vector<8x128xf32> to vector<8x1xf32>
    %cst_68 = arith.constant 0.000000e+00 : f32
    %525 = vector.shape_cast %524 : vector<8x1xf32> to vector<8x1xf32>
    %526 = vector.broadcast %525 : vector<8x1xf32> to vector<8x80xf32>
    %527 = vector.broadcast %cst_68 : f32 to vector<8x80xf32>
    %528 = arith.select %523, %526, %527 : vector<8x80xi1>, vector<8x80xf32>
    %529 = arith.addf %520, %528 : vector<8x80xf32>
    %530 = vector.extract_strided_slice %4 {offsets = [0, 57], sizes = [8, 1], strides = [1, 1]} : vector<8x128xi32> to vector<8x1xi32>
    %531 = vector.broadcast %530 : vector<8x1xi32> to vector<8x80xi32>
    %532 = arith.cmpi eq, %531, %10 : vector<8x80xi32>
    %533 = vector.extract_strided_slice %6 {offsets = [0, 57], sizes = [8, 1], strides = [1, 1]} : vector<8x128xf32> to vector<8x1xf32>
    %cst_69 = arith.constant 0.000000e+00 : f32
    %534 = vector.shape_cast %533 : vector<8x1xf32> to vector<8x1xf32>
    %535 = vector.broadcast %534 : vector<8x1xf32> to vector<8x80xf32>
    %536 = vector.broadcast %cst_69 : f32 to vector<8x80xf32>
    %537 = arith.select %532, %535, %536 : vector<8x80xi1>, vector<8x80xf32>
    %538 = arith.addf %529, %537 : vector<8x80xf32>
    %539 = vector.extract_strided_slice %4 {offsets = [0, 58], sizes = [8, 1], strides = [1, 1]} : vector<8x128xi32> to vector<8x1xi32>
    %540 = vector.broadcast %539 : vector<8x1xi32> to vector<8x80xi32>
    %541 = arith.cmpi eq, %540, %10 : vector<8x80xi32>
    %542 = vector.extract_strided_slice %6 {offsets = [0, 58], sizes = [8, 1], strides = [1, 1]} : vector<8x128xf32> to vector<8x1xf32>
    %cst_70 = arith.constant 0.000000e+00 : f32
    %543 = vector.shape_cast %542 : vector<8x1xf32> to vector<8x1xf32>
    %544 = vector.broadcast %543 : vector<8x1xf32> to vector<8x80xf32>
    %545 = vector.broadcast %cst_70 : f32 to vector<8x80xf32>
    %546 = arith.select %541, %544, %545 : vector<8x80xi1>, vector<8x80xf32>
    %547 = arith.addf %538, %546 : vector<8x80xf32>
    %548 = vector.extract_strided_slice %4 {offsets = [0, 59], sizes = [8, 1], strides = [1, 1]} : vector<8x128xi32> to vector<8x1xi32>
    %549 = vector.broadcast %548 : vector<8x1xi32> to vector<8x80xi32>
    %550 = arith.cmpi eq, %549, %10 : vector<8x80xi32>
    %551 = vector.extract_strided_slice %6 {offsets = [0, 59], sizes = [8, 1], strides = [1, 1]} : vector<8x128xf32> to vector<8x1xf32>
    %cst_71 = arith.constant 0.000000e+00 : f32
    %552 = vector.shape_cast %551 : vector<8x1xf32> to vector<8x1xf32>
    %553 = vector.broadcast %552 : vector<8x1xf32> to vector<8x80xf32>
    %554 = vector.broadcast %cst_71 : f32 to vector<8x80xf32>
    %555 = arith.select %550, %553, %554 : vector<8x80xi1>, vector<8x80xf32>
    %556 = arith.addf %547, %555 : vector<8x80xf32>
    %557 = vector.extract_strided_slice %4 {offsets = [0, 60], sizes = [8, 1], strides = [1, 1]} : vector<8x128xi32> to vector<8x1xi32>
    %558 = vector.broadcast %557 : vector<8x1xi32> to vector<8x80xi32>
    %559 = arith.cmpi eq, %558, %10 : vector<8x80xi32>
    %560 = vector.extract_strided_slice %6 {offsets = [0, 60], sizes = [8, 1], strides = [1, 1]} : vector<8x128xf32> to vector<8x1xf32>
    %cst_72 = arith.constant 0.000000e+00 : f32
    %561 = vector.shape_cast %560 : vector<8x1xf32> to vector<8x1xf32>
    %562 = vector.broadcast %561 : vector<8x1xf32> to vector<8x80xf32>
    %563 = vector.broadcast %cst_72 : f32 to vector<8x80xf32>
    %564 = arith.select %559, %562, %563 : vector<8x80xi1>, vector<8x80xf32>
    %565 = arith.addf %556, %564 : vector<8x80xf32>
    %566 = vector.extract_strided_slice %4 {offsets = [0, 61], sizes = [8, 1], strides = [1, 1]} : vector<8x128xi32> to vector<8x1xi32>
    %567 = vector.broadcast %566 : vector<8x1xi32> to vector<8x80xi32>
    %568 = arith.cmpi eq, %567, %10 : vector<8x80xi32>
    %569 = vector.extract_strided_slice %6 {offsets = [0, 61], sizes = [8, 1], strides = [1, 1]} : vector<8x128xf32> to vector<8x1xf32>
    %cst_73 = arith.constant 0.000000e+00 : f32
    %570 = vector.shape_cast %569 : vector<8x1xf32> to vector<8x1xf32>
    %571 = vector.broadcast %570 : vector<8x1xf32> to vector<8x80xf32>
    %572 = vector.broadcast %cst_73 : f32 to vector<8x80xf32>
    %573 = arith.select %568, %571, %572 : vector<8x80xi1>, vector<8x80xf32>
    %574 = arith.addf %565, %573 : vector<8x80xf32>
    %575 = vector.extract_strided_slice %4 {offsets = [0, 62], sizes = [8, 1], strides = [1, 1]} : vector<8x128xi32> to vector<8x1xi32>
    %576 = vector.broadcast %575 : vector<8x1xi32> to vector<8x80xi32>
    %577 = arith.cmpi eq, %576, %10 : vector<8x80xi32>
    %578 = vector.extract_strided_slice %6 {offsets = [0, 62], sizes = [8, 1], strides = [1, 1]} : vector<8x128xf32> to vector<8x1xf32>
    %cst_74 = arith.constant 0.000000e+00 : f32
    %579 = vector.shape_cast %578 : vector<8x1xf32> to vector<8x1xf32>
    %580 = vector.broadcast %579 : vector<8x1xf32> to vector<8x80xf32>
    %581 = vector.broadcast %cst_74 : f32 to vector<8x80xf32>
    %582 = arith.select %577, %580, %581 : vector<8x80xi1>, vector<8x80xf32>
    %583 = arith.addf %574, %582 : vector<8x80xf32>
    %584 = vector.extract_strided_slice %4 {offsets = [0, 63], sizes = [8, 1], strides = [1, 1]} : vector<8x128xi32> to vector<8x1xi32>
    %585 = vector.broadcast %584 : vector<8x1xi32> to vector<8x80xi32>
    %586 = arith.cmpi eq, %585, %10 : vector<8x80xi32>
    %587 = vector.extract_strided_slice %6 {offsets = [0, 63], sizes = [8, 1], strides = [1, 1]} : vector<8x128xf32> to vector<8x1xf32>
    %cst_75 = arith.constant 0.000000e+00 : f32
    %588 = vector.shape_cast %587 : vector<8x1xf32> to vector<8x1xf32>
    %589 = vector.broadcast %588 : vector<8x1xf32> to vector<8x80xf32>
    %590 = vector.broadcast %cst_75 : f32 to vector<8x80xf32>
    %591 = arith.select %586, %589, %590 : vector<8x80xi1>, vector<8x80xf32>
    %592 = arith.addf %583, %591 : vector<8x80xf32>
    %c0_76 = arith.constant 0 : index
    %c1 = arith.constant 1 : index
    %c0_77 = arith.constant 0 : index
    %c0_78 = arith.constant 0 : index
    %593 = vector.load %arg5[%c0_76, %c1, %c0_77, %c0_78] : memref<1x4x80x8xbf16, #tpu.memory_space<vmem>>, vector<1x1x80x8xbf16>
    %594 = vector.shape_cast %593 : vector<1x1x80x8xbf16> to vector<80x8xbf16>
    %595 = arith.truncf %592 : vector<8x80xf32> to vector<8x80xbf16>
    %cst_79 = arith.constant dense<0.000000e+00> : vector<8x8xf32>
    %596 = tpu.matmul %595, %594, %cst_79 {dimension_numbers = #tpu.dot_dimension_numbers<[1], [0], [0], [1], [0, 0, 1, 1], [], []>} : vector<8x80xbf16>, vector<80x8xbf16>, vector<8x8xf32> -> vector<8x8xf32>
    %cst_80 = arith.constant 0.000000e+00 : f32
    %597 = vector.broadcast %cst_80 : f32 to vector<8x80xf32>
    %598 = vector.extract_strided_slice %4 {offsets = [0, 64], sizes = [8, 1], strides = [1, 1]} : vector<8x128xi32> to vector<8x1xi32>
    %599 = vector.broadcast %598 : vector<8x1xi32> to vector<8x80xi32>
    %600 = arith.cmpi eq, %599, %10 : vector<8x80xi32>
    %601 = vector.extract_strided_slice %6 {offsets = [0, 64], sizes = [8, 1], strides = [1, 1]} : vector<8x128xf32> to vector<8x1xf32>
    %cst_81 = arith.constant 0.000000e+00 : f32
    %602 = vector.shape_cast %601 : vector<8x1xf32> to vector<8x1xf32>
    %603 = vector.broadcast %602 : vector<8x1xf32> to vector<8x80xf32>
    %604 = vector.broadcast %cst_81 : f32 to vector<8x80xf32>
    %605 = arith.select %600, %603, %604 : vector<8x80xi1>, vector<8x80xf32>
    %606 = arith.addf %597, %605 : vector<8x80xf32>
    %607 = vector.extract_strided_slice %4 {offsets = [0, 65], sizes = [8, 1], strides = [1, 1]} : vector<8x128xi32> to vector<8x1xi32>
    %608 = vector.broadcast %607 : vector<8x1xi32> to vector<8x80xi32>
    %609 = arith.cmpi eq, %608, %10 : vector<8x80xi32>
    %610 = vector.extract_strided_slice %6 {offsets = [0, 65], sizes = [8, 1], strides = [1, 1]} : vector<8x128xf32> to vector<8x1xf32>
    %cst_82 = arith.constant 0.000000e+00 : f32
    %611 = vector.shape_cast %610 : vector<8x1xf32> to vector<8x1xf32>
    %612 = vector.broadcast %611 : vector<8x1xf32> to vector<8x80xf32>
    %613 = vector.broadcast %cst_82 : f32 to vector<8x80xf32>
    %614 = arith.select %609, %612, %613 : vector<8x80xi1>, vector<8x80xf32>
    %615 = arith.addf %606, %614 : vector<8x80xf32>
    %616 = vector.extract_strided_slice %4 {offsets = [0, 66], sizes = [8, 1], strides = [1, 1]} : vector<8x128xi32> to vector<8x1xi32>
    %617 = vector.broadcast %616 : vector<8x1xi32> to vector<8x80xi32>
    %618 = arith.cmpi eq, %617, %10 : vector<8x80xi32>
    %619 = vector.extract_strided_slice %6 {offsets = [0, 66], sizes = [8, 1], strides = [1, 1]} : vector<8x128xf32> to vector<8x1xf32>
    %cst_83 = arith.constant 0.000000e+00 : f32
    %620 = vector.shape_cast %619 : vector<8x1xf32> to vector<8x1xf32>
    %621 = vector.broadcast %620 : vector<8x1xf32> to vector<8x80xf32>
    %622 = vector.broadcast %cst_83 : f32 to vector<8x80xf32>
    %623 = arith.select %618, %621, %622 : vector<8x80xi1>, vector<8x80xf32>
    %624 = arith.addf %615, %623 : vector<8x80xf32>
    %625 = vector.extract_strided_slice %4 {offsets = [0, 67], sizes = [8, 1], strides = [1, 1]} : vector<8x128xi32> to vector<8x1xi32>
    %626 = vector.broadcast %625 : vector<8x1xi32> to vector<8x80xi32>
    %627 = arith.cmpi eq, %626, %10 : vector<8x80xi32>
    %628 = vector.extract_strided_slice %6 {offsets = [0, 67], sizes = [8, 1], strides = [1, 1]} : vector<8x128xf32> to vector<8x1xf32>
    %cst_84 = arith.constant 0.000000e+00 : f32
    %629 = vector.shape_cast %628 : vector<8x1xf32> to vector<8x1xf32>
    %630 = vector.broadcast %629 : vector<8x1xf32> to vector<8x80xf32>
    %631 = vector.broadcast %cst_84 : f32 to vector<8x80xf32>
    %632 = arith.select %627, %630, %631 : vector<8x80xi1>, vector<8x80xf32>
    %633 = arith.addf %624, %632 : vector<8x80xf32>
    %634 = vector.extract_strided_slice %4 {offsets = [0, 68], sizes = [8, 1], strides = [1, 1]} : vector<8x128xi32> to vector<8x1xi32>
    %635 = vector.broadcast %634 : vector<8x1xi32> to vector<8x80xi32>
    %636 = arith.cmpi eq, %635, %10 : vector<8x80xi32>
    %637 = vector.extract_strided_slice %6 {offsets = [0, 68], sizes = [8, 1], strides = [1, 1]} : vector<8x128xf32> to vector<8x1xf32>
    %cst_85 = arith.constant 0.000000e+00 : f32
    %638 = vector.shape_cast %637 : vector<8x1xf32> to vector<8x1xf32>
    %639 = vector.broadcast %638 : vector<8x1xf32> to vector<8x80xf32>
    %640 = vector.broadcast %cst_85 : f32 to vector<8x80xf32>
    %641 = arith.select %636, %639, %640 : vector<8x80xi1>, vector<8x80xf32>
    %642 = arith.addf %633, %641 : vector<8x80xf32>
    %643 = vector.extract_strided_slice %4 {offsets = [0, 69], sizes = [8, 1], strides = [1, 1]} : vector<8x128xi32> to vector<8x1xi32>
    %644 = vector.broadcast %643 : vector<8x1xi32> to vector<8x80xi32>
    %645 = arith.cmpi eq, %644, %10 : vector<8x80xi32>
    %646 = vector.extract_strided_slice %6 {offsets = [0, 69], sizes = [8, 1], strides = [1, 1]} : vector<8x128xf32> to vector<8x1xf32>
    %cst_86 = arith.constant 0.000000e+00 : f32
    %647 = vector.shape_cast %646 : vector<8x1xf32> to vector<8x1xf32>
    %648 = vector.broadcast %647 : vector<8x1xf32> to vector<8x80xf32>
    %649 = vector.broadcast %cst_86 : f32 to vector<8x80xf32>
    %650 = arith.select %645, %648, %649 : vector<8x80xi1>, vector<8x80xf32>
    %651 = arith.addf %642, %650 : vector<8x80xf32>
    %652 = vector.extract_strided_slice %4 {offsets = [0, 70], sizes = [8, 1], strides = [1, 1]} : vector<8x128xi32> to vector<8x1xi32>
    %653 = vector.broadcast %652 : vector<8x1xi32> to vector<8x80xi32>
    %654 = arith.cmpi eq, %653, %10 : vector<8x80xi32>
    %655 = vector.extract_strided_slice %6 {offsets = [0, 70], sizes = [8, 1], strides = [1, 1]} : vector<8x128xf32> to vector<8x1xf32>
    %cst_87 = arith.constant 0.000000e+00 : f32
    %656 = vector.shape_cast %655 : vector<8x1xf32> to vector<8x1xf32>
    %657 = vector.broadcast %656 : vector<8x1xf32> to vector<8x80xf32>
    %658 = vector.broadcast %cst_87 : f32 to vector<8x80xf32>
    %659 = arith.select %654, %657, %658 : vector<8x80xi1>, vector<8x80xf32>
    %660 = arith.addf %651, %659 : vector<8x80xf32>
    %661 = vector.extract_strided_slice %4 {offsets = [0, 71], sizes = [8, 1], strides = [1, 1]} : vector<8x128xi32> to vector<8x1xi32>
    %662 = vector.broadcast %661 : vector<8x1xi32> to vector<8x80xi32>
    %663 = arith.cmpi eq, %662, %10 : vector<8x80xi32>
    %664 = vector.extract_strided_slice %6 {offsets = [0, 71], sizes = [8, 1], strides = [1, 1]} : vector<8x128xf32> to vector<8x1xf32>
    %cst_88 = arith.constant 0.000000e+00 : f32
    %665 = vector.shape_cast %664 : vector<8x1xf32> to vector<8x1xf32>
    %666 = vector.broadcast %665 : vector<8x1xf32> to vector<8x80xf32>
    %667 = vector.broadcast %cst_88 : f32 to vector<8x80xf32>
    %668 = arith.select %663, %666, %667 : vector<8x80xi1>, vector<8x80xf32>
    %669 = arith.addf %660, %668 : vector<8x80xf32>
    %670 = vector.extract_strided_slice %4 {offsets = [0, 72], sizes = [8, 1], strides = [1, 1]} : vector<8x128xi32> to vector<8x1xi32>
    %671 = vector.broadcast %670 : vector<8x1xi32> to vector<8x80xi32>
    %672 = arith.cmpi eq, %671, %10 : vector<8x80xi32>
    %673 = vector.extract_strided_slice %6 {offsets = [0, 72], sizes = [8, 1], strides = [1, 1]} : vector<8x128xf32> to vector<8x1xf32>
    %cst_89 = arith.constant 0.000000e+00 : f32
    %674 = vector.shape_cast %673 : vector<8x1xf32> to vector<8x1xf32>
    %675 = vector.broadcast %674 : vector<8x1xf32> to vector<8x80xf32>
    %676 = vector.broadcast %cst_89 : f32 to vector<8x80xf32>
    %677 = arith.select %672, %675, %676 : vector<8x80xi1>, vector<8x80xf32>
    %678 = arith.addf %669, %677 : vector<8x80xf32>
    %679 = vector.extract_strided_slice %4 {offsets = [0, 73], sizes = [8, 1], strides = [1, 1]} : vector<8x128xi32> to vector<8x1xi32>
    %680 = vector.broadcast %679 : vector<8x1xi32> to vector<8x80xi32>
    %681 = arith.cmpi eq, %680, %10 : vector<8x80xi32>
    %682 = vector.extract_strided_slice %6 {offsets = [0, 73], sizes = [8, 1], strides = [1, 1]} : vector<8x128xf32> to vector<8x1xf32>
    %cst_90 = arith.constant 0.000000e+00 : f32
    %683 = vector.shape_cast %682 : vector<8x1xf32> to vector<8x1xf32>
    %684 = vector.broadcast %683 : vector<8x1xf32> to vector<8x80xf32>
    %685 = vector.broadcast %cst_90 : f32 to vector<8x80xf32>
    %686 = arith.select %681, %684, %685 : vector<8x80xi1>, vector<8x80xf32>
    %687 = arith.addf %678, %686 : vector<8x80xf32>
    %688 = vector.extract_strided_slice %4 {offsets = [0, 74], sizes = [8, 1], strides = [1, 1]} : vector<8x128xi32> to vector<8x1xi32>
    %689 = vector.broadcast %688 : vector<8x1xi32> to vector<8x80xi32>
    %690 = arith.cmpi eq, %689, %10 : vector<8x80xi32>
    %691 = vector.extract_strided_slice %6 {offsets = [0, 74], sizes = [8, 1], strides = [1, 1]} : vector<8x128xf32> to vector<8x1xf32>
    %cst_91 = arith.constant 0.000000e+00 : f32
    %692 = vector.shape_cast %691 : vector<8x1xf32> to vector<8x1xf32>
    %693 = vector.broadcast %692 : vector<8x1xf32> to vector<8x80xf32>
    %694 = vector.broadcast %cst_91 : f32 to vector<8x80xf32>
    %695 = arith.select %690, %693, %694 : vector<8x80xi1>, vector<8x80xf32>
    %696 = arith.addf %687, %695 : vector<8x80xf32>
    %697 = vector.extract_strided_slice %4 {offsets = [0, 75], sizes = [8, 1], strides = [1, 1]} : vector<8x128xi32> to vector<8x1xi32>
    %698 = vector.broadcast %697 : vector<8x1xi32> to vector<8x80xi32>
    %699 = arith.cmpi eq, %698, %10 : vector<8x80xi32>
    %700 = vector.extract_strided_slice %6 {offsets = [0, 75], sizes = [8, 1], strides = [1, 1]} : vector<8x128xf32> to vector<8x1xf32>
    %cst_92 = arith.constant 0.000000e+00 : f32
    %701 = vector.shape_cast %700 : vector<8x1xf32> to vector<8x1xf32>
    %702 = vector.broadcast %701 : vector<8x1xf32> to vector<8x80xf32>
    %703 = vector.broadcast %cst_92 : f32 to vector<8x80xf32>
    %704 = arith.select %699, %702, %703 : vector<8x80xi1>, vector<8x80xf32>
    %705 = arith.addf %696, %704 : vector<8x80xf32>
    %706 = vector.extract_strided_slice %4 {offsets = [0, 76], sizes = [8, 1], strides = [1, 1]} : vector<8x128xi32> to vector<8x1xi32>
    %707 = vector.broadcast %706 : vector<8x1xi32> to vector<8x80xi32>
    %708 = arith.cmpi eq, %707, %10 : vector<8x80xi32>
    %709 = vector.extract_strided_slice %6 {offsets = [0, 76], sizes = [8, 1], strides = [1, 1]} : vector<8x128xf32> to vector<8x1xf32>
    %cst_93 = arith.constant 0.000000e+00 : f32
    %710 = vector.shape_cast %709 : vector<8x1xf32> to vector<8x1xf32>
    %711 = vector.broadcast %710 : vector<8x1xf32> to vector<8x80xf32>
    %712 = vector.broadcast %cst_93 : f32 to vector<8x80xf32>
    %713 = arith.select %708, %711, %712 : vector<8x80xi1>, vector<8x80xf32>
    %714 = arith.addf %705, %713 : vector<8x80xf32>
    %715 = vector.extract_strided_slice %4 {offsets = [0, 77], sizes = [8, 1], strides = [1, 1]} : vector<8x128xi32> to vector<8x1xi32>
    %716 = vector.broadcast %715 : vector<8x1xi32> to vector<8x80xi32>
    %717 = arith.cmpi eq, %716, %10 : vector<8x80xi32>
    %718 = vector.extract_strided_slice %6 {offsets = [0, 77], sizes = [8, 1], strides = [1, 1]} : vector<8x128xf32> to vector<8x1xf32>
    %cst_94 = arith.constant 0.000000e+00 : f32
    %719 = vector.shape_cast %718 : vector<8x1xf32> to vector<8x1xf32>
    %720 = vector.broadcast %719 : vector<8x1xf32> to vector<8x80xf32>
    %721 = vector.broadcast %cst_94 : f32 to vector<8x80xf32>
    %722 = arith.select %717, %720, %721 : vector<8x80xi1>, vector<8x80xf32>
    %723 = arith.addf %714, %722 : vector<8x80xf32>
    %724 = vector.extract_strided_slice %4 {offsets = [0, 78], sizes = [8, 1], strides = [1, 1]} : vector<8x128xi32> to vector<8x1xi32>
    %725 = vector.broadcast %724 : vector<8x1xi32> to vector<8x80xi32>
    %726 = arith.cmpi eq, %725, %10 : vector<8x80xi32>
    %727 = vector.extract_strided_slice %6 {offsets = [0, 78], sizes = [8, 1], strides = [1, 1]} : vector<8x128xf32> to vector<8x1xf32>
    %cst_95 = arith.constant 0.000000e+00 : f32
    %728 = vector.shape_cast %727 : vector<8x1xf32> to vector<8x1xf32>
    %729 = vector.broadcast %728 : vector<8x1xf32> to vector<8x80xf32>
    %730 = vector.broadcast %cst_95 : f32 to vector<8x80xf32>
    %731 = arith.select %726, %729, %730 : vector<8x80xi1>, vector<8x80xf32>
    %732 = arith.addf %723, %731 : vector<8x80xf32>
    %733 = vector.extract_strided_slice %4 {offsets = [0, 79], sizes = [8, 1], strides = [1, 1]} : vector<8x128xi32> to vector<8x1xi32>
    %734 = vector.broadcast %733 : vector<8x1xi32> to vector<8x80xi32>
    %735 = arith.cmpi eq, %734, %10 : vector<8x80xi32>
    %736 = vector.extract_strided_slice %6 {offsets = [0, 79], sizes = [8, 1], strides = [1, 1]} : vector<8x128xf32> to vector<8x1xf32>
    %cst_96 = arith.constant 0.000000e+00 : f32
    %737 = vector.shape_cast %736 : vector<8x1xf32> to vector<8x1xf32>
    %738 = vector.broadcast %737 : vector<8x1xf32> to vector<8x80xf32>
    %739 = vector.broadcast %cst_96 : f32 to vector<8x80xf32>
    %740 = arith.select %735, %738, %739 : vector<8x80xi1>, vector<8x80xf32>
    %741 = arith.addf %732, %740 : vector<8x80xf32>
    %742 = vector.extract_strided_slice %4 {offsets = [0, 80], sizes = [8, 1], strides = [1, 1]} : vector<8x128xi32> to vector<8x1xi32>
    %743 = vector.broadcast %742 : vector<8x1xi32> to vector<8x80xi32>
    %744 = arith.cmpi eq, %743, %10 : vector<8x80xi32>
    %745 = vector.extract_strided_slice %6 {offsets = [0, 80], sizes = [8, 1], strides = [1, 1]} : vector<8x128xf32> to vector<8x1xf32>
    %cst_97 = arith.constant 0.000000e+00 : f32
    %746 = vector.shape_cast %745 : vector<8x1xf32> to vector<8x1xf32>
    %747 = vector.broadcast %746 : vector<8x1xf32> to vector<8x80xf32>
    %748 = vector.broadcast %cst_97 : f32 to vector<8x80xf32>
    %749 = arith.select %744, %747, %748 : vector<8x80xi1>, vector<8x80xf32>
    %750 = arith.addf %741, %749 : vector<8x80xf32>
    %751 = vector.extract_strided_slice %4 {offsets = [0, 81], sizes = [8, 1], strides = [1, 1]} : vector<8x128xi32> to vector<8x1xi32>
    %752 = vector.broadcast %751 : vector<8x1xi32> to vector<8x80xi32>
    %753 = arith.cmpi eq, %752, %10 : vector<8x80xi32>
    %754 = vector.extract_strided_slice %6 {offsets = [0, 81], sizes = [8, 1], strides = [1, 1]} : vector<8x128xf32> to vector<8x1xf32>
    %cst_98 = arith.constant 0.000000e+00 : f32
    %755 = vector.shape_cast %754 : vector<8x1xf32> to vector<8x1xf32>
    %756 = vector.broadcast %755 : vector<8x1xf32> to vector<8x80xf32>
    %757 = vector.broadcast %cst_98 : f32 to vector<8x80xf32>
    %758 = arith.select %753, %756, %757 : vector<8x80xi1>, vector<8x80xf32>
    %759 = arith.addf %750, %758 : vector<8x80xf32>
    %760 = vector.extract_strided_slice %4 {offsets = [0, 82], sizes = [8, 1], strides = [1, 1]} : vector<8x128xi32> to vector<8x1xi32>
    %761 = vector.broadcast %760 : vector<8x1xi32> to vector<8x80xi32>
    %762 = arith.cmpi eq, %761, %10 : vector<8x80xi32>
    %763 = vector.extract_strided_slice %6 {offsets = [0, 82], sizes = [8, 1], strides = [1, 1]} : vector<8x128xf32> to vector<8x1xf32>
    %cst_99 = arith.constant 0.000000e+00 : f32
    %764 = vector.shape_cast %763 : vector<8x1xf32> to vector<8x1xf32>
    %765 = vector.broadcast %764 : vector<8x1xf32> to vector<8x80xf32>
    %766 = vector.broadcast %cst_99 : f32 to vector<8x80xf32>
    %767 = arith.select %762, %765, %766 : vector<8x80xi1>, vector<8x80xf32>
    %768 = arith.addf %759, %767 : vector<8x80xf32>
    %769 = vector.extract_strided_slice %4 {offsets = [0, 83], sizes = [8, 1], strides = [1, 1]} : vector<8x128xi32> to vector<8x1xi32>
    %770 = vector.broadcast %769 : vector<8x1xi32> to vector<8x80xi32>
    %771 = arith.cmpi eq, %770, %10 : vector<8x80xi32>
    %772 = vector.extract_strided_slice %6 {offsets = [0, 83], sizes = [8, 1], strides = [1, 1]} : vector<8x128xf32> to vector<8x1xf32>
    %cst_100 = arith.constant 0.000000e+00 : f32
    %773 = vector.shape_cast %772 : vector<8x1xf32> to vector<8x1xf32>
    %774 = vector.broadcast %773 : vector<8x1xf32> to vector<8x80xf32>
    %775 = vector.broadcast %cst_100 : f32 to vector<8x80xf32>
    %776 = arith.select %771, %774, %775 : vector<8x80xi1>, vector<8x80xf32>
    %777 = arith.addf %768, %776 : vector<8x80xf32>
    %778 = vector.extract_strided_slice %4 {offsets = [0, 84], sizes = [8, 1], strides = [1, 1]} : vector<8x128xi32> to vector<8x1xi32>
    %779 = vector.broadcast %778 : vector<8x1xi32> to vector<8x80xi32>
    %780 = arith.cmpi eq, %779, %10 : vector<8x80xi32>
    %781 = vector.extract_strided_slice %6 {offsets = [0, 84], sizes = [8, 1], strides = [1, 1]} : vector<8x128xf32> to vector<8x1xf32>
    %cst_101 = arith.constant 0.000000e+00 : f32
    %782 = vector.shape_cast %781 : vector<8x1xf32> to vector<8x1xf32>
    %783 = vector.broadcast %782 : vector<8x1xf32> to vector<8x80xf32>
    %784 = vector.broadcast %cst_101 : f32 to vector<8x80xf32>
    %785 = arith.select %780, %783, %784 : vector<8x80xi1>, vector<8x80xf32>
    %786 = arith.addf %777, %785 : vector<8x80xf32>
    %787 = vector.extract_strided_slice %4 {offsets = [0, 85], sizes = [8, 1], strides = [1, 1]} : vector<8x128xi32> to vector<8x1xi32>
    %788 = vector.broadcast %787 : vector<8x1xi32> to vector<8x80xi32>
    %789 = arith.cmpi eq, %788, %10 : vector<8x80xi32>
    %790 = vector.extract_strided_slice %6 {offsets = [0, 85], sizes = [8, 1], strides = [1, 1]} : vector<8x128xf32> to vector<8x1xf32>
    %cst_102 = arith.constant 0.000000e+00 : f32
    %791 = vector.shape_cast %790 : vector<8x1xf32> to vector<8x1xf32>
    %792 = vector.broadcast %791 : vector<8x1xf32> to vector<8x80xf32>
    %793 = vector.broadcast %cst_102 : f32 to vector<8x80xf32>
    %794 = arith.select %789, %792, %793 : vector<8x80xi1>, vector<8x80xf32>
    %795 = arith.addf %786, %794 : vector<8x80xf32>
    %796 = vector.extract_strided_slice %4 {offsets = [0, 86], sizes = [8, 1], strides = [1, 1]} : vector<8x128xi32> to vector<8x1xi32>
    %797 = vector.broadcast %796 : vector<8x1xi32> to vector<8x80xi32>
    %798 = arith.cmpi eq, %797, %10 : vector<8x80xi32>
    %799 = vector.extract_strided_slice %6 {offsets = [0, 86], sizes = [8, 1], strides = [1, 1]} : vector<8x128xf32> to vector<8x1xf32>
    %cst_103 = arith.constant 0.000000e+00 : f32
    %800 = vector.shape_cast %799 : vector<8x1xf32> to vector<8x1xf32>
    %801 = vector.broadcast %800 : vector<8x1xf32> to vector<8x80xf32>
    %802 = vector.broadcast %cst_103 : f32 to vector<8x80xf32>
    %803 = arith.select %798, %801, %802 : vector<8x80xi1>, vector<8x80xf32>
    %804 = arith.addf %795, %803 : vector<8x80xf32>
    %805 = vector.extract_strided_slice %4 {offsets = [0, 87], sizes = [8, 1], strides = [1, 1]} : vector<8x128xi32> to vector<8x1xi32>
    %806 = vector.broadcast %805 : vector<8x1xi32> to vector<8x80xi32>
    %807 = arith.cmpi eq, %806, %10 : vector<8x80xi32>
    %808 = vector.extract_strided_slice %6 {offsets = [0, 87], sizes = [8, 1], strides = [1, 1]} : vector<8x128xf32> to vector<8x1xf32>
    %cst_104 = arith.constant 0.000000e+00 : f32
    %809 = vector.shape_cast %808 : vector<8x1xf32> to vector<8x1xf32>
    %810 = vector.broadcast %809 : vector<8x1xf32> to vector<8x80xf32>
    %811 = vector.broadcast %cst_104 : f32 to vector<8x80xf32>
    %812 = arith.select %807, %810, %811 : vector<8x80xi1>, vector<8x80xf32>
    %813 = arith.addf %804, %812 : vector<8x80xf32>
    %814 = vector.extract_strided_slice %4 {offsets = [0, 88], sizes = [8, 1], strides = [1, 1]} : vector<8x128xi32> to vector<8x1xi32>
    %815 = vector.broadcast %814 : vector<8x1xi32> to vector<8x80xi32>
    %816 = arith.cmpi eq, %815, %10 : vector<8x80xi32>
    %817 = vector.extract_strided_slice %6 {offsets = [0, 88], sizes = [8, 1], strides = [1, 1]} : vector<8x128xf32> to vector<8x1xf32>
    %cst_105 = arith.constant 0.000000e+00 : f32
    %818 = vector.shape_cast %817 : vector<8x1xf32> to vector<8x1xf32>
    %819 = vector.broadcast %818 : vector<8x1xf32> to vector<8x80xf32>
    %820 = vector.broadcast %cst_105 : f32 to vector<8x80xf32>
    %821 = arith.select %816, %819, %820 : vector<8x80xi1>, vector<8x80xf32>
    %822 = arith.addf %813, %821 : vector<8x80xf32>
    %823 = vector.extract_strided_slice %4 {offsets = [0, 89], sizes = [8, 1], strides = [1, 1]} : vector<8x128xi32> to vector<8x1xi32>
    %824 = vector.broadcast %823 : vector<8x1xi32> to vector<8x80xi32>
    %825 = arith.cmpi eq, %824, %10 : vector<8x80xi32>
    %826 = vector.extract_strided_slice %6 {offsets = [0, 89], sizes = [8, 1], strides = [1, 1]} : vector<8x128xf32> to vector<8x1xf32>
    %cst_106 = arith.constant 0.000000e+00 : f32
    %827 = vector.shape_cast %826 : vector<8x1xf32> to vector<8x1xf32>
    %828 = vector.broadcast %827 : vector<8x1xf32> to vector<8x80xf32>
    %829 = vector.broadcast %cst_106 : f32 to vector<8x80xf32>
    %830 = arith.select %825, %828, %829 : vector<8x80xi1>, vector<8x80xf32>
    %831 = arith.addf %822, %830 : vector<8x80xf32>
    %832 = vector.extract_strided_slice %4 {offsets = [0, 90], sizes = [8, 1], strides = [1, 1]} : vector<8x128xi32> to vector<8x1xi32>
    %833 = vector.broadcast %832 : vector<8x1xi32> to vector<8x80xi32>
    %834 = arith.cmpi eq, %833, %10 : vector<8x80xi32>
    %835 = vector.extract_strided_slice %6 {offsets = [0, 90], sizes = [8, 1], strides = [1, 1]} : vector<8x128xf32> to vector<8x1xf32>
    %cst_107 = arith.constant 0.000000e+00 : f32
    %836 = vector.shape_cast %835 : vector<8x1xf32> to vector<8x1xf32>
    %837 = vector.broadcast %836 : vector<8x1xf32> to vector<8x80xf32>
    %838 = vector.broadcast %cst_107 : f32 to vector<8x80xf32>
    %839 = arith.select %834, %837, %838 : vector<8x80xi1>, vector<8x80xf32>
    %840 = arith.addf %831, %839 : vector<8x80xf32>
    %841 = vector.extract_strided_slice %4 {offsets = [0, 91], sizes = [8, 1], strides = [1, 1]} : vector<8x128xi32> to vector<8x1xi32>
    %842 = vector.broadcast %841 : vector<8x1xi32> to vector<8x80xi32>
    %843 = arith.cmpi eq, %842, %10 : vector<8x80xi32>
    %844 = vector.extract_strided_slice %6 {offsets = [0, 91], sizes = [8, 1], strides = [1, 1]} : vector<8x128xf32> to vector<8x1xf32>
    %cst_108 = arith.constant 0.000000e+00 : f32
    %845 = vector.shape_cast %844 : vector<8x1xf32> to vector<8x1xf32>
    %846 = vector.broadcast %845 : vector<8x1xf32> to vector<8x80xf32>
    %847 = vector.broadcast %cst_108 : f32 to vector<8x80xf32>
    %848 = arith.select %843, %846, %847 : vector<8x80xi1>, vector<8x80xf32>
    %849 = arith.addf %840, %848 : vector<8x80xf32>
    %850 = vector.extract_strided_slice %4 {offsets = [0, 92], sizes = [8, 1], strides = [1, 1]} : vector<8x128xi32> to vector<8x1xi32>
    %851 = vector.broadcast %850 : vector<8x1xi32> to vector<8x80xi32>
    %852 = arith.cmpi eq, %851, %10 : vector<8x80xi32>
    %853 = vector.extract_strided_slice %6 {offsets = [0, 92], sizes = [8, 1], strides = [1, 1]} : vector<8x128xf32> to vector<8x1xf32>
    %cst_109 = arith.constant 0.000000e+00 : f32
    %854 = vector.shape_cast %853 : vector<8x1xf32> to vector<8x1xf32>
    %855 = vector.broadcast %854 : vector<8x1xf32> to vector<8x80xf32>
    %856 = vector.broadcast %cst_109 : f32 to vector<8x80xf32>
    %857 = arith.select %852, %855, %856 : vector<8x80xi1>, vector<8x80xf32>
    %858 = arith.addf %849, %857 : vector<8x80xf32>
    %859 = vector.extract_strided_slice %4 {offsets = [0, 93], sizes = [8, 1], strides = [1, 1]} : vector<8x128xi32> to vector<8x1xi32>
    %860 = vector.broadcast %859 : vector<8x1xi32> to vector<8x80xi32>
    %861 = arith.cmpi eq, %860, %10 : vector<8x80xi32>
    %862 = vector.extract_strided_slice %6 {offsets = [0, 93], sizes = [8, 1], strides = [1, 1]} : vector<8x128xf32> to vector<8x1xf32>
    %cst_110 = arith.constant 0.000000e+00 : f32
    %863 = vector.shape_cast %862 : vector<8x1xf32> to vector<8x1xf32>
    %864 = vector.broadcast %863 : vector<8x1xf32> to vector<8x80xf32>
    %865 = vector.broadcast %cst_110 : f32 to vector<8x80xf32>
    %866 = arith.select %861, %864, %865 : vector<8x80xi1>, vector<8x80xf32>
    %867 = arith.addf %858, %866 : vector<8x80xf32>
    %868 = vector.extract_strided_slice %4 {offsets = [0, 94], sizes = [8, 1], strides = [1, 1]} : vector<8x128xi32> to vector<8x1xi32>
    %869 = vector.broadcast %868 : vector<8x1xi32> to vector<8x80xi32>
    %870 = arith.cmpi eq, %869, %10 : vector<8x80xi32>
    %871 = vector.extract_strided_slice %6 {offsets = [0, 94], sizes = [8, 1], strides = [1, 1]} : vector<8x128xf32> to vector<8x1xf32>
    %cst_111 = arith.constant 0.000000e+00 : f32
    %872 = vector.shape_cast %871 : vector<8x1xf32> to vector<8x1xf32>
    %873 = vector.broadcast %872 : vector<8x1xf32> to vector<8x80xf32>
    %874 = vector.broadcast %cst_111 : f32 to vector<8x80xf32>
    %875 = arith.select %870, %873, %874 : vector<8x80xi1>, vector<8x80xf32>
    %876 = arith.addf %867, %875 : vector<8x80xf32>
    %877 = vector.extract_strided_slice %4 {offsets = [0, 95], sizes = [8, 1], strides = [1, 1]} : vector<8x128xi32> to vector<8x1xi32>
    %878 = vector.broadcast %877 : vector<8x1xi32> to vector<8x80xi32>
    %879 = arith.cmpi eq, %878, %10 : vector<8x80xi32>
    %880 = vector.extract_strided_slice %6 {offsets = [0, 95], sizes = [8, 1], strides = [1, 1]} : vector<8x128xf32> to vector<8x1xf32>
    %cst_112 = arith.constant 0.000000e+00 : f32
    %881 = vector.shape_cast %880 : vector<8x1xf32> to vector<8x1xf32>
    %882 = vector.broadcast %881 : vector<8x1xf32> to vector<8x80xf32>
    %883 = vector.broadcast %cst_112 : f32 to vector<8x80xf32>
    %884 = arith.select %879, %882, %883 : vector<8x80xi1>, vector<8x80xf32>
    %885 = arith.addf %876, %884 : vector<8x80xf32>
    %c0_113 = arith.constant 0 : index
    %c2 = arith.constant 2 : index
    %c0_114 = arith.constant 0 : index
    %c0_115 = arith.constant 0 : index
    %886 = vector.load %arg5[%c0_113, %c2, %c0_114, %c0_115] : memref<1x4x80x8xbf16, #tpu.memory_space<vmem>>, vector<1x1x80x8xbf16>
    %887 = vector.shape_cast %886 : vector<1x1x80x8xbf16> to vector<80x8xbf16>
    %888 = arith.truncf %885 : vector<8x80xf32> to vector<8x80xbf16>
    %cst_116 = arith.constant dense<0.000000e+00> : vector<8x8xf32>
    %889 = tpu.matmul %888, %887, %cst_116 {dimension_numbers = #tpu.dot_dimension_numbers<[1], [0], [0], [1], [0, 0, 1, 1], [], []>} : vector<8x80xbf16>, vector<80x8xbf16>, vector<8x8xf32> -> vector<8x8xf32>
    %cst_117 = arith.constant 0.000000e+00 : f32
    %890 = vector.broadcast %cst_117 : f32 to vector<8x80xf32>
    %891 = vector.extract_strided_slice %4 {offsets = [0, 96], sizes = [8, 1], strides = [1, 1]} : vector<8x128xi32> to vector<8x1xi32>
    %892 = vector.broadcast %891 : vector<8x1xi32> to vector<8x80xi32>
    %893 = arith.cmpi eq, %892, %10 : vector<8x80xi32>
    %894 = vector.extract_strided_slice %6 {offsets = [0, 96], sizes = [8, 1], strides = [1, 1]} : vector<8x128xf32> to vector<8x1xf32>
    %cst_118 = arith.constant 0.000000e+00 : f32
    %895 = vector.shape_cast %894 : vector<8x1xf32> to vector<8x1xf32>
    %896 = vector.broadcast %895 : vector<8x1xf32> to vector<8x80xf32>
    %897 = vector.broadcast %cst_118 : f32 to vector<8x80xf32>
    %898 = arith.select %893, %896, %897 : vector<8x80xi1>, vector<8x80xf32>
    %899 = arith.addf %890, %898 : vector<8x80xf32>
    %900 = vector.extract_strided_slice %4 {offsets = [0, 97], sizes = [8, 1], strides = [1, 1]} : vector<8x128xi32> to vector<8x1xi32>
    %901 = vector.broadcast %900 : vector<8x1xi32> to vector<8x80xi32>
    %902 = arith.cmpi eq, %901, %10 : vector<8x80xi32>
    %903 = vector.extract_strided_slice %6 {offsets = [0, 97], sizes = [8, 1], strides = [1, 1]} : vector<8x128xf32> to vector<8x1xf32>
    %cst_119 = arith.constant 0.000000e+00 : f32
    %904 = vector.shape_cast %903 : vector<8x1xf32> to vector<8x1xf32>
    %905 = vector.broadcast %904 : vector<8x1xf32> to vector<8x80xf32>
    %906 = vector.broadcast %cst_119 : f32 to vector<8x80xf32>
    %907 = arith.select %902, %905, %906 : vector<8x80xi1>, vector<8x80xf32>
    %908 = arith.addf %899, %907 : vector<8x80xf32>
    %909 = vector.extract_strided_slice %4 {offsets = [0, 98], sizes = [8, 1], strides = [1, 1]} : vector<8x128xi32> to vector<8x1xi32>
    %910 = vector.broadcast %909 : vector<8x1xi32> to vector<8x80xi32>
    %911 = arith.cmpi eq, %910, %10 : vector<8x80xi32>
    %912 = vector.extract_strided_slice %6 {offsets = [0, 98], sizes = [8, 1], strides = [1, 1]} : vector<8x128xf32> to vector<8x1xf32>
    %cst_120 = arith.constant 0.000000e+00 : f32
    %913 = vector.shape_cast %912 : vector<8x1xf32> to vector<8x1xf32>
    %914 = vector.broadcast %913 : vector<8x1xf32> to vector<8x80xf32>
    %915 = vector.broadcast %cst_120 : f32 to vector<8x80xf32>
    %916 = arith.select %911, %914, %915 : vector<8x80xi1>, vector<8x80xf32>
    %917 = arith.addf %908, %916 : vector<8x80xf32>
    %918 = vector.extract_strided_slice %4 {offsets = [0, 99], sizes = [8, 1], strides = [1, 1]} : vector<8x128xi32> to vector<8x1xi32>
    %919 = vector.broadcast %918 : vector<8x1xi32> to vector<8x80xi32>
    %920 = arith.cmpi eq, %919, %10 : vector<8x80xi32>
    %921 = vector.extract_strided_slice %6 {offsets = [0, 99], sizes = [8, 1], strides = [1, 1]} : vector<8x128xf32> to vector<8x1xf32>
    %cst_121 = arith.constant 0.000000e+00 : f32
    %922 = vector.shape_cast %921 : vector<8x1xf32> to vector<8x1xf32>
    %923 = vector.broadcast %922 : vector<8x1xf32> to vector<8x80xf32>
    %924 = vector.broadcast %cst_121 : f32 to vector<8x80xf32>
    %925 = arith.select %920, %923, %924 : vector<8x80xi1>, vector<8x80xf32>
    %926 = arith.addf %917, %925 : vector<8x80xf32>
    %927 = vector.extract_strided_slice %4 {offsets = [0, 100], sizes = [8, 1], strides = [1, 1]} : vector<8x128xi32> to vector<8x1xi32>
    %928 = vector.broadcast %927 : vector<8x1xi32> to vector<8x80xi32>
    %929 = arith.cmpi eq, %928, %10 : vector<8x80xi32>
    %930 = vector.extract_strided_slice %6 {offsets = [0, 100], sizes = [8, 1], strides = [1, 1]} : vector<8x128xf32> to vector<8x1xf32>
    %cst_122 = arith.constant 0.000000e+00 : f32
    %931 = vector.shape_cast %930 : vector<8x1xf32> to vector<8x1xf32>
    %932 = vector.broadcast %931 : vector<8x1xf32> to vector<8x80xf32>
    %933 = vector.broadcast %cst_122 : f32 to vector<8x80xf32>
    %934 = arith.select %929, %932, %933 : vector<8x80xi1>, vector<8x80xf32>
    %935 = arith.addf %926, %934 : vector<8x80xf32>
    %936 = vector.extract_strided_slice %4 {offsets = [0, 101], sizes = [8, 1], strides = [1, 1]} : vector<8x128xi32> to vector<8x1xi32>
    %937 = vector.broadcast %936 : vector<8x1xi32> to vector<8x80xi32>
    %938 = arith.cmpi eq, %937, %10 : vector<8x80xi32>
    %939 = vector.extract_strided_slice %6 {offsets = [0, 101], sizes = [8, 1], strides = [1, 1]} : vector<8x128xf32> to vector<8x1xf32>
    %cst_123 = arith.constant 0.000000e+00 : f32
    %940 = vector.shape_cast %939 : vector<8x1xf32> to vector<8x1xf32>
    %941 = vector.broadcast %940 : vector<8x1xf32> to vector<8x80xf32>
    %942 = vector.broadcast %cst_123 : f32 to vector<8x80xf32>
    %943 = arith.select %938, %941, %942 : vector<8x80xi1>, vector<8x80xf32>
    %944 = arith.addf %935, %943 : vector<8x80xf32>
    %945 = vector.extract_strided_slice %4 {offsets = [0, 102], sizes = [8, 1], strides = [1, 1]} : vector<8x128xi32> to vector<8x1xi32>
    %946 = vector.broadcast %945 : vector<8x1xi32> to vector<8x80xi32>
    %947 = arith.cmpi eq, %946, %10 : vector<8x80xi32>
    %948 = vector.extract_strided_slice %6 {offsets = [0, 102], sizes = [8, 1], strides = [1, 1]} : vector<8x128xf32> to vector<8x1xf32>
    %cst_124 = arith.constant 0.000000e+00 : f32
    %949 = vector.shape_cast %948 : vector<8x1xf32> to vector<8x1xf32>
    %950 = vector.broadcast %949 : vector<8x1xf32> to vector<8x80xf32>
    %951 = vector.broadcast %cst_124 : f32 to vector<8x80xf32>
    %952 = arith.select %947, %950, %951 : vector<8x80xi1>, vector<8x80xf32>
    %953 = arith.addf %944, %952 : vector<8x80xf32>
    %954 = vector.extract_strided_slice %4 {offsets = [0, 103], sizes = [8, 1], strides = [1, 1]} : vector<8x128xi32> to vector<8x1xi32>
    %955 = vector.broadcast %954 : vector<8x1xi32> to vector<8x80xi32>
    %956 = arith.cmpi eq, %955, %10 : vector<8x80xi32>
    %957 = vector.extract_strided_slice %6 {offsets = [0, 103], sizes = [8, 1], strides = [1, 1]} : vector<8x128xf32> to vector<8x1xf32>
    %cst_125 = arith.constant 0.000000e+00 : f32
    %958 = vector.shape_cast %957 : vector<8x1xf32> to vector<8x1xf32>
    %959 = vector.broadcast %958 : vector<8x1xf32> to vector<8x80xf32>
    %960 = vector.broadcast %cst_125 : f32 to vector<8x80xf32>
    %961 = arith.select %956, %959, %960 : vector<8x80xi1>, vector<8x80xf32>
    %962 = arith.addf %953, %961 : vector<8x80xf32>
    %963 = vector.extract_strided_slice %4 {offsets = [0, 104], sizes = [8, 1], strides = [1, 1]} : vector<8x128xi32> to vector<8x1xi32>
    %964 = vector.broadcast %963 : vector<8x1xi32> to vector<8x80xi32>
    %965 = arith.cmpi eq, %964, %10 : vector<8x80xi32>
    %966 = vector.extract_strided_slice %6 {offsets = [0, 104], sizes = [8, 1], strides = [1, 1]} : vector<8x128xf32> to vector<8x1xf32>
    %cst_126 = arith.constant 0.000000e+00 : f32
    %967 = vector.shape_cast %966 : vector<8x1xf32> to vector<8x1xf32>
    %968 = vector.broadcast %967 : vector<8x1xf32> to vector<8x80xf32>
    %969 = vector.broadcast %cst_126 : f32 to vector<8x80xf32>
    %970 = arith.select %965, %968, %969 : vector<8x80xi1>, vector<8x80xf32>
    %971 = arith.addf %962, %970 : vector<8x80xf32>
    %972 = vector.extract_strided_slice %4 {offsets = [0, 105], sizes = [8, 1], strides = [1, 1]} : vector<8x128xi32> to vector<8x1xi32>
    %973 = vector.broadcast %972 : vector<8x1xi32> to vector<8x80xi32>
    %974 = arith.cmpi eq, %973, %10 : vector<8x80xi32>
    %975 = vector.extract_strided_slice %6 {offsets = [0, 105], sizes = [8, 1], strides = [1, 1]} : vector<8x128xf32> to vector<8x1xf32>
    %cst_127 = arith.constant 0.000000e+00 : f32
    %976 = vector.shape_cast %975 : vector<8x1xf32> to vector<8x1xf32>
    %977 = vector.broadcast %976 : vector<8x1xf32> to vector<8x80xf32>
    %978 = vector.broadcast %cst_127 : f32 to vector<8x80xf32>
    %979 = arith.select %974, %977, %978 : vector<8x80xi1>, vector<8x80xf32>
    %980 = arith.addf %971, %979 : vector<8x80xf32>
    %981 = vector.extract_strided_slice %4 {offsets = [0, 106], sizes = [8, 1], strides = [1, 1]} : vector<8x128xi32> to vector<8x1xi32>
    %982 = vector.broadcast %981 : vector<8x1xi32> to vector<8x80xi32>
    %983 = arith.cmpi eq, %982, %10 : vector<8x80xi32>
    %984 = vector.extract_strided_slice %6 {offsets = [0, 106], sizes = [8, 1], strides = [1, 1]} : vector<8x128xf32> to vector<8x1xf32>
    %cst_128 = arith.constant 0.000000e+00 : f32
    %985 = vector.shape_cast %984 : vector<8x1xf32> to vector<8x1xf32>
    %986 = vector.broadcast %985 : vector<8x1xf32> to vector<8x80xf32>
    %987 = vector.broadcast %cst_128 : f32 to vector<8x80xf32>
    %988 = arith.select %983, %986, %987 : vector<8x80xi1>, vector<8x80xf32>
    %989 = arith.addf %980, %988 : vector<8x80xf32>
    %990 = vector.extract_strided_slice %4 {offsets = [0, 107], sizes = [8, 1], strides = [1, 1]} : vector<8x128xi32> to vector<8x1xi32>
    %991 = vector.broadcast %990 : vector<8x1xi32> to vector<8x80xi32>
    %992 = arith.cmpi eq, %991, %10 : vector<8x80xi32>
    %993 = vector.extract_strided_slice %6 {offsets = [0, 107], sizes = [8, 1], strides = [1, 1]} : vector<8x128xf32> to vector<8x1xf32>
    %cst_129 = arith.constant 0.000000e+00 : f32
    %994 = vector.shape_cast %993 : vector<8x1xf32> to vector<8x1xf32>
    %995 = vector.broadcast %994 : vector<8x1xf32> to vector<8x80xf32>
    %996 = vector.broadcast %cst_129 : f32 to vector<8x80xf32>
    %997 = arith.select %992, %995, %996 : vector<8x80xi1>, vector<8x80xf32>
    %998 = arith.addf %989, %997 : vector<8x80xf32>
    %999 = vector.extract_strided_slice %4 {offsets = [0, 108], sizes = [8, 1], strides = [1, 1]} : vector<8x128xi32> to vector<8x1xi32>
    %1000 = vector.broadcast %999 : vector<8x1xi32> to vector<8x80xi32>
    %1001 = arith.cmpi eq, %1000, %10 : vector<8x80xi32>
    %1002 = vector.extract_strided_slice %6 {offsets = [0, 108], sizes = [8, 1], strides = [1, 1]} : vector<8x128xf32> to vector<8x1xf32>
    %cst_130 = arith.constant 0.000000e+00 : f32
    %1003 = vector.shape_cast %1002 : vector<8x1xf32> to vector<8x1xf32>
    %1004 = vector.broadcast %1003 : vector<8x1xf32> to vector<8x80xf32>
    %1005 = vector.broadcast %cst_130 : f32 to vector<8x80xf32>
    %1006 = arith.select %1001, %1004, %1005 : vector<8x80xi1>, vector<8x80xf32>
    %1007 = arith.addf %998, %1006 : vector<8x80xf32>
    %1008 = vector.extract_strided_slice %4 {offsets = [0, 109], sizes = [8, 1], strides = [1, 1]} : vector<8x128xi32> to vector<8x1xi32>
    %1009 = vector.broadcast %1008 : vector<8x1xi32> to vector<8x80xi32>
    %1010 = arith.cmpi eq, %1009, %10 : vector<8x80xi32>
    %1011 = vector.extract_strided_slice %6 {offsets = [0, 109], sizes = [8, 1], strides = [1, 1]} : vector<8x128xf32> to vector<8x1xf32>
    %cst_131 = arith.constant 0.000000e+00 : f32
    %1012 = vector.shape_cast %1011 : vector<8x1xf32> to vector<8x1xf32>
    %1013 = vector.broadcast %1012 : vector<8x1xf32> to vector<8x80xf32>
    %1014 = vector.broadcast %cst_131 : f32 to vector<8x80xf32>
    %1015 = arith.select %1010, %1013, %1014 : vector<8x80xi1>, vector<8x80xf32>
    %1016 = arith.addf %1007, %1015 : vector<8x80xf32>
    %1017 = vector.extract_strided_slice %4 {offsets = [0, 110], sizes = [8, 1], strides = [1, 1]} : vector<8x128xi32> to vector<8x1xi32>
    %1018 = vector.broadcast %1017 : vector<8x1xi32> to vector<8x80xi32>
    %1019 = arith.cmpi eq, %1018, %10 : vector<8x80xi32>
    %1020 = vector.extract_strided_slice %6 {offsets = [0, 110], sizes = [8, 1], strides = [1, 1]} : vector<8x128xf32> to vector<8x1xf32>
    %cst_132 = arith.constant 0.000000e+00 : f32
    %1021 = vector.shape_cast %1020 : vector<8x1xf32> to vector<8x1xf32>
    %1022 = vector.broadcast %1021 : vector<8x1xf32> to vector<8x80xf32>
    %1023 = vector.broadcast %cst_132 : f32 to vector<8x80xf32>
    %1024 = arith.select %1019, %1022, %1023 : vector<8x80xi1>, vector<8x80xf32>
    %1025 = arith.addf %1016, %1024 : vector<8x80xf32>
    %1026 = vector.extract_strided_slice %4 {offsets = [0, 111], sizes = [8, 1], strides = [1, 1]} : vector<8x128xi32> to vector<8x1xi32>
    %1027 = vector.broadcast %1026 : vector<8x1xi32> to vector<8x80xi32>
    %1028 = arith.cmpi eq, %1027, %10 : vector<8x80xi32>
    %1029 = vector.extract_strided_slice %6 {offsets = [0, 111], sizes = [8, 1], strides = [1, 1]} : vector<8x128xf32> to vector<8x1xf32>
    %cst_133 = arith.constant 0.000000e+00 : f32
    %1030 = vector.shape_cast %1029 : vector<8x1xf32> to vector<8x1xf32>
    %1031 = vector.broadcast %1030 : vector<8x1xf32> to vector<8x80xf32>
    %1032 = vector.broadcast %cst_133 : f32 to vector<8x80xf32>
    %1033 = arith.select %1028, %1031, %1032 : vector<8x80xi1>, vector<8x80xf32>
    %1034 = arith.addf %1025, %1033 : vector<8x80xf32>
    %1035 = vector.extract_strided_slice %4 {offsets = [0, 112], sizes = [8, 1], strides = [1, 1]} : vector<8x128xi32> to vector<8x1xi32>
    %1036 = vector.broadcast %1035 : vector<8x1xi32> to vector<8x80xi32>
    %1037 = arith.cmpi eq, %1036, %10 : vector<8x80xi32>
    %1038 = vector.extract_strided_slice %6 {offsets = [0, 112], sizes = [8, 1], strides = [1, 1]} : vector<8x128xf32> to vector<8x1xf32>
    %cst_134 = arith.constant 0.000000e+00 : f32
    %1039 = vector.shape_cast %1038 : vector<8x1xf32> to vector<8x1xf32>
    %1040 = vector.broadcast %1039 : vector<8x1xf32> to vector<8x80xf32>
    %1041 = vector.broadcast %cst_134 : f32 to vector<8x80xf32>
    %1042 = arith.select %1037, %1040, %1041 : vector<8x80xi1>, vector<8x80xf32>
    %1043 = arith.addf %1034, %1042 : vector<8x80xf32>
    %1044 = vector.extract_strided_slice %4 {offsets = [0, 113], sizes = [8, 1], strides = [1, 1]} : vector<8x128xi32> to vector<8x1xi32>
    %1045 = vector.broadcast %1044 : vector<8x1xi32> to vector<8x80xi32>
    %1046 = arith.cmpi eq, %1045, %10 : vector<8x80xi32>
    %1047 = vector.extract_strided_slice %6 {offsets = [0, 113], sizes = [8, 1], strides = [1, 1]} : vector<8x128xf32> to vector<8x1xf32>
    %cst_135 = arith.constant 0.000000e+00 : f32
    %1048 = vector.shape_cast %1047 : vector<8x1xf32> to vector<8x1xf32>
    %1049 = vector.broadcast %1048 : vector<8x1xf32> to vector<8x80xf32>
    %1050 = vector.broadcast %cst_135 : f32 to vector<8x80xf32>
    %1051 = arith.select %1046, %1049, %1050 : vector<8x80xi1>, vector<8x80xf32>
    %1052 = arith.addf %1043, %1051 : vector<8x80xf32>
    %1053 = vector.extract_strided_slice %4 {offsets = [0, 114], sizes = [8, 1], strides = [1, 1]} : vector<8x128xi32> to vector<8x1xi32>
    %1054 = vector.broadcast %1053 : vector<8x1xi32> to vector<8x80xi32>
    %1055 = arith.cmpi eq, %1054, %10 : vector<8x80xi32>
    %1056 = vector.extract_strided_slice %6 {offsets = [0, 114], sizes = [8, 1], strides = [1, 1]} : vector<8x128xf32> to vector<8x1xf32>
    %cst_136 = arith.constant 0.000000e+00 : f32
    %1057 = vector.shape_cast %1056 : vector<8x1xf32> to vector<8x1xf32>
    %1058 = vector.broadcast %1057 : vector<8x1xf32> to vector<8x80xf32>
    %1059 = vector.broadcast %cst_136 : f32 to vector<8x80xf32>
    %1060 = arith.select %1055, %1058, %1059 : vector<8x80xi1>, vector<8x80xf32>
    %1061 = arith.addf %1052, %1060 : vector<8x80xf32>
    %1062 = vector.extract_strided_slice %4 {offsets = [0, 115], sizes = [8, 1], strides = [1, 1]} : vector<8x128xi32> to vector<8x1xi32>
    %1063 = vector.broadcast %1062 : vector<8x1xi32> to vector<8x80xi32>
    %1064 = arith.cmpi eq, %1063, %10 : vector<8x80xi32>
    %1065 = vector.extract_strided_slice %6 {offsets = [0, 115], sizes = [8, 1], strides = [1, 1]} : vector<8x128xf32> to vector<8x1xf32>
    %cst_137 = arith.constant 0.000000e+00 : f32
    %1066 = vector.shape_cast %1065 : vector<8x1xf32> to vector<8x1xf32>
    %1067 = vector.broadcast %1066 : vector<8x1xf32> to vector<8x80xf32>
    %1068 = vector.broadcast %cst_137 : f32 to vector<8x80xf32>
    %1069 = arith.select %1064, %1067, %1068 : vector<8x80xi1>, vector<8x80xf32>
    %1070 = arith.addf %1061, %1069 : vector<8x80xf32>
    %1071 = vector.extract_strided_slice %4 {offsets = [0, 116], sizes = [8, 1], strides = [1, 1]} : vector<8x128xi32> to vector<8x1xi32>
    %1072 = vector.broadcast %1071 : vector<8x1xi32> to vector<8x80xi32>
    %1073 = arith.cmpi eq, %1072, %10 : vector<8x80xi32>
    %1074 = vector.extract_strided_slice %6 {offsets = [0, 116], sizes = [8, 1], strides = [1, 1]} : vector<8x128xf32> to vector<8x1xf32>
    %cst_138 = arith.constant 0.000000e+00 : f32
    %1075 = vector.shape_cast %1074 : vector<8x1xf32> to vector<8x1xf32>
    %1076 = vector.broadcast %1075 : vector<8x1xf32> to vector<8x80xf32>
    %1077 = vector.broadcast %cst_138 : f32 to vector<8x80xf32>
    %1078 = arith.select %1073, %1076, %1077 : vector<8x80xi1>, vector<8x80xf32>
    %1079 = arith.addf %1070, %1078 : vector<8x80xf32>
    %1080 = vector.extract_strided_slice %4 {offsets = [0, 117], sizes = [8, 1], strides = [1, 1]} : vector<8x128xi32> to vector<8x1xi32>
    %1081 = vector.broadcast %1080 : vector<8x1xi32> to vector<8x80xi32>
    %1082 = arith.cmpi eq, %1081, %10 : vector<8x80xi32>
    %1083 = vector.extract_strided_slice %6 {offsets = [0, 117], sizes = [8, 1], strides = [1, 1]} : vector<8x128xf32> to vector<8x1xf32>
    %cst_139 = arith.constant 0.000000e+00 : f32
    %1084 = vector.shape_cast %1083 : vector<8x1xf32> to vector<8x1xf32>
    %1085 = vector.broadcast %1084 : vector<8x1xf32> to vector<8x80xf32>
    %1086 = vector.broadcast %cst_139 : f32 to vector<8x80xf32>
    %1087 = arith.select %1082, %1085, %1086 : vector<8x80xi1>, vector<8x80xf32>
    %1088 = arith.addf %1079, %1087 : vector<8x80xf32>
    %1089 = vector.extract_strided_slice %4 {offsets = [0, 118], sizes = [8, 1], strides = [1, 1]} : vector<8x128xi32> to vector<8x1xi32>
    %1090 = vector.broadcast %1089 : vector<8x1xi32> to vector<8x80xi32>
    %1091 = arith.cmpi eq, %1090, %10 : vector<8x80xi32>
    %1092 = vector.extract_strided_slice %6 {offsets = [0, 118], sizes = [8, 1], strides = [1, 1]} : vector<8x128xf32> to vector<8x1xf32>
    %cst_140 = arith.constant 0.000000e+00 : f32
    %1093 = vector.shape_cast %1092 : vector<8x1xf32> to vector<8x1xf32>
    %1094 = vector.broadcast %1093 : vector<8x1xf32> to vector<8x80xf32>
    %1095 = vector.broadcast %cst_140 : f32 to vector<8x80xf32>
    %1096 = arith.select %1091, %1094, %1095 : vector<8x80xi1>, vector<8x80xf32>
    %1097 = arith.addf %1088, %1096 : vector<8x80xf32>
    %1098 = vector.extract_strided_slice %4 {offsets = [0, 119], sizes = [8, 1], strides = [1, 1]} : vector<8x128xi32> to vector<8x1xi32>
    %1099 = vector.broadcast %1098 : vector<8x1xi32> to vector<8x80xi32>
    %1100 = arith.cmpi eq, %1099, %10 : vector<8x80xi32>
    %1101 = vector.extract_strided_slice %6 {offsets = [0, 119], sizes = [8, 1], strides = [1, 1]} : vector<8x128xf32> to vector<8x1xf32>
    %cst_141 = arith.constant 0.000000e+00 : f32
    %1102 = vector.shape_cast %1101 : vector<8x1xf32> to vector<8x1xf32>
    %1103 = vector.broadcast %1102 : vector<8x1xf32> to vector<8x80xf32>
    %1104 = vector.broadcast %cst_141 : f32 to vector<8x80xf32>
    %1105 = arith.select %1100, %1103, %1104 : vector<8x80xi1>, vector<8x80xf32>
    %1106 = arith.addf %1097, %1105 : vector<8x80xf32>
    %1107 = vector.extract_strided_slice %4 {offsets = [0, 120], sizes = [8, 1], strides = [1, 1]} : vector<8x128xi32> to vector<8x1xi32>
    %1108 = vector.broadcast %1107 : vector<8x1xi32> to vector<8x80xi32>
    %1109 = arith.cmpi eq, %1108, %10 : vector<8x80xi32>
    %1110 = vector.extract_strided_slice %6 {offsets = [0, 120], sizes = [8, 1], strides = [1, 1]} : vector<8x128xf32> to vector<8x1xf32>
    %cst_142 = arith.constant 0.000000e+00 : f32
    %1111 = vector.shape_cast %1110 : vector<8x1xf32> to vector<8x1xf32>
    %1112 = vector.broadcast %1111 : vector<8x1xf32> to vector<8x80xf32>
    %1113 = vector.broadcast %cst_142 : f32 to vector<8x80xf32>
    %1114 = arith.select %1109, %1112, %1113 : vector<8x80xi1>, vector<8x80xf32>
    %1115 = arith.addf %1106, %1114 : vector<8x80xf32>
    %1116 = vector.extract_strided_slice %4 {offsets = [0, 121], sizes = [8, 1], strides = [1, 1]} : vector<8x128xi32> to vector<8x1xi32>
    %1117 = vector.broadcast %1116 : vector<8x1xi32> to vector<8x80xi32>
    %1118 = arith.cmpi eq, %1117, %10 : vector<8x80xi32>
    %1119 = vector.extract_strided_slice %6 {offsets = [0, 121], sizes = [8, 1], strides = [1, 1]} : vector<8x128xf32> to vector<8x1xf32>
    %cst_143 = arith.constant 0.000000e+00 : f32
    %1120 = vector.shape_cast %1119 : vector<8x1xf32> to vector<8x1xf32>
    %1121 = vector.broadcast %1120 : vector<8x1xf32> to vector<8x80xf32>
    %1122 = vector.broadcast %cst_143 : f32 to vector<8x80xf32>
    %1123 = arith.select %1118, %1121, %1122 : vector<8x80xi1>, vector<8x80xf32>
    %1124 = arith.addf %1115, %1123 : vector<8x80xf32>
    %1125 = vector.extract_strided_slice %4 {offsets = [0, 122], sizes = [8, 1], strides = [1, 1]} : vector<8x128xi32> to vector<8x1xi32>
    %1126 = vector.broadcast %1125 : vector<8x1xi32> to vector<8x80xi32>
    %1127 = arith.cmpi eq, %1126, %10 : vector<8x80xi32>
    %1128 = vector.extract_strided_slice %6 {offsets = [0, 122], sizes = [8, 1], strides = [1, 1]} : vector<8x128xf32> to vector<8x1xf32>
    %cst_144 = arith.constant 0.000000e+00 : f32
    %1129 = vector.shape_cast %1128 : vector<8x1xf32> to vector<8x1xf32>
    %1130 = vector.broadcast %1129 : vector<8x1xf32> to vector<8x80xf32>
    %1131 = vector.broadcast %cst_144 : f32 to vector<8x80xf32>
    %1132 = arith.select %1127, %1130, %1131 : vector<8x80xi1>, vector<8x80xf32>
    %1133 = arith.addf %1124, %1132 : vector<8x80xf32>
    %1134 = vector.extract_strided_slice %4 {offsets = [0, 123], sizes = [8, 1], strides = [1, 1]} : vector<8x128xi32> to vector<8x1xi32>
    %1135 = vector.broadcast %1134 : vector<8x1xi32> to vector<8x80xi32>
    %1136 = arith.cmpi eq, %1135, %10 : vector<8x80xi32>
    %1137 = vector.extract_strided_slice %6 {offsets = [0, 123], sizes = [8, 1], strides = [1, 1]} : vector<8x128xf32> to vector<8x1xf32>
    %cst_145 = arith.constant 0.000000e+00 : f32
    %1138 = vector.shape_cast %1137 : vector<8x1xf32> to vector<8x1xf32>
    %1139 = vector.broadcast %1138 : vector<8x1xf32> to vector<8x80xf32>
    %1140 = vector.broadcast %cst_145 : f32 to vector<8x80xf32>
    %1141 = arith.select %1136, %1139, %1140 : vector<8x80xi1>, vector<8x80xf32>
    %1142 = arith.addf %1133, %1141 : vector<8x80xf32>
    %1143 = vector.extract_strided_slice %4 {offsets = [0, 124], sizes = [8, 1], strides = [1, 1]} : vector<8x128xi32> to vector<8x1xi32>
    %1144 = vector.broadcast %1143 : vector<8x1xi32> to vector<8x80xi32>
    %1145 = arith.cmpi eq, %1144, %10 : vector<8x80xi32>
    %1146 = vector.extract_strided_slice %6 {offsets = [0, 124], sizes = [8, 1], strides = [1, 1]} : vector<8x128xf32> to vector<8x1xf32>
    %cst_146 = arith.constant 0.000000e+00 : f32
    %1147 = vector.shape_cast %1146 : vector<8x1xf32> to vector<8x1xf32>
    %1148 = vector.broadcast %1147 : vector<8x1xf32> to vector<8x80xf32>
    %1149 = vector.broadcast %cst_146 : f32 to vector<8x80xf32>
    %1150 = arith.select %1145, %1148, %1149 : vector<8x80xi1>, vector<8x80xf32>
    %1151 = arith.addf %1142, %1150 : vector<8x80xf32>
    %1152 = vector.extract_strided_slice %4 {offsets = [0, 125], sizes = [8, 1], strides = [1, 1]} : vector<8x128xi32> to vector<8x1xi32>
    %1153 = vector.broadcast %1152 : vector<8x1xi32> to vector<8x80xi32>
    %1154 = arith.cmpi eq, %1153, %10 : vector<8x80xi32>
    %1155 = vector.extract_strided_slice %6 {offsets = [0, 125], sizes = [8, 1], strides = [1, 1]} : vector<8x128xf32> to vector<8x1xf32>
    %cst_147 = arith.constant 0.000000e+00 : f32
    %1156 = vector.shape_cast %1155 : vector<8x1xf32> to vector<8x1xf32>
    %1157 = vector.broadcast %1156 : vector<8x1xf32> to vector<8x80xf32>
    %1158 = vector.broadcast %cst_147 : f32 to vector<8x80xf32>
    %1159 = arith.select %1154, %1157, %1158 : vector<8x80xi1>, vector<8x80xf32>
    %1160 = arith.addf %1151, %1159 : vector<8x80xf32>
    %1161 = vector.extract_strided_slice %4 {offsets = [0, 126], sizes = [8, 1], strides = [1, 1]} : vector<8x128xi32> to vector<8x1xi32>
    %1162 = vector.broadcast %1161 : vector<8x1xi32> to vector<8x80xi32>
    %1163 = arith.cmpi eq, %1162, %10 : vector<8x80xi32>
    %1164 = vector.extract_strided_slice %6 {offsets = [0, 126], sizes = [8, 1], strides = [1, 1]} : vector<8x128xf32> to vector<8x1xf32>
    %cst_148 = arith.constant 0.000000e+00 : f32
    %1165 = vector.shape_cast %1164 : vector<8x1xf32> to vector<8x1xf32>
    %1166 = vector.broadcast %1165 : vector<8x1xf32> to vector<8x80xf32>
    %1167 = vector.broadcast %cst_148 : f32 to vector<8x80xf32>
    %1168 = arith.select %1163, %1166, %1167 : vector<8x80xi1>, vector<8x80xf32>
    %1169 = arith.addf %1160, %1168 : vector<8x80xf32>
    %1170 = vector.extract_strided_slice %4 {offsets = [0, 127], sizes = [8, 1], strides = [1, 1]} : vector<8x128xi32> to vector<8x1xi32>
    %1171 = vector.broadcast %1170 : vector<8x1xi32> to vector<8x80xi32>
    %1172 = arith.cmpi eq, %1171, %10 : vector<8x80xi32>
    %1173 = vector.extract_strided_slice %6 {offsets = [0, 127], sizes = [8, 1], strides = [1, 1]} : vector<8x128xf32> to vector<8x1xf32>
    %cst_149 = arith.constant 0.000000e+00 : f32
    %1174 = vector.shape_cast %1173 : vector<8x1xf32> to vector<8x1xf32>
    %1175 = vector.broadcast %1174 : vector<8x1xf32> to vector<8x80xf32>
    %1176 = vector.broadcast %cst_149 : f32 to vector<8x80xf32>
    %1177 = arith.select %1172, %1175, %1176 : vector<8x80xi1>, vector<8x80xf32>
    %1178 = arith.addf %1169, %1177 : vector<8x80xf32>
    %c0_150 = arith.constant 0 : index
    %c3 = arith.constant 3 : index
    %c0_151 = arith.constant 0 : index
    %c0_152 = arith.constant 0 : index
    %1179 = vector.load %arg5[%c0_150, %c3, %c0_151, %c0_152] : memref<1x4x80x8xbf16, #tpu.memory_space<vmem>>, vector<1x1x80x8xbf16>
    %1180 = vector.shape_cast %1179 : vector<1x1x80x8xbf16> to vector<80x8xbf16>
    %1181 = arith.truncf %1178 : vector<8x80xf32> to vector<8x80xbf16>
    %cst_153 = arith.constant dense<0.000000e+00> : vector<8x8xf32>
    %1182 = tpu.matmul %1181, %1180, %cst_153 {dimension_numbers = #tpu.dot_dimension_numbers<[1], [0], [0], [1], [0, 0, 1, 1], [], []>} : vector<8x80xbf16>, vector<80x8xbf16>, vector<8x8xf32> -> vector<8x8xf32>
    %c0_154 = arith.constant 0 : index
    %c0_155 = arith.constant 0 : index
    %1183 = vector.load %arg7[%c0_154, %c0_155] : memref<8x32xf32, #tpu.memory_space<vmem>>, vector<8x32xf32>
    %1184 = tpu.concatenate %303, %596, %889, %1182 in 1 : vector<8x8xf32>, vector<8x8xf32>, vector<8x8xf32>, vector<8x8xf32> -> vector<8x32xf32>
    %1185 = arith.addf %1183, %1184 : vector<8x32xf32>
    %c0_156 = arith.constant 0 : index
    %c0_157 = arith.constant 0 : index
    %1186 = vector.load %arg7[%c0_156, %c0_157] : memref<8x32xf32, #tpu.memory_space<vmem>>, vector<8x32xf32>
    tpu.vector_store %arg7[%c0_156, %c0_157], %1185 {strides = array<i32>} : memref<8x32xf32, #tpu.memory_space<vmem>>, vector<8x32xf32>,
    %c0_i32_158 = arith.constant 0 : i32
    %1187 = arith.cmpi eq, %arg2, %c0_i32_158 : i32
    %1188 = arith.extui %1187 : i1 to i32
    %c0_i32_159 = arith.constant 0 : i32
    %1189 = arith.cmpi ne, %1188, %c0_i32_159 : i32
    scf.if %1189 {
      %c0_160 = arith.constant 0 : index
      %c0_161 = arith.constant 0 : index
      %1190 = vector.load %arg7[%c0_160, %c0_161] : memref<8x32xf32, #tpu.memory_space<vmem>>, vector<8x32xf32>
      %c0_162 = arith.constant 0 : index
      %c0_163 = arith.constant 0 : index
      %c0_164 = arith.constant 0 : index
      %1191 = vector.load %arg6[%c0_162, %c0_163, %c0_164] : memref<1x8x32xf32, #tpu.memory_space<vmem>>, vector<1x8x32xf32>
      %1192 = vector.shape_cast %1191 : vector<1x8x32xf32> to vector<8x32xf32>
      %1193 = vector.shape_cast %1190 : vector<8x32xf32> to vector<1x8x32xf32>
      tpu.vector_store %arg6[%c0_162, %c0_163, %c0_164], %1193 {strides = array<i32>} : memref<1x8x32xf32, #tpu.memory_space<vmem>>, vector<1x8x32xf32>,
    } else {
    }
    return
  }
  func.func @transform_0(%arg0: i32, %arg1: i32, %arg2: i32) -> (i32, i32, i32) {
    %c0_i32 = arith.constant 0 : i32
    %c0_i32_0 = arith.constant 0 : i32
    return %arg0, %arg1, %c0_i32 : i32, i32, i32
  }
  func.func @transform_1(%arg0: i32, %arg1: i32, %arg2: i32) -> (i32, i32, i32) {
    %c0_i32 = arith.constant 0 : i32
    %c0_i32_0 = arith.constant 0 : i32
    return %arg0, %arg1, %c0_i32 : i32, i32, i32
  }
  func.func @transform_2(%arg0: i32, %arg1: i32, %arg2: i32) -> (i32, i32, i32, i32) {
    %c0_i32 = arith.constant 0 : i32
    %c0_i32_0 = arith.constant 0 : i32
    %c0_i32_1 = arith.constant 0 : i32
    return %arg0, %c0_i32, %arg2, %c0_i32_0 : i32, i32, i32, i32
  }
  func.func @transform_3(%arg0: i32, %arg1: i32, %arg2: i32) -> (i32, i32, i32) {
    %c0_i32 = arith.constant 0 : i32
    %c0_i32_0 = arith.constant 0 : i32
    return %arg0, %arg1, %c0_i32 : i32, i32, i32
  }
}

module attributes {stable_mosaic.version = 11 : i64} {
  func.func @_linear_kernel(%arg0: i32, %arg1: memref<16x64xf32, #tpu.memory_space<vmem>>, %arg2: memref<64x32xf32, #tpu.memory_space<vmem>>, %arg3: memref<1x32xf32, #tpu.memory_space<vmem>>, %arg4: memref<16x32xf32, #tpu.memory_space<vmem>>) attributes {dimension_semantics = [#tpu.dimension_semantics<parallel>], iteration_bounds = array<i64: 1>, scalar_prefetch = 0 : i64, scratch_operands = 0 : i64, tpu.core_type = #tpu.core_type<tc>, window_params = [{transform_indices = @transform_0, window_bounds = array<i64: 16, 64>}, {pipeline_mode = #tpu.pipeline_mode<synchronous>, transform_indices = @transform_1, window_bounds = array<i64: 64, 32>}, {pipeline_mode = #tpu.pipeline_mode<synchronous>, transform_indices = @transform_2, window_bounds = array<i64: 1, 32>}, {transform_indices = @transform_3, window_bounds = array<i64: 16, 32>}]} {
    %c0 = arith.constant 0 : index
    %c0_0 = arith.constant 0 : index
    %0 = vector.load %arg1[%c0, %c0_0] : memref<16x64xf32, #tpu.memory_space<vmem>>, vector<16x64xf32>
    %c0_1 = arith.constant 0 : index
    %c0_2 = arith.constant 0 : index
    %1 = vector.load %arg2[%c0_1, %c0_2] : memref<64x32xf32, #tpu.memory_space<vmem>>, vector<64x32xf32>
    %cst = arith.constant dense<0.000000e+00> : vector<16x32xf32>
    %2 = tpu.matmul %0, %1, %cst {dimension_numbers = #tpu.dot_dimension_numbers<[1], [0], [0], [1], [0, 0, 1, 1], [], []>} : vector<16x64xf32>, vector<64x32xf32>, vector<16x32xf32> -> vector<16x32xf32>
    %c0_3 = arith.constant 0 : index
    %c0_4 = arith.constant 0 : index
    %3 = vector.load %arg3[%c0_3, %c0_4] : memref<1x32xf32, #tpu.memory_space<vmem>>, vector<1x32xf32>
    %4 = vector.broadcast %3 : vector<1x32xf32> to vector<16x32xf32>
    %5 = arith.addf %2, %4 : vector<16x32xf32>
    %c0_5 = arith.constant 0 : index
    %c0_6 = arith.constant 0 : index
    %6 = vector.load %arg4[%c0_5, %c0_6] : memref<16x32xf32, #tpu.memory_space<vmem>>, vector<16x32xf32>
    tpu.vector_store %arg4[%c0_5, %c0_6], %5 {strides = array<i32>} : memref<16x32xf32, #tpu.memory_space<vmem>>, vector<16x32xf32>,
    return
  }
  func.func @transform_0(%arg0: i32) -> (i32, i32) {
    %c0_i32 = arith.constant 0 : i32
    %c0_i32_0 = arith.constant 0 : i32
    return %arg0, %c0_i32 : i32, i32
  }
  func.func @transform_1(%arg0: i32) -> (i32, i32) {
    %c0_i32 = arith.constant 0 : i32
    %c0_i32_0 = arith.constant 0 : i32
    %c0_i32_1 = arith.constant 0 : i32
    return %c0_i32, %c0_i32_0 : i32, i32
  }
  func.func @transform_2(%arg0: i32) -> (i32, i32) {
    %c0_i32 = arith.constant 0 : i32
    %c0_i32_0 = arith.constant 0 : i32
    %c0_i32_1 = arith.constant 0 : i32
    return %c0_i32, %c0_i32_0 : i32, i32
  }
  func.func @transform_3(%arg0: i32) -> (i32, i32) {
    %c0_i32 = arith.constant 0 : i32
    %c0_i32_0 = arith.constant 0 : i32
    return %arg0, %c0_i32 : i32, i32
  }
}

</mosaic_0001>

<llo_original>
// kernel: run.8
$region0: #{run.8}
  #allocation0 [shape = 'u32[]', space=smem, size = 0x4, offset = 0x4, fixed_abs, tag = 'smem constant byte address 0x4 - core index']
  #allocation1 [shape = 'u32[144,128]{1,0:T(1,128)}', space=vmem, size = 0x12000, scoped, tag = 'internal scratch']
  %s0 = inlined_call_operand.vmem [shape: f32[32,32], index: 0, kind: input, shape index: {}]
  %s1 = inlined_call_operand.vmem [shape: f32[32,32], index: 1, kind: input, shape index: {}]
  %s2 = inlined_call_operand.vmem [shape: f32[1,32], index: 2, kind: input, shape index: {}]
  %s3 = inlined_call_operand.vmem [shape: f32[32,32], index: 3, kind: output, shape index: {}]
  %s4 = sld [smem:[#allocation0]]
  $region22: #{run.8} parent=0
    _
  %s6 = ssub.s32 1, %s4
  %s7 = scalar_select 0, %s6, %s4
  // Predicated region
  $region2: #{run.8} parent=0 // pred_check
    _
  $region3: #{run.8} parent=0 // pred_check_branch
    %9 = sbr.rel (0) target = $region5
  $region4: #{run.8} parent=0 // pred_region
    _
  $region5: #{run.8} parent=0 // pred_fallthru
    _
  // Predicated region
  $region6: #{run.8} parent=0 // pred_check
    _
  $region7: #{run.8} parent=0 // pred_check_branch
    %11 = sbr.rel (0) target = $region9
  $region8: #{run.8} parent=0 // pred_region
    _
  $region9: #{run.8} parent=0 // pred_fallthru
    _
  // Predicated region
  $region10: #{run.8} parent=0 // pred_check
    _
  $region11: #{run.8} parent=0 // pred_check_branch
    %13 = sbr.rel (0) target = $region13
  $region12: #{run.8} parent=0 // pred_region
    _
  $region13: #{run.8} parent=0 // pred_fallthru
    _
  %v14 = vld [vmem:[%s0] sm:$0xff]
  %v15 = vld [vmem:[%s0 + $0x8] sm:$0xff]
  %v16 = vld [vmem:[%s0 + $0x10] sm:$0xff]
  %v17 = vld [vmem:[%s0 + $0x18] sm:$0xff]
  %v18 = vld [vmem:[%s1] sm:$0xff]
  %v19 = vld [vmem:[%s1 + $0x8] sm:$0xff]
  %v20 = vld [vmem:[%s1 + $0x10] sm:$0xff]
  %v21 = vld [vmem:[%s1 + $0x18] sm:$0xff]
  %v22 = vld [vmem:[%s2] sm:$0x1]
  %v24 = vlaneseq
  %v25 = vshrl.u32 %v24, 7
  %v26 = vsub.s32 0, %v25
  %v27 = vrot.slane %v22, %v26
  %vm29 = vcmask 261120
  %v31 = vsel %vm29, %v14, 0
  %v34 = vsel %vm29, %v15, 0
  %v37 = vsel %vm29, %v16, 0
  %v40 = vsel %vm29, %v17, 0
  %42 = vmatprep.subr.mxu0 0.0
  %43 = vmatpush1.msra.mxu0 %v18
  %44 = vmatprep.subr.mxu0 0.0
  %45 = vmatpush1.msra.mxu0 %v19
  %46 = vmatprep.subr.mxu0 0.0
  %47 = vmatpush1.msra.mxu0 %v20
  %48 = vmatprep.subr.mxu0 0.0
  %49 = vmatpush1.msra.mxu0 %v21
  %50 = vmatprep.subr.mxu0 0.0
  %51 = vmatpush1.msra.mxu0 0.0
  %52 = vmatprep.subr.mxu0 0.0
  %53 = vmatpush1.msra.mxu0 0.0
  %54 = vmatprep.subr.mxu0 0.0
  %55 = vmatpush1.msra.mxu0 0.0
  %56 = vmatprep.subr.mxu0 0.0
  %57 = vmatpush1.msra.mxu0 0.0
  %58 = vmatprep.subr.mxu0 0.0
  %59 = vmatpush1.msra.mxu0 0.0
  %60 = vmatprep.subr.mxu0 0.0
  %61 = vmatpush1.msra.mxu0 0.0
  %62 = vmatprep.subr.mxu0 0.0
  %63 = vmatpush1.msra.mxu0 0.0
  %64 = vmatprep.subr.mxu0 0.0
  %65 = vmatpush1.msra.mxu0 0.0
  %66 = vmatprep.subr.mxu0 0.0
  %67 = vmatpush1.msra.mxu0 0.0
  %68 = vmatprep.subr.mxu0 0.0
  %69 = vmatpush1.msra.mxu0 0.0
  %70 = vmatprep.subr.mxu0 0.0
  %71 = vmatpush1.msra.mxu0 0.0
  %72 = vmatprep.subr.mxu0 0.0
  %73 = vmatpush1.msra.mxu0 0.0
  %74 = vmatprep.subr.mxu0 0.0
  %75 = vmatpush1.msra.mxu0 0.0
  %76 = vmatprep.subr.mxu0 0.0
  %77 = vmatpush1.msra.mxu0 0.0
  %78 = vmatprep.subr.mxu0 0.0
  %79 = vmatpush1.msra.mxu0 0.0
  %80 = vmatprep.subr.mxu0 0.0
  %81 = vmatpush1.msra.mxu0 0.0
  %82 = vmatprep.subr.mxu0 0.0
  %83 = vmatpush1.msra.mxu0 0.0
  %84 = vmatprep.subr.mxu0 0.0
  %85 = vmatpush1.msra.mxu0 0.0
  %86 = vmatprep.subr.mxu0 0.0
  %87 = vmatpush1.msra.mxu0 0.0
  %88 = vmatprep.subr.mxu0 0.0
  %89 = vmatpush1.msra.mxu0 0.0
  %90 = vmatprep.subr.mxu0 0.0
  %91 = vmatpush1.msra.mxu0 0.0
  %92 = vmatprep.subr.mxu0 0.0
  %93 = vmatpush1.msra.mxu0 0.0
  %94 = vmatprep.subr.mxu0 0.0
  %95 = vmatpush1.msra.mxu0 0.0
  %96 = vmatprep.subr.mxu0 0.0
  %97 = vmatpush1.msra.mxu0 0.0
  %98 = vmatprep.subr.mxu0 0.0
  %99 = vmatpush1.msra.mxu0 0.0
  %100 = vmatprep.subr.mxu0 0.0
  %101 = vmatpush1.msra.mxu0 0.0
  %102 = vmatprep.subr.mxu0 0.0
  %103 = vmatpush1.msra.mxu0 0.0
  %104 = vmatprep.subr.mxu0 0.0
  %105 = vmatpush1.msra.mxu0 0.0
  %106 = vmatprep.mubr.f32.mxu0 0.0
  %107 = vmatmul.mubr.f32.gmra.mrb[0].mxu0 %v31
  %v108 = vpop.f32.mrb[0].mxu0
  %v109 = vadd.f32 %v27, %v108
  %v110 = vpop.f32.mrb[0].mxu0
  %111 = vmatprep.mubr.f32.mxu0 0.0
  %112 = vmatmul.mubr.f32.gmra.mrb[0].mxu0 %v34
  %v113 = vpop.f32.mrb[0].mxu0
  %v114 = vadd.f32 %v27, %v113
  %v115 = vpop.f32.mrb[0].mxu0
  %116 = vmatprep.mubr.f32.mxu0 0.0
  %117 = vmatmul.mubr.f32.gmra.mrb[0].mxu0 %v37
  %v118 = vpop.f32.mrb[0].mxu0
  %v119 = vadd.f32 %v27, %v118
  %v120 = vpop.f32.mrb[0].mxu0
  %121 = vmatprep.mubr.f32.mxu0 0.0
  %122 = vmatmul.mubr.f32.gmra.mrb[0].mxu0 %v40
  %v123 = vpop.f32.mrb[0].mxu0
  %v124 = vadd.f32 %v27, %v123
  %v125 = vpop.f32.mrb[0].mxu0
  %126 = vdwg.mxu0
  %127 = vst.msk [vmem:[%s3] sm:$0xff] %vm29, %v109
  %128 = vst.msk [vmem:[%s3 + $0x8] sm:$0xff] %vm29, %v114
  %129 = vst.msk [vmem:[%s3 + $0x10] sm:$0xff] %vm29, %v119
  %130 = vst.msk [vmem:[%s3 + $0x18] sm:$0xff] %vm29, %v124
  // Predicated region
  $region14: #{run.8} parent=0 // pred_check
    _
  $region15: #{run.8} parent=0 // pred_check_branch
    %132 = sbr.rel (0) target = $region17
  $region16: #{run.8} parent=0 // pred_region
    _
  $region17: #{run.8} parent=0 // pred_fallthru
    _
  // Predicated region
  $region18: #{run.8} parent=0 // pred_check
    _
  $region19: #{run.8} parent=0 // pred_check_branch
    %134 = sbr.rel (0) target = $region21
  $region20: #{run.8} parent=0 // pred_region
    _
  $region21: #{run.8} parent=0 // pred_fallthru
    _

// kernel: run.7
$region0: #{run.7}
  #allocation0 [shape = 'u32[]', space=smem, size = 0x4, offset = 0x4, fixed_abs, tag = 'smem constant byte address 0x4 - core index']
  #allocation1 [shape = 'u32[144,128]{1,0:T(1,128)}', space=vmem, size = 0x12000, scoped, tag = 'internal scratch']
  %s0 = inlined_call_operand.vmem [shape: f32[32,32], index: 0, kind: input, shape index: {}]
  %s1 = inlined_call_operand.vmem [shape: f32[32,64], index: 1, kind: input, shape index: {}]
  %s2 = inlined_call_operand.vmem [shape: f32[1,64], index: 2, kind: input, shape index: {}]
  %s3 = inlined_call_operand.vmem [shape: f32[32,64], index: 3, kind: output, shape index: {}]
  %s4 = sld [smem:[#allocation0]]
  $region22: #{run.7} parent=0
    _
  %s6 = ssub.s32 1, %s4
  %s7 = scalar_select 0, %s6, %s4
  // Predicated region
  $region2: #{run.7} parent=0 // pred_check
    _
  $region3: #{run.7} parent=0 // pred_check_branch
    %9 = sbr.rel (0) target = $region5
  $region4: #{run.7} parent=0 // pred_region
    _
  $region5: #{run.7} parent=0 // pred_fallthru
    _
  // Predicated region
  $region6: #{run.7} parent=0 // pred_check
    _
  $region7: #{run.7} parent=0 // pred_check_branch
    %11 = sbr.rel (0) target = $region9
  $region8: #{run.7} parent=0 // pred_region
    _
  $region9: #{run.7} parent=0 // pred_fallthru
    _
  // Predicated region
  $region10: #{run.7} parent=0 // pred_check
    _
  $region11: #{run.7} parent=0 // pred_check_branch
    %13 = sbr.rel (0) target = $region13
  $region12: #{run.7} parent=0 // pred_region
    _
  $region13: #{run.7} parent=0 // pred_fallthru
    _
  %v14 = vld [vmem:[%s0] sm:$0xff]
  %v15 = vld [vmem:[%s0 + $0x8] sm:$0xff]
  %v16 = vld [vmem:[%s0 + $0x10] sm:$0xff]
  %v17 = vld [vmem:[%s0 + $0x18] sm:$0xff]
  %v18 = vld [vmem:[%s1] sm:$0xff]
  %v19 = vld [vmem:[%s1 + $0x8] sm:$0xff]
  %v20 = vld [vmem:[%s1 + $0x10] sm:$0xff]
  %v21 = vld [vmem:[%s1 + $0x18] sm:$0xff]
  %v22 = vld [vmem:[%s2] sm:$0x1]
  %v24 = vlaneseq
  %v25 = vshrl.u32 %v24, 7
  %v26 = vsub.s32 0, %v25
  %v27 = vrot.slane %v22, %v26
  %vm29 = vcmask 261120
  %v31 = vsel %vm29, %v14, 0
  %v34 = vsel %vm29, %v15, 0
  %v37 = vsel %vm29, %v16, 0
  %v40 = vsel %vm29, %v17, 0
  %42 = vmatprep.subr.mxu0 0.0
  %43 = vmatpush1.msra.mxu0 %v18
  %44 = vmatprep.subr.mxu0 0.0
  %45 = vmatpush1.msra.mxu0 %v19
  %46 = vmatprep.subr.mxu0 0.0
  %47 = vmatpush1.msra.mxu0 %v20
  %48 = vmatprep.subr.mxu0 0.0
  %49 = vmatpush1.msra.mxu0 %v21
  %50 = vmatprep.subr.mxu0 0.0
  %51 = vmatpush1.msra.mxu0 0.0
  %52 = vmatprep.subr.mxu0 0.0
  %53 = vmatpush1.msra.mxu0 0.0
  %54 = vmatprep.subr.mxu0 0.0
  %55 = vmatpush1.msra.mxu0 0.0
  %56 = vmatprep.subr.mxu0 0.0
  %57 = vmatpush1.msra.mxu0 0.0
  %58 = vmatprep.subr.mxu0 0.0
  %59 = vmatpush1.msra.mxu0 0.0
  %60 = vmatprep.subr.mxu0 0.0
  %61 = vmatpush1.msra.mxu0 0.0
  %62 = vmatprep.subr.mxu0 0.0
  %63 = vmatpush1.msra.mxu0 0.0
  %64 = vmatprep.subr.mxu0 0.0
  %65 = vmatpush1.msra.mxu0 0.0
  %66 = vmatprep.subr.mxu0 0.0
  %67 = vmatpush1.msra.mxu0 0.0
  %68 = vmatprep.subr.mxu0 0.0
  %69 = vmatpush1.msra.mxu0 0.0
  %70 = vmatprep.subr.mxu0 0.0
  %71 = vmatpush1.msra.mxu0 0.0
  %72 = vmatprep.subr.mxu0 0.0
  %73 = vmatpush1.msra.mxu0 0.0
  %74 = vmatprep.subr.mxu0 0.0
  %75 = vmatpush1.msra.mxu0 0.0
  %76 = vmatprep.subr.mxu0 0.0
  %77 = vmatpush1.msra.mxu0 0.0
  %78 = vmatprep.subr.mxu0 0.0
  %79 = vmatpush1.msra.mxu0 0.0
  %80 = vmatprep.subr.mxu0 0.0
  %81 = vmatpush1.msra.mxu0 0.0
  %82 = vmatprep.subr.mxu0 0.0
  %83 = vmatpush1.msra.mxu0 0.0
  %84 = vmatprep.subr.mxu0 0.0
  %85 = vmatpush1.msra.mxu0 0.0
  %86 = vmatprep.subr.mxu0 0.0
  %87 = vmatpush1.msra.mxu0 0.0
  %88 = vmatprep.subr.mxu0 0.0
  %89 = vmatpush1.msra.mxu0 0.0
  %90 = vmatprep.subr.mxu0 0.0
  %91 = vmatpush1.msra.mxu0 0.0
  %92 = vmatprep.subr.mxu0 0.0
  %93 = vmatpush1.msra.mxu0 0.0
  %94 = vmatprep.subr.mxu0 0.0
  %95 = vmatpush1.msra.mxu0 0.0
  %96 = vmatprep.subr.mxu0 0.0
  %97 = vmatpush1.msra.mxu0 0.0
  %98 = vmatprep.subr.mxu0 0.0
  %99 = vmatpush1.msra.mxu0 0.0
  %100 = vmatprep.subr.mxu0 0.0
  %101 = vmatpush1.msra.mxu0 0.0
  %102 = vmatprep.subr.mxu0 0.0
  %103 = vmatpush1.msra.mxu0 0.0
  %104 = vmatprep.subr.mxu0 0.0
  %105 = vmatpush1.msra.mxu0 0.0
  %106 = vmatprep.mubr.f32.mxu0 0.0
  %107 = vmatmul.mubr.f32.gmra.mrb[0].mxu0 %v31
  %v108 = vpop.f32.mrb[0].mxu0
  %v109 = vadd.f32 %v27, %v108
  %v110 = vpop.f32.mrb[0].mxu0
  %111 = vmatprep.mubr.f32.mxu0 0.0
  %112 = vmatmul.mubr.f32.gmra.mrb[0].mxu0 %v34
  %v113 = vpop.f32.mrb[0].mxu0
  %v114 = vadd.f32 %v27, %v113
  %v115 = vpop.f32.mrb[0].mxu0
  %116 = vmatprep.mubr.f32.mxu0 0.0
  %117 = vmatmul.mubr.f32.gmra.mrb[0].mxu0 %v37
  %v118 = vpop.f32.mrb[0].mxu0
  %v119 = vadd.f32 %v27, %v118
  %v120 = vpop.f32.mrb[0].mxu0
  %121 = vmatprep.mubr.f32.mxu0 0.0
  %122 = vmatmul.mubr.f32.gmra.mrb[0].mxu0 %v40
  %v123 = vpop.f32.mrb[0].mxu0
  %v124 = vadd.f32 %v27, %v123
  %v125 = vpop.f32.mrb[0].mxu0
  %126 = vdwg.mxu0
  %vm127 = vcmask 523264
  %128 = vst.msk [vmem:[%s3] sm:$0xff] %vm127, %v109
  %129 = vst.msk [vmem:[%s3 + $0x8] sm:$0xff] %vm127, %v114
  %130 = vst.msk [vmem:[%s3 + $0x10] sm:$0xff] %vm127, %v119
  %131 = vst.msk [vmem:[%s3 + $0x18] sm:$0xff] %vm127, %v124
  // Predicated region
  $region14: #{run.7} parent=0 // pred_check
    _
  $region15: #{run.7} parent=0 // pred_check_branch
    %133 = sbr.rel (0) target = $region17
  $region16: #{run.7} parent=0 // pred_region
    _
  $region17: #{run.7} parent=0 // pred_fallthru
    _
  // Predicated region
  $region18: #{run.7} parent=0 // pred_check
    _
  $region19: #{run.7} parent=0 // pred_check_branch
    %135 = sbr.rel (0) target = $region21
  $region20: #{run.7} parent=0 // pred_region
    _
  $region21: #{run.7} parent=0 // pred_fallthru
    _

// kernel: run.6
$region0: #{run.6}
  #allocation0 [shape = 'u32[]', space=smem, size = 0x4, offset = 0x4, fixed_abs, tag = 'smem constant byte address 0x4 - core index']
  #allocation1 [shape = 'u32[144,128]{1,0:T(1,128)}', space=vmem, size = 0x12000, scoped, tag = 'internal scratch']
  %s0 = inlined_call_operand.vmem [shape: f32[320,32], index: 0, kind: input, shape index: {}]
  %s1 = inlined_call_operand.vmem [shape: f32[32,32], index: 1, kind: input, shape index: {}]
  %s2 = inlined_call_operand.vmem [shape: f32[1,32], index: 2, kind: input, shape index: {}]
  %s3 = inlined_call_operand.vmem [shape: f32[320,32], index: 3, kind: output, shape index: {}]
  %s4 = sld [smem:[#allocation0]]
  $region22: #{run.6} parent=0
    _
  %s6 = ssub.s32 1, %s4
  %s7 = scalar_select 0, %s6, %s4
  // Predicated region
  $region2: #{run.6} parent=0 // pred_check
    _
  $region3: #{run.6} parent=0 // pred_check_branch
    %9 = sbr.rel (0) target = $region5
  $region4: #{run.6} parent=0 // pred_region
    _
  $region5: #{run.6} parent=0 // pred_fallthru
    _
  // Predicated region
  $region6: #{run.6} parent=0 // pred_check
    _
  $region7: #{run.6} parent=0 // pred_check_branch
    %11 = sbr.rel (0) target = $region9
  $region8: #{run.6} parent=0 // pred_region
    _
  $region9: #{run.6} parent=0 // pred_fallthru
    _
  // Predicated region
  $region10: #{run.6} parent=0 // pred_check
    _
  $region11: #{run.6} parent=0 // pred_check_branch
    %13 = sbr.rel (0) target = $region13
  $region12: #{run.6} parent=0 // pred_region
    _
  $region13: #{run.6} parent=0 // pred_fallthru
    _
  %v14 = vld [vmem:[%s0] sm:$0xff]
  %v15 = vld [vmem:[%s0 + $0x8] sm:$0xff]
  %v16 = vld [vmem:[%s0 + $0x10] sm:$0xff]
  %v17 = vld [vmem:[%s0 + $0x18] sm:$0xff]
  %v18 = vld [vmem:[%s0 + $0x20] sm:$0xff]
  %v19 = vld [vmem:[%s0 + $0x28] sm:$0xff]
  %v20 = vld [vmem:[%s0 + $0x30] sm:$0xff]
  %v21 = vld [vmem:[%s0 + $0x38] sm:$0xff]
  %v22 = vld [vmem:[%s0 + $0x40] sm:$0xff]
  %v23 = vld [vmem:[%s0 + $0x48] sm:$0xff]
  %v24 = vld [vmem:[%s0 + $0x50] sm:$0xff]
  %v25 = vld [vmem:[%s0 + $0x58] sm:$0xff]
  %v26 = vld [vmem:[%s0 + $0x60] sm:$0xff]
  %v27 = vld [vmem:[%s0 + $0x68] sm:$0xff]
  %v28 = vld [vmem:[%s0 + $0x70] sm:$0xff]
  %v29 = vld [vmem:[%s0 + $0x78] sm:$0xff]
  %v30 = vld [vmem:[%s0 + $0x80] sm:$0xff]
  %v31 = vld [vmem:[%s0 + $0x88] sm:$0xff]
  %v32 = vld [vmem:[%s0 + $0x90] sm:$0xff]
  %v33 = vld [vmem:[%s0 + $0x98] sm:$0xff]
  %v34 = vld [vmem:[%s0 + $0xa0] sm:$0xff]
  %v35 = vld [vmem:[%s0 + $0xa8] sm:$0xff]
  %v36 = vld [vmem:[%s0 + $0xb0] sm:$0xff]
  %v37 = vld [vmem:[%s0 + $0xb8] sm:$0xff]
  %v38 = vld [vmem:[%s0 + $0xc0] sm:$0xff]
  %v39 = vld [vmem:[%s0 + $0xc8] sm:$0xff]
  %v40 = vld [vmem:[%s0 + $0xd0] sm:$0xff]
  %v41 = vld [vmem:[%s0 + $0xd8] sm:$0xff]
  %v42 = vld [vmem:[%s0 + $0xe0] sm:$0xff]
  %v43 = vld [vmem:[%s0 + $0xe8] sm:$0xff]
  %v44 = vld [vmem:[%s0 + $0xf0] sm:$0xff]
  %v45 = vld [vmem:[%s0 + $0xf8] sm:$0xff]
  %v46 = vld [vmem:[%s0 + $0x100] sm:$0xff]
  %v47 = vld [vmem:[%s0 + $0x108] sm:$0xff]
  %v48 = vld [vmem:[%s0 + $0x110] sm:$0xff]
  %v49 = vld [vmem:[%s0 + $0x118] sm:$0xff]
  %v50 = vld [vmem:[%s0 + $0x120] sm:$0xff]
  %v51 = vld [vmem:[%s0 + $0x128] sm:$0xff]
  %v52 = vld [vmem:[%s0 + $0x130] sm:$0xff]
  %v53 = vld [vmem:[%s0 + $0x138] sm:$0xff]
  %v54 = vld [vmem:[%s1] sm:$0xff]
  %v55 = vld [vmem:[%s1 + $0x8] sm:$0xff]
  %v56 = vld [vmem:[%s1 + $0x10] sm:$0xff]
  %v57 = vld [vmem:[%s1 + $0x18] sm:$0xff]
  %v58 = vld [vmem:[%s2] sm:$0x1]
  %v60 = vlaneseq
  %v61 = vshrl.u32 %v60, 7
  %v62 = vsub.s32 0, %v61
  %v63 = vrot.slane %v58, %v62
  %vm65 = vcmask 261120
  %v67 = vsel %vm65, %v14, 0
  %v70 = vsel %vm65, %v15, 0
  %v73 = vsel %vm65, %v16, 0
  %v76 = vsel %vm65, %v17, 0
  %v79 = vsel %vm65, %v18, 0
  %v82 = vsel %vm65, %v19, 0
  %v85 = vsel %vm65, %v20, 0
  %v88 = vsel %vm65, %v21, 0
  %v91 = vsel %vm65, %v22, 0
  %v94 = vsel %vm65, %v23, 0
  %v97 = vsel %vm65, %v24, 0
  %v100 = vsel %vm65, %v25, 0
  %v103 = vsel %vm65, %v26, 0
  %v106 = vsel %vm65, %v27, 0
  %v109 = vsel %vm65, %v28, 0
  %v112 = vsel %vm65, %v29, 0
  %v115 = vsel %vm65, %v30, 0
  %v118 = vsel %vm65, %v31, 0
  %v121 = vsel %vm65, %v32, 0
  %v124 = vsel %vm65, %v33, 0
  %v127 = vsel %vm65, %v34, 0
  %v130 = vsel %vm65, %v35, 0
  %v133 = vsel %vm65, %v36, 0
  %v136 = vsel %vm65, %v37, 0
  %v139 = vsel %vm65, %v38, 0
  %v142 = vsel %vm65, %v39, 0
  %v145 = vsel %vm65, %v40, 0
  %v148 = vsel %vm65, %v41, 0
  %v151 = vsel %vm65, %v42, 0
  %v154 = vsel %vm65, %v43, 0
  %v157 = vsel %vm65, %v44, 0
  %v160 = vsel %vm65, %v45, 0
  %v163 = vsel %vm65, %v46, 0
  %v166 = vsel %vm65, %v47, 0
  %v169 = vsel %vm65, %v48, 0
  %v172 = vsel %vm65, %v49, 0
  %v175 = vsel %vm65, %v50, 0
  %v178 = vsel %vm65, %v51, 0
  %v181 = vsel %vm65, %v52, 0
  %v184 = vsel %vm65, %v53, 0
  %186 = vmatprep.subr.mxu0 0.0
  %187 = vmatpush1.msra.mxu0 %v54
  %188 = vmatprep.subr.mxu0 0.0
  %189 = vmatpush1.msra.mxu0 %v55
  %190 = vmatprep.subr.mxu0 0.0
  %191 = vmatpush1.msra.mxu0 %v56
  %192 = vmatprep.subr.mxu0 0.0
  %193 = vmatpush1.msra.mxu0 %v57
  %194 = vmatprep.subr.mxu0 0.0
  %195 = vmatpush1.msra.mxu0 0.0
  %196 = vmatprep.subr.mxu0 0.0
  %197 = vmatpush1.msra.mxu0 0.0
  %198 = vmatprep.subr.mxu0 0.0
  %199 = vmatpush1.msra.mxu0 0.0
  %200 = vmatprep.subr.mxu0 0.0
  %201 = vmatpush1.msra.mxu0 0.0
  %202 = vmatprep.subr.mxu0 0.0
  %203 = vmatpush1.msra.mxu0 0.0
  %204 = vmatprep.subr.mxu0 0.0
  %205 = vmatpush1.msra.mxu0 0.0
  %206 = vmatprep.subr.mxu0 0.0
  %207 = vmatpush1.msra.mxu0 0.0
  %208 = vmatprep.subr.mxu0 0.0
  %209 = vmatpush1.msra.mxu0 0.0
  %210 = vmatprep.subr.mxu0 0.0
  %211 = vmatpush1.msra.mxu0 0.0
  %212 = vmatprep.subr.mxu0 0.0
  %213 = vmatpush1.msra.mxu0 0.0
  %214 = vmatprep.subr.mxu0 0.0
  %215 = vmatpush1.msra.mxu0 0.0
  %216 = vmatprep.subr.mxu0 0.0
  %217 = vmatpush1.msra.mxu0 0.0
  %218 = vmatprep.subr.mxu0 0.0
  %219 = vmatpush1.msra.mxu0 0.0
  %220 = vmatprep.subr.mxu0 0.0
  %221 = vmatpush1.msra.mxu0 0.0
  %222 = vmatprep.subr.mxu0 0.0
  %223 = vmatpush1.msra.mxu0 0.0
  %224 = vmatprep.subr.mxu0 0.0
  %225 = vmatpush1.msra.mxu0 0.0
  %226 = vmatprep.subr.mxu0 0.0
  %227 = vmatpush1.msra.mxu0 0.0
  %228 = vmatprep.subr.mxu0 0.0
  %229 = vmatpush1.msra.mxu0 0.0
  %230 = vmatprep.subr.mxu0 0.0
  %231 = vmatpush1.msra.mxu0 0.0
  %232 = vmatprep.subr.mxu0 0.0
  %233 = vmatpush1.msra.mxu0 0.0
  %234 = vmatprep.subr.mxu0 0.0
  %235 = vmatpush1.msra.mxu0 0.0
  %236 = vmatprep.subr.mxu0 0.0
  %237 = vmatpush1.msra.mxu0 0.0
  %238 = vmatprep.subr.mxu0 0.0
  %239 = vmatpush1.msra.mxu0 0.0
  %240 = vmatprep.subr.mxu0 0.0
  %241 = vmatpush1.msra.mxu0 0.0
  %242 = vmatprep.subr.mxu0 0.0
  %243 = vmatpush1.msra.mxu0 0.0
  %244 = vmatprep.subr.mxu0 0.0
  %245 = vmatpush1.msra.mxu0 0.0
  %246 = vmatprep.subr.mxu0 0.0
  %247 = vmatpush1.msra.mxu0 0.0
  %248 = vmatprep.subr.mxu0 0.0
  %249 = vmatpush1.msra.mxu0 0.0
  %250 = vmatprep.mubr.f32.mxu0 0.0
  %251 = vmatmul.mubr.f32.gmra.mrb[0].mxu0 %v67
  %v252 = vpop.f32.mrb[0].mxu0
  %v253 = vadd.f32 %v63, %v252
  %v254 = vpop.f32.mrb[0].mxu0
  %255 = vmatprep.mubr.f32.mxu0 0.0
  %256 = vmatmul.mubr.f32.gmra.mrb[0].mxu0 %v70
  %v257 = vpop.f32.mrb[0].mxu0
  %v258 = vadd.f32 %v63, %v257
  %v259 = vpop.f32.mrb[0].mxu0
  %260 = vmatprep.mubr.f32.mxu0 0.0
  %261 = vmatmul.mubr.f32.gmra.mrb[0].mxu0 %v73
  %v262 = vpop.f32.mrb[0].mxu0
  %v263 = vadd.f32 %v63, %v262
  %v264 = vpop.f32.mrb[0].mxu0
  %265 = vmatprep.mubr.f32.mxu0 0.0
  %266 = vmatmul.mubr.f32.gmra.mrb[0].mxu0 %v76
  %v267 = vpop.f32.mrb[0].mxu0
  %v268 = vadd.f32 %v63, %v267
  %v269 = vpop.f32.mrb[0].mxu0
  %270 = vmatprep.mubr.f32.mxu0 0.0
  %271 = vmatmul.mubr.f32.gmra.mrb[0].mxu0 %v79
  %v272 = vpop.f32.mrb[0].mxu0
  %v273 = vadd.f32 %v63, %v272
  %v274 = vpop.f32.mrb[0].mxu0
  %275 = vmatprep.mubr.f32.mxu0 0.0
  %276 = vmatmul.mubr.f32.gmra.mrb[0].mxu0 %v82
  %v277 = vpop.f32.mrb[0].mxu0
  %v278 = vadd.f32 %v63, %v277
  %v279 = vpop.f32.mrb[0].mxu0
  %280 = vmatprep.mubr.f32.mxu0 0.0
  %281 = vmatmul.mubr.f32.gmra.mrb[0].mxu0 %v85
  %v282 = vpop.f32.mrb[0].mxu0
  %v283 = vadd.f32 %v63, %v282
  %v284 = vpop.f32.mrb[0].mxu0
  %285 = vmatprep.mubr.f32.mxu0 0.0
  %286 = vmatmul.mubr.f32.gmra.mrb[0].mxu0 %v88
  %v287 = vpop.f32.mrb[0].mxu0
  %v288 = vadd.f32 %v63, %v287
  %v289 = vpop.f32.mrb[0].mxu0
  %290 = vmatprep.mubr.f32.mxu0 0.0
  %291 = vmatmul.mubr.f32.gmra.mrb[0].mxu0 %v91
  %v292 = vpop.f32.mrb[0].mxu0
  %v293 = vadd.f32 %v63, %v292
  %v294 = vpop.f32.mrb[0].mxu0
  %295 = vmatprep.mubr.f32.mxu0 0.0
  %296 = vmatmul.mubr.f32.gmra.mrb[0].mxu0 %v94
  %v297 = vpop.f32.mrb[0].mxu0
  %v298 = vadd.f32 %v63, %v297
  %v299 = vpop.f32.mrb[0].mxu0
  %300 = vmatprep.mubr.f32.mxu0 0.0
  %301 = vmatmul.mubr.f32.gmra.mrb[0].mxu0 %v97
  %v302 = vpop.f32.mrb[0].mxu0
  %v303 = vadd.f32 %v63, %v302
  %v304 = vpop.f32.mrb[0].mxu0
  %305 = vmatprep.mubr.f32.mxu0 0.0
  %306 = vmatmul.mubr.f32.gmra.mrb[0].mxu0 %v100
  %v307 = vpop.f32.mrb[0].mxu0
  %v308 = vadd.f32 %v63, %v307
  %v309 = vpop.f32.mrb[0].mxu0
  %310 = vmatprep.mubr.f32.mxu0 0.0
  %311 = vmatmul.mubr.f32.gmra.mrb[0].mxu0 %v103
  %v312 = vpop.f32.mrb[0].mxu0
  %v313 = vadd.f32 %v63, %v312
  %v314 = vpop.f32.mrb[0].mxu0
  %315 = vmatprep.mubr.f32.mxu0 0.0
  %316 = vmatmul.mubr.f32.gmra.mrb[0].mxu0 %v106
  %v317 = vpop.f32.mrb[0].mxu0
  %v318 = vadd.f32 %v63, %v317
  %v319 = vpop.f32.mrb[0].mxu0
  %320 = vmatprep.mubr.f32.mxu0 0.0
  %321 = vmatmul.mubr.f32.gmra.mrb[0].mxu0 %v109
  %v322 = vpop.f32.mrb[0].mxu0
  %v323 = vadd.f32 %v63, %v322
  %v324 = vpop.f32.mrb[0].mxu0
  %325 = vmatprep.mubr.f32.mxu0 0.0
  %326 = vmatmul.mubr.f32.gmra.mrb[0].mxu0 %v112
  %v327 = vpop.f32.mrb[0].mxu0
  %v328 = vadd.f32 %v63, %v327
  %v329 = vpop.f32.mrb[0].mxu0
  %330 = vmatprep.mubr.f32.mxu0 0.0
  %331 = vmatmul.mubr.f32.gmra.mrb[0].mxu0 %v115
  %v332 = vpop.f32.mrb[0].mxu0
  %v333 = vadd.f32 %v63, %v332
  %v334 = vpop.f32.mrb[0].mxu0
  %335 = vmatprep.mubr.f32.mxu0 0.0
  %336 = vmatmul.mubr.f32.gmra.mrb[0].mxu0 %v118
  %v337 = vpop.f32.mrb[0].mxu0
  %v338 = vadd.f32 %v63, %v337
  %v339 = vpop.f32.mrb[0].mxu0
  %340 = vmatprep.mubr.f32.mxu0 0.0
  %341 = vmatmul.mubr.f32.gmra.mrb[0].mxu0 %v121
  %v342 = vpop.f32.mrb[0].mxu0
  %v343 = vadd.f32 %v63, %v342
  %v344 = vpop.f32.mrb[0].mxu0
  %345 = vmatprep.mubr.f32.mxu0 0.0
  %346 = vmatmul.mubr.f32.gmra.mrb[0].mxu0 %v124
  %v347 = vpop.f32.mrb[0].mxu0
  %v348 = vadd.f32 %v63, %v347
  %v349 = vpop.f32.mrb[0].mxu0
  %350 = vmatprep.mubr.f32.mxu0 0.0
  %351 = vmatmul.mubr.f32.gmra.mrb[0].mxu0 %v127
  %v352 = vpop.f32.mrb[0].mxu0
  %v353 = vadd.f32 %v63, %v352
  %v354 = vpop.f32.mrb[0].mxu0
  %355 = vmatprep.mubr.f32.mxu0 0.0
  %356 = vmatmul.mubr.f32.gmra.mrb[0].mxu0 %v130
  %v357 = vpop.f32.mrb[0].mxu0
  %v358 = vadd.f32 %v63, %v357
  %v359 = vpop.f32.mrb[0].mxu0
  %360 = vmatprep.mubr.f32.mxu0 0.0
  %361 = vmatmul.mubr.f32.gmra.mrb[0].mxu0 %v133
  %v362 = vpop.f32.mrb[0].mxu0
  %v363 = vadd.f32 %v63, %v362
  %v364 = vpop.f32.mrb[0].mxu0
  %365 = vmatprep.mubr.f32.mxu0 0.0
  %366 = vmatmul.mubr.f32.gmra.mrb[0].mxu0 %v136
  %v367 = vpop.f32.mrb[0].mxu0
  %v368 = vadd.f32 %v63, %v367
  %v369 = vpop.f32.mrb[0].mxu0
  %370 = vmatprep.mubr.f32.mxu0 0.0
  %371 = vmatmul.mubr.f32.gmra.mrb[0].mxu0 %v139
  %v372 = vpop.f32.mrb[0].mxu0
  %v373 = vadd.f32 %v63, %v372
  %v374 = vpop.f32.mrb[0].mxu0
  %375 = vmatprep.mubr.f32.mxu0 0.0
  %376 = vmatmul.mubr.f32.gmra.mrb[0].mxu0 %v142
  %v377 = vpop.f32.mrb[0].mxu0
  %v378 = vadd.f32 %v63, %v377
  %v379 = vpop.f32.mrb[0].mxu0
  %380 = vmatprep.mubr.f32.mxu0 0.0
  %381 = vmatmul.mubr.f32.gmra.mrb[0].mxu0 %v145
  %v382 = vpop.f32.mrb[0].mxu0
  %v383 = vadd.f32 %v63, %v382
  %v384 = vpop.f32.mrb[0].mxu0
  %385 = vmatprep.mubr.f32.mxu0 0.0
  %386 = vmatmul.mubr.f32.gmra.mrb[0].mxu0 %v148
  %v387 = vpop.f32.mrb[0].mxu0
  %v388 = vadd.f32 %v63, %v387
  %v389 = vpop.f32.mrb[0].mxu0
  %390 = vmatprep.mubr.f32.mxu0 0.0
  %391 = vmatmul.mubr.f32.gmra.mrb[0].mxu0 %v151
  %v392 = vpop.f32.mrb[0].mxu0
  %v393 = vadd.f32 %v63, %v392
  %v394 = vpop.f32.mrb[0].mxu0
  %395 = vmatprep.mubr.f32.mxu0 0.0
  %396 = vmatmul.mubr.f32.gmra.mrb[0].mxu0 %v154
  %v397 = vpop.f32.mrb[0].mxu0
  %v398 = vadd.f32 %v63, %v397
  %v399 = vpop.f32.mrb[0].mxu0
  %400 = vmatprep.mubr.f32.mxu0 0.0
  %401 = vmatmul.mubr.f32.gmra.mrb[0].mxu0 %v157
  %v402 = vpop.f32.mrb[0].mxu0
  %v403 = vadd.f32 %v63, %v402
  %v404 = vpop.f32.mrb[0].mxu0
  %405 = vmatprep.mubr.f32.mxu0 0.0
  %406 = vmatmul.mubr.f32.gmra.mrb[0].mxu0 %v160
  %v407 = vpop.f32.mrb[0].mxu0
  %v408 = vadd.f32 %v63, %v407
  %v409 = vpop.f32.mrb[0].mxu0
  %410 = vmatprep.mubr.f32.mxu0 0.0
  %411 = vmatmul.mubr.f32.gmra.mrb[0].mxu0 %v163
  %v412 = vpop.f32.mrb[0].mxu0
  %v413 = vadd.f32 %v63, %v412
  %v414 = vpop.f32.mrb[0].mxu0
  %415 = vmatprep.mubr.f32.mxu0 0.0
  %416 = vmatmul.mubr.f32.gmra.mrb[0].mxu0 %v166
  %v417 = vpop.f32.mrb[0].mxu0
  %v418 = vadd.f32 %v63, %v417
  %v419 = vpop.f32.mrb[0].mxu0
  %420 = vmatprep.mubr.f32.mxu0 0.0
  %421 = vmatmul.mubr.f32.gmra.mrb[0].mxu0 %v169
  %v422 = vpop.f32.mrb[0].mxu0
  %v423 = vadd.f32 %v63, %v422
  %v424 = vpop.f32.mrb[0].mxu0
  %425 = vmatprep.mubr.f32.mxu0 0.0
  %426 = vmatmul.mubr.f32.gmra.mrb[0].mxu0 %v172
  %v427 = vpop.f32.mrb[0].mxu0
  %v428 = vadd.f32 %v63, %v427
  %v429 = vpop.f32.mrb[0].mxu0
  %430 = vmatprep.mubr.f32.mxu0 0.0
  %431 = vmatmul.mubr.f32.gmra.mrb[0].mxu0 %v175
  %v432 = vpop.f32.mrb[0].mxu0
  %v433 = vadd.f32 %v63, %v432
  %v434 = vpop.f32.mrb[0].mxu0
  %435 = vmatprep.mubr.f32.mxu0 0.0
  %436 = vmatmul.mubr.f32.gmra.mrb[0].mxu0 %v178
  %v437 = vpop.f32.mrb[0].mxu0
  %v438 = vadd.f32 %v63, %v437
  %v439 = vpop.f32.mrb[0].mxu0
  %440 = vmatprep.mubr.f32.mxu0 0.0
  %441 = vmatmul.mubr.f32.gmra.mrb[0].mxu0 %v181
  %v442 = vpop.f32.mrb[0].mxu0
  %v443 = vadd.f32 %v63, %v442
  %v444 = vpop.f32.mrb[0].mxu0
  %445 = vmatprep.mubr.f32.mxu0 0.0
  %446 = vmatmul.mubr.f32.gmra.mrb[0].mxu0 %v184
  %v447 = vpop.f32.mrb[0].mxu0
  %v448 = vadd.f32 %v63, %v447
  %v449 = vpop.f32.mrb[0].mxu0
  %450 = vdwg.mxu0
  %451 = vst.msk [vmem:[%s3] sm:$0xff] %vm65, %v253
  %452 = vst.msk [vmem:[%s3 + $0x8] sm:$0xff] %vm65, %v258
  %453 = vst.msk [vmem:[%s3 + $0x10] sm:$0xff] %vm65, %v263
  %454 = vst.msk [vmem:[%s3 + $0x18] sm:$0xff] %vm65, %v268
  %455 = vst.msk [vmem:[%s3 + $0x20] sm:$0xff] %vm65, %v273
  %456 = vst.msk [vmem:[%s3 + $0x28] sm:$0xff] %vm65, %v278
  %457 = vst.msk [vmem:[%s3 + $0x30] sm:$0xff] %vm65, %v283
  %458 = vst.msk [vmem:[%s3 + $0x38] sm:$0xff] %vm65, %v288
  %459 = vst.msk [vmem:[%s3 + $0x40] sm:$0xff] %vm65, %v293
  %460 = vst.msk [vmem:[%s3 + $0x48] sm:$0xff] %vm65, %v298
  %461 = vst.msk [vmem:[%s3 + $0x50] sm:$0xff] %vm65, %v303
  %462 = vst.msk [vmem:[%s3 + $0x58] sm:$0xff] %vm65, %v308
  %463 = vst.msk [vmem:[%s3 + $0x60] sm:$0xff] %vm65, %v313
  %464 = vst.msk [vmem:[%s3 + $0x68] sm:$0xff] %vm65, %v318
  %465 = vst.msk [vmem:[%s3 + $0x70] sm:$0xff] %vm65, %v323
  %466 = vst.msk [vmem:[%s3 + $0x78] sm:$0xff] %vm65, %v328
  %467 = vst.msk [vmem:[%s3 + $0x80] sm:$0xff] %vm65, %v333
  %468 = vst.msk [vmem:[%s3 + $0x88] sm:$0xff] %vm65, %v338
  %469 = vst.msk [vmem:[%s3 + $0x90] sm:$0xff] %vm65, %v343
  %470 = vst.msk [vmem:[%s3 + $0x98] sm:$0xff] %vm65, %v348
  %471 = vst.msk [vmem:[%s3 + $0xa0] sm:$0xff] %vm65, %v353
  %472 = vst.msk [vmem:[%s3 + $0xa8] sm:$0xff] %vm65, %v358
  %473 = vst.msk [vmem:[%s3 + $0xb0] sm:$0xff] %vm65, %v363
  %474 = vst.msk [vmem:[%s3 + $0xb8] sm:$0xff] %vm65, %v368
  %475 = vst.msk [vmem:[%s3 + $0xc0] sm:$0xff] %vm65, %v373
  %476 = vst.msk [vmem:[%s3 + $0xc8] sm:$0xff] %vm65, %v378
  %477 = vst.msk [vmem:[%s3 + $0xd0] sm:$0xff] %vm65, %v383
  %478 = vst.msk [vmem:[%s3 + $0xd8] sm:$0xff] %vm65, %v388
  %479 = vst.msk [vmem:[%s3 + $0xe0] sm:$0xff] %vm65, %v393
  %480 = vst.msk [vmem:[%s3 + $0xe8] sm:$0xff] %vm65, %v398
  %481 = vst.msk [vmem:[%s3 + $0xf0] sm:$0xff] %vm65, %v403
  %482 = vst.msk [vmem:[%s3 + $0xf8] sm:$0xff] %vm65, %v408
  %483 = vst.msk [vmem:[%s3 + $0x100] sm:$0xff] %vm65, %v413
  %484 = vst.msk [vmem:[%s3 + $0x108] sm:$0xff] %vm65, %v418
  %485 = vst.msk [vmem:[%s3 + $0x110] sm:$0xff] %vm65, %v423
  %486 = vst.msk [vmem:[%s3 + $0x118] sm:$0xff] %vm65, %v428
  %487 = vst.msk [vmem:[%s3 + $0x120] sm:$0xff] %vm65, %v433
  %488 = vst.msk [vmem:[%s3 + $0x128] sm:$0xff] %vm65, %v438
  %489 = vst.msk [vmem:[%s3 + $0x130] sm:$0xff] %vm65, %v443
  %490 = vst.msk [vmem:[%s3 + $0x138] sm:$0xff] %vm65, %v448
  // Predicated region
  $region14: #{run.6} parent=0 // pred_check
    _
  $region15: #{run.6} parent=0 // pred_check_branch
    %492 = sbr.rel (0) target = $region17
  $region16: #{run.6} parent=0 // pred_region
    _
  $region17: #{run.6} parent=0 // pred_fallthru
    _
  // Predicated region
  $region18: #{run.6} parent=0 // pred_check
    _
  $region19: #{run.6} parent=0 // pred_check_branch
    %494 = sbr.rel (0) target = $region21
  $region20: #{run.6} parent=0 // pred_region
    _
  $region21: #{run.6} parent=0 // pred_fallthru
    _

// kernel: run.11
$region0: #{run.11}
  #allocation0 [shape = 'u32[]', space=smem, size = 0x4, offset = 0x4, fixed_abs, tag = 'smem constant byte address 0x4 - core index']
  #allocation1 [shape = 'u32[144,128]{1,0:T(1,128)}', space=vmem, size = 0x12000, scoped, tag = 'internal scratch']
  %s0 = inlined_call_operand.vmem [shape: f32[16,64], index: 0, kind: input, shape index: {}]
  %s1 = inlined_call_operand.vmem [shape: f32[64,32], index: 1, kind: input, shape index: {}]
  %s2 = inlined_call_operand.vmem [shape: f32[1,32], index: 2, kind: input, shape index: {}]
  %s3 = inlined_call_operand.hbm [shape: f32[16,32], index: 3, kind: output, shape index: {}]
  %s4 = sld [smem:[#allocation0]]
  $region22: #{run.11} parent=0
    _
  %s6 = ssub.s32 1, %s4
  %s7 = scalar_select 0, %s6, %s4
  $region1: #{run.11} parent=0
    #allocation2 [shape = 'u8[8192]{0}', space=vmem, size = 0x2000, scoped, tag = 'output window, operand 0, single buffered']
    #allocation3 [shape = 's32[1]{0}', space=sflag, size = 0x4, scoped, tag = 'scoped memory for run.11']
    %8 = vsyncpa [#allocation3], 0
    // Predicated region
    $region2: #{run.11} parent=1 // pred_check
      _
    $region3: #{run.11} parent=1 // pred_check_branch
      %10 = sbr.rel (0) target = $region5
    $region4: #{run.11} parent=1 // pred_region
      _
    $region5: #{run.11} parent=1 // pred_fallthru
      _
    // Predicated region
    $region6: #{run.11} parent=1 // pred_check
      _
    $region7: #{run.11} parent=1 // pred_check_branch
      %12 = sbr.rel (0) target = $region9
    $region8: #{run.11} parent=1 // pred_region
      _
    $region9: #{run.11} parent=1 // pred_fallthru
      _
    // Predicated region
    $region10: #{run.11} parent=1 // pred_check
      _
    $region11: #{run.11} parent=1 // pred_check_branch
      %14 = sbr.rel (0) target = $region13
    $region12: #{run.11} parent=1 // pred_region
      _
    $region13: #{run.11} parent=1 // pred_fallthru
      _
    %v15 = vld [vmem:[%s0] sm:$0xff]
    %v16 = vld [vmem:[%s0 + $0x8] sm:$0xff]
    %v17 = vld [vmem:[%s1] sm:$0xff]
    %v18 = vld [vmem:[%s1 + $0x8] sm:$0xff]
    %v19 = vld [vmem:[%s1 + $0x10] sm:$0xff]
    %v20 = vld [vmem:[%s1 + $0x18] sm:$0xff]
    %v21 = vld [vmem:[%s1 + $0x20] sm:$0xff]
    %v22 = vld [vmem:[%s1 + $0x28] sm:$0xff]
    %v23 = vld [vmem:[%s1 + $0x30] sm:$0xff]
    %v24 = vld [vmem:[%s1 + $0x38] sm:$0xff]
    %v25 = vld [vmem:[%s2] sm:$0x1]
    %v27 = vlaneseq
    %v28 = vshrl.u32 %v27, 7
    %v29 = vsub.s32 0, %v28
    %v30 = vrot.slane %v25, %v29
    %vm32 = vcmask 523264
    %v34 = vsel %vm32, %v15, 0
    %v37 = vsel %vm32, %v16, 0
    %39 = vmatprep.subr.mxu0 0.0
    %40 = vmatpush1.msra.mxu0 %v17
    %41 = vmatprep.subr.mxu0 0.0
    %42 = vmatpush1.msra.mxu0 %v18
    %43 = vmatprep.subr.mxu0 0.0
    %44 = vmatpush1.msra.mxu0 %v19
    %45 = vmatprep.subr.mxu0 0.0
    %46 = vmatpush1.msra.mxu0 %v20
    %47 = vmatprep.subr.mxu0 0.0
    %48 = vmatpush1.msra.mxu0 %v21
    %49 = vmatprep.subr.mxu0 0.0
    %50 = vmatpush1.msra.mxu0 %v22
    %51 = vmatprep.subr.mxu0 0.0
    %52 = vmatpush1.msra.mxu0 %v23
    %53 = vmatprep.subr.mxu0 0.0
    %54 = vmatpush1.msra.mxu0 %v24
    %55 = vmatprep.subr.mxu0 0.0
    %56 = vmatpush1.msra.mxu0 0.0
    %57 = vmatprep.subr.mxu0 0.0
    %58 = vmatpush1.msra.mxu0 0.0
    %59 = vmatprep.subr.mxu0 0.0
    %60 = vmatpush1.msra.mxu0 0.0
    %61 = vmatprep.subr.mxu0 0.0
    %62 = vmatpush1.msra.mxu0 0.0
    %63 = vmatprep.subr.mxu0 0.0
    %64 = vmatpush1.msra.mxu0 0.0
    %65 = vmatprep.subr.mxu0 0.0
    %66 = vmatpush1.msra.mxu0 0.0
    %67 = vmatprep.subr.mxu0 0.0
    %68 = vmatpush1.msra.mxu0 0.0
    %69 = vmatprep.subr.mxu0 0.0
    %70 = vmatpush1.msra.mxu0 0.0
    %71 = vmatprep.subr.mxu0 0.0
    %72 = vmatpush1.msra.mxu0 0.0
    %73 = vmatprep.subr.mxu0 0.0
    %74 = vmatpush1.msra.mxu0 0.0
    %75 = vmatprep.subr.mxu0 0.0
    %76 = vmatpush1.msra.mxu0 0.0
    %77 = vmatprep.subr.mxu0 0.0
    %78 = vmatpush1.msra.mxu0 0.0
    %79 = vmatprep.subr.mxu0 0.0
    %80 = vmatpush1.msra.mxu0 0.0
    %81 = vmatprep.subr.mxu0 0.0
    %82 = vmatpush1.msra.mxu0 0.0
    %83 = vmatprep.subr.mxu0 0.0
    %84 = vmatpush1.msra.mxu0 0.0
    %85 = vmatprep.subr.mxu0 0.0
    %86 = vmatpush1.msra.mxu0 0.0
    %87 = vmatprep.subr.mxu0 0.0
    %88 = vmatpush1.msra.mxu0 0.0
    %89 = vmatprep.subr.mxu0 0.0
    %90 = vmatpush1.msra.mxu0 0.0
    %91 = vmatprep.subr.mxu0 0.0
    %92 = vmatpush1.msra.mxu0 0.0
    %93 = vmatprep.subr.mxu0 0.0
    %94 = vmatpush1.msra.mxu0 0.0
    %95 = vmatprep.subr.mxu0 0.0
    %96 = vmatpush1.msra.mxu0 0.0
    %97 = vmatprep.subr.mxu0 0.0
    %98 = vmatpush1.msra.mxu0 0.0
    %99 = vmatprep.subr.mxu0 0.0
    %100 = vmatpush1.msra.mxu0 0.0
    %101 = vmatprep.subr.mxu0 0.0
    %102 = vmatpush1.msra.mxu0 0.0
    %103 = vmatprep.mubr.f32.mxu0 0.0
    %104 = vmatmul.mubr.f32.gmra.mrb[0].mxu0 %v34
    %v105 = vpop.f32.mrb[0].mxu0
    %v106 = vadd.f32 %v30, %v105
    %v107 = vpop.f32.mrb[0].mxu0
    %108 = vmatprep.mubr.f32.mxu0 0.0
    %109 = vmatmul.mubr.f32.gmra.mrb[0].mxu0 %v37
    %v110 = vpop.f32.mrb[0].mxu0
    %v111 = vadd.f32 %v30, %v110
    %v112 = vpop.f32.mrb[0].mxu0
    %113 = vdwg.mxu0
    %vm114 = vcmask 261120
    %115 = vst.msk [vmem:[#allocation2] sm:$0xff] %vm114, %v106
    %116 = vst.msk [vmem:[#allocation2 + $0x8] sm:$0xff] %vm114, %v111
    // Predicated region
    $region14: #{run.11} parent=1 // pred_check
      _
    $region15: #{run.11} parent=1 // pred_check_branch
      %118 = sbr.rel (0) target = $region17
    $region16: #{run.11} parent=1 // pred_region
      %s120 = ssub.s32 256, 256
      %121 = vsyncadd [#allocation3], %s120
      %s122 = sshll.u32 [#allocation2], 4
      %s123 = int_to_ptr.vmem [resolvable:$true] %s122
      %128 = dma.vmem_to_hbm [thread:$0]  %s123, 256, %s3, [#allocation3], 128, 128, 8
    $region17: #{run.11} parent=1 // pred_fallthru
      _
    // Predicated region
    $region18: #{run.11} parent=1 // pred_check
      _
    $region19: #{run.11} parent=1 // pred_check_branch
      %130 = sbr.rel (0) target = $region21
    $region20: #{run.11} parent=1 // pred_region
      %131 = dma.done [#allocation3], 256
    $region21: #{run.11} parent=1 // pred_fallthru
      _
    %132 = vsyncpa [#allocation3], 1

// kernel: run.9
$region0: #{run.9}
  #allocation0 [shape = 'u32[]', space=smem, size = 0x4, offset = 0x4, fixed_abs, tag = 'smem constant byte address 0x4 - core index']
  #allocation1 [shape = 'u32[144,128]{1,0:T(1,128)}', space=vmem, size = 0x12000, scoped, tag = 'internal scratch']
  #allocation2 [shape = 'f32[8,32]{1,0:T(8,128)}', space=vmem, size = 0x1000, scoped, tag = 'scratch operand']
  %s0 = inlined_call_operand.vmem [shape: s32[4,8,128], index: 0, kind: input, shape index: {}]
  %s1 = inlined_call_operand.vmem [shape: f32[4,8,128], index: 1, kind: input, shape index: {}]
  %s2 = inlined_call_operand.vmem [shape: bf16[4,4,80,8], index: 2, kind: input, shape index: {}]
  %s3 = inlined_call_operand.vmem [shape: f32[4,8,32], index: 3, kind: output, shape index: {}]
  %s4 = sld [smem:[#allocation0]]
  $region53: #{run.9} parent=0
    _
  %s6 = ssub.s32 1, %s4
  %s7 = scalar_select 0, %s6, %s4
  loop: start=0, step=1, limit=6
  $region2: #{run.9} parent=0 // loop_pre_header
    _
  $region3: #{run.9} parent=0 // loop_header
    %s9 = sphi 0, %s13
    %p10 = scmp.ge.s32.totalorder %s9, 6
    %s16 = sphi 0, %s35
    %s17 = sphi 0, %s31
    %s18 = sphi 0, %s27
    %s19 = sphi 0, %s16
    %s20 = sphi 0, %s17
    %s21 = sphi 0, %s18
    %s22 = sphi 0, %s19
    %s23 = sphi 0, %s20
    %s24 = sphi 0, %s21
    %s40 = sphi 0, %s42
    %s43 = sphi 0, %s40
    %s44 = sphi 0, %s43
    %s60 = sphi 0, %s44
    %s68 = sphi 0, %s70
    %s71 = sphi 0, %s68
    %s72 = sphi 0, %s71
    %s88 = sphi 0, %s72
    %s96 = sphi 0, %s98
    %s99 = sphi 0, %s96
    %s100 = sphi 0, %s99
    %s116 = sphi 0, %s100
    %s124 = sphi 0, %s126
    %s127 = sphi 0, %s124
    %s128 = sphi 0, %s127
    %s144 = sphi 0, %s128
  $region4: #{run.9} parent=0 // loop_header_branch
    %12 = sbr.rel (%p10) target = $region8
  $region5: #{run.9} parent=0 // loop_body
    %s14 = ssub.s32 %s9, 1
    %s15 = ssub.s32 %s9, 2
    %s25 = sadd.s32 1, %s18
    %p26 = scmp.ge.s32.totalorder %s25, 1
    %s27 = scalar_select %p26, 0, %s25
    %s28 = sadd.s32 1, %s17
    %s29 = scalar_select %p26, %s28, %s17
    %p30 = scmp.ge.s32.totalorder %s29, 1
    %s31 = scalar_select %p30, 0, %s29
    %s32 = sadd.s32 1, %s16
    %s33 = scalar_select %p30, %s32, %s16
    %p34 = scmp.ge.s32.totalorder %s33, 4
    %s35 = scalar_select %p34, 0, %s33
    %s36 = ssub.s32 %s16, %s35
    %s37 = ssub.s32 %s17, %s31
    %s38 = sor.u32 %s36, %s37
    %p39 = scmp.eq.s32.totalorder %s38, 0
    %s41 = sadd.s32 %s40, 1
    %s42 = scalar_select %p39, %s40, %s41
    %p45 = pneg %p39
    %p46 = scmp.eq.s32.totalorder %s9, 3
    %p47 = por %p45, %p46
    %p48 = scmp.ne.s32.totalorder %s40, %s43
    %p49 = scmp.eq.s32.totalorder %s9, 0
    %p50 = por %p48, %p49
    %p51 = scmp.ne.s32.totalorder %s40, %s43
    %p52 = scmp.eq.s32.totalorder %s14, 3
    %p53 = por %p51, %p52
    %p54 = scmp.ne.s32.totalorder %s43, %s44
    %p55 = scmp.eq.s32.totalorder %s14, 0
    %p56 = por %p54, %p55
    %p57 = scmp.ne.s32.totalorder %s43, %s44
    %p58 = scmp.eq.s32.totalorder %s15, 3
    %p59 = por %p57, %p58
    %p61 = scmp.ne.s32.totalorder %s44, %s60
    %p62 = scmp.eq.s32.totalorder %s15, 0
    %p63 = por %p61, %p62
    %s64 = ssub.s32 %s16, %s35
    %s65 = ssub.s32 %s17, %s31
    %s66 = sor.u32 %s64, %s65
    %p67 = scmp.eq.s32.totalorder %s66, 0
    %s69 = sadd.s32 %s68, 1
    %s70 = scalar_select %p67, %s68, %s69
    %p73 = pneg %p67
    %p74 = scmp.eq.s32.totalorder %s9, 3
    %p75 = por %p73, %p74
    %p76 = scmp.ne.s32.totalorder %s68, %s71
    %p77 = scmp.eq.s32.totalorder %s9, 0
    %p78 = por %p76, %p77
    %p79 = scmp.ne.s32.totalorder %s68, %s71
    %p80 = scmp.eq.s32.totalorder %s14, 3
    %p81 = por %p79, %p80
    %p82 = scmp.ne.s32.totalorder %s71, %s72
    %p83 = scmp.eq.s32.totalorder %s14, 0
    %p84 = por %p82, %p83
    %p85 = scmp.ne.s32.totalorder %s71, %s72
    %p86 = scmp.eq.s32.totalorder %s15, 3
    %p87 = por %p85, %p86
    %p89 = scmp.ne.s32.totalorder %s72, %s88
    %p90 = scmp.eq.s32.totalorder %s15, 0
    %p91 = por %p89, %p90
    %s92 = ssub.s32 %s16, %s35
    %s93 = ssub.s32 %s18, %s27
    %s94 = sor.u32 %s92, %s93
    %p95 = scmp.eq.s32.totalorder %s94, 0
    %s97 = sadd.s32 %s96, 1
    %s98 = scalar_select %p95, %s96, %s97
    %p101 = pneg %p95
    %p102 = scmp.eq.s32.totalorder %s9, 3
    %p103 = por %p101, %p102
    %p104 = scmp.ne.s32.totalorder %s96, %s99
    %p105 = scmp.eq.s32.totalorder %s9, 0
    %p106 = por %p104, %p105
    %p107 = scmp.ne.s32.totalorder %s96, %s99
    %p108 = scmp.eq.s32.totalorder %s14, 3
    %p109 = por %p107, %p108
    %p110 = scmp.ne.s32.totalorder %s99, %s100
    %p111 = scmp.eq.s32.totalorder %s14, 0
    %p112 = por %p110, %p111
    %p113 = scmp.ne.s32.totalorder %s99, %s100
    %p114 = scmp.eq.s32.totalorder %s15, 3
    %p115 = por %p113, %p114
    %p117 = scmp.ne.s32.totalorder %s100, %s116
    %p118 = scmp.eq.s32.totalorder %s15, 0
    %p119 = por %p117, %p118
    %s120 = ssub.s32 %s16, %s35
    %s121 = ssub.s32 %s17, %s31
    %s122 = sor.u32 %s120, %s121
    %p123 = scmp.eq.s32.totalorder %s122, 0
    %s125 = sadd.s32 %s124, 1
    %s126 = scalar_select %p123, %s124, %s125
    %p129 = pneg %p123
    %p130 = scmp.eq.s32.totalorder %s9, 3
    %p131 = por %p129, %p130
    %p132 = scmp.ne.s32.totalorder %s124, %s127
    %p133 = scmp.eq.s32.totalorder %s9, 0
    %p134 = por %p132, %p133
    %p135 = scmp.ne.s32.totalorder %s124, %s127
    %p136 = scmp.eq.s32.totalorder %s14, 3
    %p137 = por %p135, %p136
    %p138 = scmp.ne.s32.totalorder %s127, %s128
    %p139 = scmp.eq.s32.totalorder %s14, 0
    %p140 = por %p138, %p139
    %p141 = scmp.ne.s32.totalorder %s127, %s128
    %p142 = scmp.eq.s32.totalorder %s15, 3
    %p143 = por %p141, %p142
    %p145 = scmp.ne.s32.totalorder %s128, %s144
    %p146 = scmp.eq.s32.totalorder %s15, 0
    %p147 = por %p145, %p146
    %p148 = scmp.le.s32.totalorder 1, %s9
    %p149 = scmp.lt.s32.totalorder %s9, 5
    %p150 = pnand %p148, %p149
    %p151 = pneg %p150
    // Predicated region
    $region9: #{run.9} parent=5 // pred_check
      _
    $region10: #{run.9} parent=5 // pred_check_branch
      %153 = sbr.rel (%p150) target = $region12
    $region11: #{run.9} parent=5 // pred_region
      %s154 = ssub.s32 %s9, 1
    $region12: #{run.9} parent=5 // pred_fallthru
      _
    %p155 = scmp.lt.s32.totalorder %s9, 4
    // Predicated region
    $region13: #{run.9} parent=5 // pred_check
      %p156 = pneg %p155
    $region14: #{run.9} parent=5 // pred_check_branch
      %158 = sbr.rel (%p156) target = $region16
    $region15: #{run.9} parent=5 // pred_region
      // Predicated region
      $region17: #{run.9} parent=15 // pred_check
        %p159 = pneg %p50
      $region18: #{run.9} parent=15 // pred_check_branch
        %161 = sbr.rel (%p159) target = $region20
      $region19: #{run.9} parent=15 // pred_region
        %p162 = scmp.lt.s32.totalorder %s16, 3
        %s163 = scalar_select %p162, %s16, 3
        %p164 = scmp.lt.s32.totalorder %s17, 0
        %s165 = scalar_select %p164, %s17, 0
        %s166 = sadd.s32 %s165, %s163
        %s167 = smul.addr %s166, 8
        %s168 = scalar_lea.vmem %s0, %s167
      $region20: #{run.9} parent=15 // pred_fallthru
        _
      // Predicated region
      $region21: #{run.9} parent=15 // pred_check
        %p169 = pneg %p78
      $region22: #{run.9} parent=15 // pred_check_branch
        %171 = sbr.rel (%p169) target = $region24
      $region23: #{run.9} parent=15 // pred_region
        %p172 = scmp.lt.s32.totalorder %s16, 3
        %s173 = scalar_select %p172, %s16, 3
        %p174 = scmp.lt.s32.totalorder %s17, 0
        %s175 = scalar_select %p174, %s17, 0
        %s176 = sadd.s32 %s175, %s173
        %s177 = smul.addr %s176, 8
        %s178 = scalar_lea.vmem %s1, %s177
      $region24: #{run.9} parent=15 // pred_fallthru
        _
      // Predicated region
      $region25: #{run.9} parent=15 // pred_check
        %p179 = pneg %p106
      $region26: #{run.9} parent=15 // pred_check_branch
        %181 = sbr.rel (%p179) target = $region28
      $region27: #{run.9} parent=15 // pred_region
        %s182 = smul.u32 10, %s18
        %p183 = scmp.lt.s32.totalorder %s16, 3
        %s184 = scalar_select %p183, %s16, 3
        %p185 = scmp.lt.s32.totalorder %s182, 9
        %s186 = scalar_select %p185, %s182, 9
        %s187 = smul.addr %s184, 40
        %s188 = sadd.s32 %s186, %s187
        %s189 = smul.addr %s188, 4
        %s190 = scalar_lea.vmem %s2, %s189
        %s191 = smul.u32 10, %s18
      $region28: #{run.9} parent=15 // pred_fallthru
        _
    $region16: #{run.9} parent=5 // pred_fallthru
      _
    %p192 = scmp.le.s32.totalorder 1, %s9
    %p193 = scmp.lt.s32.totalorder %s9, 5
    %p194 = pnand %p192, %p193
    %p195 = pneg %p194
    // Predicated region
    $region29: #{run.9} parent=5 // pred_check
      _
    $region30: #{run.9} parent=5 // pred_check_branch
      %197 = sbr.rel (%p194) target = $region32
    $region31: #{run.9} parent=5 // pred_region
      %s198 = ssub.s32 %s9, 1
      %p199 = scmp.lt.s32.totalorder %s19, 3
      %s200 = scalar_select %p199, %s19, 3
      %p201 = scmp.lt.s32.totalorder %s20, 0
      %s202 = scalar_select %p201, %s20, 0
      %s203 = sadd.s32 %s202, %s200
      %s204 = smul.addr %s203, 8
      %s205 = scalar_lea.vmem %s0, %s204
      %p206 = pneg %p56
      %p207 = pneg %p53
      %p208 = scmp.lt.s32.totalorder %s19, 3
      %s209 = scalar_select %p208, %s19, 3
      %p210 = scmp.lt.s32.totalorder %s20, 0
      %s211 = scalar_select %p210, %s20, 0
      %s212 = sadd.s32 %s211, %s209
      %s213 = smul.addr %s212, 8
      %s214 = scalar_lea.vmem %s1, %s213
      %p215 = pneg %p84
      %p216 = pneg %p81
      %s217 = smul.u32 10, %s21
      %p218 = scmp.lt.s32.totalorder %s19, 3
      %s219 = scalar_select %p218, %s19, 3
      %p220 = scmp.lt.s32.totalorder %s217, 9
      %s221 = scalar_select %p220, %s217, 9
      %s222 = smul.addr %s219, 40
      %s223 = sadd.s32 %s221, %s222
      %s224 = smul.addr %s223, 4
      %s225 = scalar_lea.vmem %s2, %s224
      %p226 = pneg %p112
      %p227 = pneg %p109
      %p228 = pneg %p140
      %p229 = pneg %p137
      %p230 = scmp.lt.s32.totalorder %s19, 3
      %s231 = scalar_select %p230, %s19, 3
      %p232 = scmp.lt.s32.totalorder %s20, 0
      %s233 = scalar_select %p232, %s20, 0
      %s234 = sadd.s32 %s233, %s231
      %s235 = smul.addr %s234, 8
      %s236 = scalar_lea.vmem %s3, %s235
      %p237 = scmp.lt.s32.totalorder %s19, 3
      %s238 = scalar_select %p237, %s19, 3
      %p239 = scmp.lt.s32.totalorder %s20, 0
      %s240 = scalar_select %p239, %s20, 0
      %s241 = sadd.s32 %s240, %s238
      %s242 = smul.addr %s241, 8
      %s243 = scalar_lea.vmem %s0, %s242
      %p244 = scmp.lt.s32.totalorder %s19, 3
      %s245 = scalar_select %p244, %s19, 3
      %p246 = scmp.lt.s32.totalorder %s20, 0
      %s247 = scalar_select %p246, %s20, 0
      %s248 = sadd.s32 %s247, %s245
      %s249 = smul.addr %s248, 8
      %s250 = scalar_lea.vmem %s1, %s249
      %s251 = smul.u32 10, %s21
      %p252 = scmp.lt.s32.totalorder %s19, 3
      %s253 = scalar_select %p252, %s19, 3
      %p254 = scmp.lt.s32.totalorder %s251, 9
      %s255 = scalar_select %p254, %s251, 9
      %s256 = smul.addr %s253, 40
      %s257 = sadd.s32 %s255, %s256
      %s258 = smul.addr %s257, 4
      %s259 = scalar_lea.vmem %s2, %s258
      %s260 = smul.u32 10, %s21
      %p261 = scmp.lt.s32.totalorder %s19, 3
      %s262 = scalar_select %p261, %s19, 3
      %p263 = scmp.lt.s32.totalorder %s20, 0
      %s264 = scalar_select %p263, %s20, 0
      %s265 = sadd.s32 %s264, %s262
      %s266 = smul.addr %s265, 8
      %s267 = scalar_lea.vmem %s3, %s266
      %p269 = scmp.eq.s32.totalorder %s21, 0
      // Predicated region
      $region33: #{run.9} parent=31 // pred_check
        %p270 = pneg %p269
      $region34: #{run.9} parent=31 // pred_check_branch
        %272 = sbr.rel (%p270) target = $region36
      $region35: #{run.9} parent=31 // pred_region
        %vm273 = vcmask 261120
        %274 = vst.msk [vmem:[#allocation2] sm:$0xff] %vm273, 0.0
      $region36: #{run.9} parent=31 // pred_fallthru
        _
      %v275 = vld [vmem:[%s243] sm:$0xff]
      %v276 = vld [vmem:[%s250] sm:$0xff]
      %s277 = smul.u32 %s21, 80
      %v278 = vlaneseq
      %v279 = vand.u32 %v278, 127
      %v280 = vstv %s277
      %v281 = vadd.s32 %v279, %v280
      %282 = vset.pattern.permute.xlu0 0
      %283 = vperm.xlu0 %282, %v275
      %v284 = vpop.permute.xlu0 %283
      %vm285 = vcmp.eq.s32.totalorder %v284, %v281
      %287 = vset.pattern.permute.xlu0 0
      %288 = vperm.xlu0 %287, %v276
      %v289 = vpop.permute.xlu0 %288
      %v291 = vsel %vm285, %v289, 0.0
      %v292 = vadd.f32 %v291, 0.0
      %293 = vset.pattern.permute.xlu0 1
      %294 = vperm.xlu0 %293, %v275
      %v295 = vpop.permute.xlu0 %294
      %vm296 = vcmp.eq.s32.totalorder %v295, %v281
      %297 = vset.pattern.permute.xlu0 1
      %298 = vperm.xlu0 %297, %v276
      %v299 = vpop.permute.xlu0 %298
      %v301 = vsel %vm296, %v299, 0.0
      %v302 = vadd.f32 %v292, %v301
      %303 = vset.pattern.permute.xlu0 2
      %304 = vperm.xlu0 %303, %v275
      %v305 = vpop.permute.xlu0 %304
      %vm306 = vcmp.eq.s32.totalorder %v305, %v281
      %307 = vset.pattern.permute.xlu0 2
      %308 = vperm.xlu0 %307, %v276
      %v309 = vpop.permute.xlu0 %308
      %v311 = vsel %vm306, %v309, 0.0
      %v312 = vadd.f32 %v302, %v311
      %313 = vset.pattern.permute.xlu0 3
      %314 = vperm.xlu0 %313, %v275
      %v315 = vpop.permute.xlu0 %314
      %vm316 = vcmp.eq.s32.totalorder %v315, %v281
      %317 = vset.pattern.permute.xlu0 3
      %318 = vperm.xlu0 %317, %v276
      %v319 = vpop.permute.xlu0 %318
      %v321 = vsel %vm316, %v319, 0.0
      %v322 = vadd.f32 %v312, %v321
      %323 = vset.pattern.permute.xlu0 4
      %324 = vperm.xlu0 %323, %v275
      %v325 = vpop.permute.xlu0 %324
      %vm326 = vcmp.eq.s32.totalorder %v325, %v281
      %327 = vset.pattern.permute.xlu0 4
      %328 = vperm.xlu0 %327, %v276
      %v329 = vpop.permute.xlu0 %328
      %v331 = vsel %vm326, %v329, 0.0
      %v332 = vadd.f32 %v322, %v331
      %333 = vset.pattern.permute.xlu0 5
      %334 = vperm.xlu0 %333, %v275
      %v335 = vpop.permute.xlu0 %334
      %vm336 = vcmp.eq.s32.totalorder %v335, %v281
      %337 = vset.pattern.permute.xlu0 5
      %338 = vperm.xlu0 %337, %v276
      %v339 = vpop.permute.xlu0 %338
      %v341 = vsel %vm336, %v339, 0.0
      %v342 = vadd.f32 %v332, %v341
      %343 = vset.pattern.permute.xlu0 6
      %344 = vperm.xlu0 %343, %v275
      %v345 = vpop.permute.xlu0 %344
      %vm346 = vcmp.eq.s32.totalorder %v345, %v281
      %347 = vset.pattern.permute.xlu0 6
      %348 = vperm.xlu0 %347, %v276
      %v349 = vpop.permute.xlu0 %348
      %v351 = vsel %vm346, %v349, 0.0
      %v352 = vadd.f32 %v342, %v351
      %353 = vset.pattern.permute.xlu0 7
      %354 = vperm.xlu0 %353, %v275
      %v355 = vpop.permute.xlu0 %354
      %vm356 = vcmp.eq.s32.totalorder %v355, %v281
      %357 = vset.pattern.permute.xlu0 7
      %358 = vperm.xlu0 %357, %v276
      %v359 = vpop.permute.xlu0 %358
      %v361 = vsel %vm356, %v359, 0.0
      %v362 = vadd.f32 %v352, %v361
      %363 = vset.pattern.permute.xlu0 8
      %364 = vperm.xlu0 %363, %v275
      %v365 = vpop.permute.xlu0 %364
      %vm366 = vcmp.eq.s32.totalorder %v365, %v281
      %367 = vset.pattern.permute.xlu0 8
      %368 = vperm.xlu0 %367, %v276
      %v369 = vpop.permute.xlu0 %368
      %v371 = vsel %vm366, %v369, 0.0
      %v372 = vadd.f32 %v362, %v371
      %373 = vset.pattern.permute.xlu0 9
      %374 = vperm.xlu0 %373, %v275
      %v375 = vpop.permute.xlu0 %374
      %vm376 = vcmp.eq.s32.totalorder %v375, %v281
      %377 = vset.pattern.permute.xlu0 9
      %378 = vperm.xlu0 %377, %v276
      %v379 = vpop.permute.xlu0 %378
      %v381 = vsel %vm376, %v379, 0.0
      %v382 = vadd.f32 %v372, %v381
      %383 = vset.pattern.permute.xlu0 10
      %384 = vperm.xlu0 %383, %v275
      %v385 = vpop.permute.xlu0 %384
      %vm386 = vcmp.eq.s32.totalorder %v385, %v281
      %387 = vset.pattern.permute.xlu0 10
      %388 = vperm.xlu0 %387, %v276
      %v389 = vpop.permute.xlu0 %388
      %v391 = vsel %vm386, %v389, 0.0
      %v392 = vadd.f32 %v382, %v391
      %393 = vset.pattern.permute.xlu0 11
      %394 = vperm.xlu0 %393, %v275
      %v395 = vpop.permute.xlu0 %394
      %vm396 = vcmp.eq.s32.totalorder %v395, %v281
      %397 = vset.pattern.permute.xlu0 11
      %398 = vperm.xlu0 %397, %v276
      %v399 = vpop.permute.xlu0 %398
      %v401 = vsel %vm396, %v399, 0.0
      %v402 = vadd.f32 %v392, %v401
      %403 = vset.pattern.permute.xlu0 12
      %404 = vperm.xlu0 %403, %v275
      %v405 = vpop.permute.xlu0 %404
      %vm406 = vcmp.eq.s32.totalorder %v405, %v281
      %407 = vset.pattern.permute.xlu0 12
      %408 = vperm.xlu0 %407, %v276
      %v409 = vpop.permute.xlu0 %408
      %v411 = vsel %vm406, %v409, 0.0
      %v412 = vadd.f32 %v402, %v411
      %413 = vset.pattern.permute.xlu0 13
      %414 = vperm.xlu0 %413, %v275
      %v415 = vpop.permute.xlu0 %414
      %vm416 = vcmp.eq.s32.totalorder %v415, %v281
      %417 = vset.pattern.permute.xlu0 13
      %418 = vperm.xlu0 %417, %v276
      %v419 = vpop.permute.xlu0 %418
      %v421 = vsel %vm416, %v419, 0.0
      %v422 = vadd.f32 %v412, %v421
      %423 = vset.pattern.permute.xlu0 14
      %424 = vperm.xlu0 %423, %v275
      %v425 = vpop.permute.xlu0 %424
      %vm426 = vcmp.eq.s32.totalorder %v425, %v281
      %427 = vset.pattern.permute.xlu0 14
      %428 = vperm.xlu0 %427, %v276
      %v429 = vpop.permute.xlu0 %428
      %v431 = vsel %vm426, %v429, 0.0
      %v432 = vadd.f32 %v422, %v431
      %433 = vset.pattern.permute.xlu0 15
      %434 = vperm.xlu0 %433, %v275
      %v435 = vpop.permute.xlu0 %434
      %vm436 = vcmp.eq.s32.totalorder %v435, %v281
      %437 = vset.pattern.permute.xlu0 15
      %438 = vperm.xlu0 %437, %v276
      %v439 = vpop.permute.xlu0 %438
      %v441 = vsel %vm436, %v439, 0.0
      %v442 = vadd.f32 %v432, %v441
      %443 = vset.pattern.permute.xlu0 16
      %444 = vperm.xlu0 %443, %v275
      %v445 = vpop.permute.xlu0 %444
      %vm446 = vcmp.eq.s32.totalorder %v445, %v281
      %447 = vset.pattern.permute.xlu0 16
      %448 = vperm.xlu0 %447, %v276
      %v449 = vpop.permute.xlu0 %448
      %v451 = vsel %vm446, %v449, 0.0
      %v452 = vadd.f32 %v442, %v451
      %453 = vset.pattern.permute.xlu0 17
      %454 = vperm.xlu0 %453, %v275
      %v455 = vpop.permute.xlu0 %454
      %vm456 = vcmp.eq.s32.totalorder %v455, %v281
      %457 = vset.pattern.permute.xlu0 17
      %458 = vperm.xlu0 %457, %v276
      %v459 = vpop.permute.xlu0 %458
      %v461 = vsel %vm456, %v459, 0.0
      %v462 = vadd.f32 %v452, %v461
      %463 = vset.pattern.permute.xlu0 18
      %464 = vperm.xlu0 %463, %v275
      %v465 = vpop.permute.xlu0 %464
      %vm466 = vcmp.eq.s32.totalorder %v465, %v281
      %467 = vset.pattern.permute.xlu0 18
      %468 = vperm.xlu0 %467, %v276
      %v469 = vpop.permute.xlu0 %468
      %v471 = vsel %vm466, %v469, 0.0
      %v472 = vadd.f32 %v462, %v471
      %473 = vset.pattern.permute.xlu0 19
      %474 = vperm.xlu0 %473, %v275
      %v475 = vpop.permute.xlu0 %474
      %vm476 = vcmp.eq.s32.totalorder %v475, %v281
      %477 = vset.pattern.permute.xlu0 19
      %478 = vperm.xlu0 %477, %v276
      %v479 = vpop.permute.xlu0 %478
      %v481 = vsel %vm476, %v479, 0.0
      %v482 = vadd.f32 %v472, %v481
      %483 = vset.pattern.permute.xlu0 20
      %484 = vperm.xlu0 %483, %v275
      %v485 = vpop.permute.xlu0 %484
      %vm486 = vcmp.eq.s32.totalorder %v485, %v281
      %487 = vset.pattern.permute.xlu0 20
      %488 = vperm.xlu0 %487, %v276
      %v489 = vpop.permute.xlu0 %488
      %v491 = vsel %vm486, %v489, 0.0
      %v492 = vadd.f32 %v482, %v491
      %493 = vset.pattern.permute.xlu0 21
      %494 = vperm.xlu0 %493, %v275
      %v495 = vpop.permute.xlu0 %494
      %vm496 = vcmp.eq.s32.totalorder %v495, %v281
      %497 = vset.pattern.permute.xlu0 21
      %498 = vperm.xlu0 %497, %v276
      %v499 = vpop.permute.xlu0 %498
      %v501 = vsel %vm496, %v499, 0.0
      %v502 = vadd.f32 %v492, %v501
      %503 = vset.pattern.permute.xlu0 22
      %504 = vperm.xlu0 %503, %v275
      %v505 = vpop.permute.xlu0 %504
      %vm506 = vcmp.eq.s32.totalorder %v505, %v281
      %507 = vset.pattern.permute.xlu0 22
      %508 = vperm.xlu0 %507, %v276
      %v509 = vpop.permute.xlu0 %508
      %v511 = vsel %vm506, %v509, 0.0
      %v512 = vadd.f32 %v502, %v511
      %513 = vset.pattern.permute.xlu0 23
      %514 = vperm.xlu0 %513, %v275
      %v515 = vpop.permute.xlu0 %514
      %vm516 = vcmp.eq.s32.totalorder %v515, %v281
      %517 = vset.pattern.permute.xlu0 23
      %518 = vperm.xlu0 %517, %v276
      %v519 = vpop.permute.xlu0 %518
      %v521 = vsel %vm516, %v519, 0.0
      %v522 = vadd.f32 %v512, %v521
      %523 = vset.pattern.permute.xlu0 24
      %524 = vperm.xlu0 %523, %v275
      %v525 = vpop.permute.xlu0 %524
      %vm526 = vcmp.eq.s32.totalorder %v525, %v281
      %527 = vset.pattern.permute.xlu0 24
      %528 = vperm.xlu0 %527, %v276
      %v529 = vpop.permute.xlu0 %528
      %v531 = vsel %vm526, %v529, 0.0
      %v532 = vadd.f32 %v522, %v531
      %533 = vset.pattern.permute.xlu0 25
      %534 = vperm.xlu0 %533, %v275
      %v535 = vpop.permute.xlu0 %534
      %vm536 = vcmp.eq.s32.totalorder %v535, %v281
      %537 = vset.pattern.permute.xlu0 25
      %538 = vperm.xlu0 %537, %v276
      %v539 = vpop.permute.xlu0 %538
      %v541 = vsel %vm536, %v539, 0.0
      %v542 = vadd.f32 %v532, %v541
      %543 = vset.pattern.permute.xlu0 26
      %544 = vperm.xlu0 %543, %v275
      %v545 = vpop.permute.xlu0 %544
      %vm546 = vcmp.eq.s32.totalorder %v545, %v281
      %547 = vset.pattern.permute.xlu0 26
      %548 = vperm.xlu0 %547, %v276
      %v549 = vpop.permute.xlu0 %548
      %v551 = vsel %vm546, %v549, 0.0
      %v552 = vadd.f32 %v542, %v551
      %553 = vset.pattern.permute.xlu0 27
      %554 = vperm.xlu0 %553, %v275
      %v555 = vpop.permute.xlu0 %554
      %vm556 = vcmp.eq.s32.totalorder %v555, %v281
      %557 = vset.pattern.permute.xlu0 27
      %558 = vperm.xlu0 %557, %v276
      %v559 = vpop.permute.xlu0 %558
      %v561 = vsel %vm556, %v559, 0.0
      %v562 = vadd.f32 %v552, %v561
      %563 = vset.pattern.permute.xlu0 28
      %564 = vperm.xlu0 %563, %v275
      %v565 = vpop.permute.xlu0 %564
      %vm566 = vcmp.eq.s32.totalorder %v565, %v281
      %567 = vset.pattern.permute.xlu0 28
      %568 = vperm.xlu0 %567, %v276
      %v569 = vpop.permute.xlu0 %568
      %v571 = vsel %vm566, %v569, 0.0
      %v572 = vadd.f32 %v562, %v571
      %573 = vset.pattern.permute.xlu0 29
      %574 = vperm.xlu0 %573, %v275
      %v575 = vpop.permute.xlu0 %574
      %vm576 = vcmp.eq.s32.totalorder %v575, %v281
      %577 = vset.pattern.permute.xlu0 29
      %578 = vperm.xlu0 %577, %v276
      %v579 = vpop.permute.xlu0 %578
      %v581 = vsel %vm576, %v579, 0.0
      %v582 = vadd.f32 %v572, %v581
      %583 = vset.pattern.permute.xlu0 30
      %584 = vperm.xlu0 %583, %v275
      %v585 = vpop.permute.xlu0 %584
      %vm586 = vcmp.eq.s32.totalorder %v585, %v281
      %587 = vset.pattern.permute.xlu0 30
      %588 = vperm.xlu0 %587, %v276
      %v589 = vpop.permute.xlu0 %588
      %v591 = vsel %vm586, %v589, 0.0
      %v592 = vadd.f32 %v582, %v591
      %593 = vset.pattern.permute.xlu0 31
      %594 = vperm.xlu0 %593, %v275
      %v595 = vpop.permute.xlu0 %594
      %vm596 = vcmp.eq.s32.totalorder %v595, %v281
      %597 = vset.pattern.permute.xlu0 31
      %598 = vperm.xlu0 %597, %v276
      %v599 = vpop.permute.xlu0 %598
      %v601 = vsel %vm596, %v599, 0.0
      %v602 = vadd.f32 %v592, %v601
      %v603 = vld [vmem:[%s259] sm:$0xf]
      %v604 = vld [vmem:[%s259 + $0x4] sm:$0xf]
      %v605 = vld [vmem:[%s259 + $0x8] sm:$0xf]
      %v606 = vld [vmem:[%s259 + $0xc] sm:$0xf]
      %v607 = vld [vmem:[%s259 + $0x10] sm:$0xf]
      %v608 = vld [vmem:[%s259 + $0x14] sm:$0xf]
      %v609 = vld [vmem:[%s259 + $0x18] sm:$0xf]
      %v610 = vld [vmem:[%s259 + $0x1c] sm:$0xf]
      %v611 = vld [vmem:[%s259 + $0x20] sm:$0xf]
      %v612 = vld [vmem:[%s259 + $0x24] sm:$0xf]
      %v613 = vpack.c.bf16 %v602, %v602
      %v624 = vunpack.c.l.b16 %v603
      %v625 = vunpack.c.l.b16 %v604
      %v626 = vunpack.c.l.b16 %v605
      %v627 = vunpack.c.l.b16 %v606
      %v628 = vunpack.c.l.b16 %v607
      %v629 = vunpack.c.l.b16 %v608
      %v630 = vunpack.c.l.b16 %v609
      %v631 = vunpack.c.l.b16 %v610
      %v632 = vunpack.c.l.b16 %v611
      %v633 = vunpack.c.l.b16 %v612
      %v634 = vpack.c.b16 %v625, %v624
      %v635 = vpack.c.b16 %v627, %v626
      %v636 = vpack.c.b16 %v629, %v628
      %v637 = vpack.c.b16 %v631, %v630
      %v638 = vpack.c.b16 %v633, %v632
      %vm644 = vcmask 654336
      %v646 = vsel %vm644, %v613, 0
      %648 = vmatprep.subr.bf16.mxu0 0
      %649 = vmatpush1.bf16.msra.mxu0 %v634
      %650 = vmatprep.subr.bf16.mxu0 0
      %651 = vmatpush1.bf16.msra.mxu0 %v635
      %652 = vmatprep.subr.bf16.mxu0 0
      %653 = vmatpush1.bf16.msra.mxu0 %v636
      %654 = vmatprep.subr.bf16.mxu0 0
      %655 = vmatpush1.bf16.msra.mxu0 %v637
      %656 = vmatprep.subr.bf16.mxu0 0
      %657 = vmatpush1.bf16.msra.mxu0 %v638
      %658 = vmatprep.subr.bf16.mxu0 0
      %659 = vmatpush1.bf16.msra.mxu0 0
      %660 = vmatprep.subr.bf16.mxu0 0
      %661 = vmatpush1.bf16.msra.mxu0 0
      %662 = vmatprep.subr.bf16.mxu0 0
      %663 = vmatpush1.bf16.msra.mxu0 0
      %664 = vmatprep.subr.bf16.mxu0 0
      %665 = vmatpush1.bf16.msra.mxu0 0
      %666 = vmatprep.subr.bf16.mxu0 0
      %667 = vmatpush1.bf16.msra.mxu0 0
      %668 = vmatprep.subr.bf16.mxu0 0
      %669 = vmatpush1.bf16.msra.mxu0 0
      %670 = vmatprep.subr.bf16.mxu0 0
      %671 = vmatpush1.bf16.msra.mxu0 0
      %672 = vmatprep.subr.bf16.mxu0 0
      %673 = vmatpush1.bf16.msra.mxu0 0
      %674 = vmatprep.subr.bf16.mxu0 0
      %675 = vmatpush1.bf16.msra.mxu0 0
      %676 = vmatprep.subr.bf16.mxu0 0
      %677 = vmatpush1.bf16.msra.mxu0 0
      %678 = vmatprep.subr.bf16.mxu0 0
      %679 = vmatpush1.bf16.msra.mxu0 0
      %680 = vmatprep.mubr.bf16.mxu0 0
      %681 = vmatmul.mubr.bf16.gmra.mrb[0].mxu0 %v646
      %v682 = vpop.f32.mrb[0].mxu0
      %v683 = vadd.f32 0.0, %v682
      %v684 = vpop.f32.mrb[0].mxu0
      %v685 = vpop.f32.mrb[0].mxu0
      %v686 = vpop.f32.mrb[0].mxu0
      %687 = vdwg.mxu0
      %688 = vset.pattern.permute.xlu0 32
      %689 = vperm.xlu0 %688, %v275
      %v690 = vpop.permute.xlu0 %689
      %vm691 = vcmp.eq.s32.totalorder %v690, %v281
      %692 = vset.pattern.permute.xlu0 32
      %693 = vperm.xlu0 %692, %v276
      %v694 = vpop.permute.xlu0 %693
      %v696 = vsel %vm691, %v694, 0.0
      %v697 = vadd.f32 %v696, 0.0
      %698 = vset.pattern.permute.xlu0 33
      %699 = vperm.xlu0 %698, %v275
      %v700 = vpop.permute.xlu0 %699
      %vm701 = vcmp.eq.s32.totalorder %v700, %v281
      %702 = vset.pattern.permute.xlu0 33
      %703 = vperm.xlu0 %702, %v276
      %v704 = vpop.permute.xlu0 %703
      %v706 = vsel %vm701, %v704, 0.0
      %v707 = vadd.f32 %v697, %v706
      %708 = vset.pattern.permute.xlu0 34
      %709 = vperm.xlu0 %708, %v275
      %v710 = vpop.permute.xlu0 %709
      %vm711 = vcmp.eq.s32.totalorder %v710, %v281
      %712 = vset.pattern.permute.xlu0 34
      %713 = vperm.xlu0 %712, %v276
      %v714 = vpop.permute.xlu0 %713
      %v716 = vsel %vm711, %v714, 0.0
      %v717 = vadd.f32 %v707, %v716
      %718 = vset.pattern.permute.xlu0 35
      %719 = vperm.xlu0 %718, %v275
      %v720 = vpop.permute.xlu0 %719
      %vm721 = vcmp.eq.s32.totalorder %v720, %v281
      %722 = vset.pattern.permute.xlu0 35
      %723 = vperm.xlu0 %722, %v276
      %v724 = vpop.permute.xlu0 %723
      %v726 = vsel %vm721, %v724, 0.0
      %v727 = vadd.f32 %v717, %v726
      %728 = vset.pattern.permute.xlu0 36
      %729 = vperm.xlu0 %728, %v275
      %v730 = vpop.permute.xlu0 %729
      %vm731 = vcmp.eq.s32.totalorder %v730, %v281
      %732 = vset.pattern.permute.xlu0 36
      %733 = vperm.xlu0 %732, %v276
      %v734 = vpop.permute.xlu0 %733
      %v736 = vsel %vm731, %v734, 0.0
      %v737 = vadd.f32 %v727, %v736
      %738 = vset.pattern.permute.xlu0 37
      %739 = vperm.xlu0 %738, %v275
      %v740 = vpop.permute.xlu0 %739
      %vm741 = vcmp.eq.s32.totalorder %v740, %v281
      %742 = vset.pattern.permute.xlu0 37
      %743 = vperm.xlu0 %742, %v276
      %v744 = vpop.permute.xlu0 %743
      %v746 = vsel %vm741, %v744, 0.0
      %v747 = vadd.f32 %v737, %v746
      %748 = vset.pattern.permute.xlu0 38
      %749 = vperm.xlu0 %748, %v275
      %v750 = vpop.permute.xlu0 %749
      %vm751 = vcmp.eq.s32.totalorder %v750, %v281
      %752 = vset.pattern.permute.xlu0 38
      %753 = vperm.xlu0 %752, %v276
      %v754 = vpop.permute.xlu0 %753
      %v756 = vsel %vm751, %v754, 0.0
      %v757 = vadd.f32 %v747, %v756
      %758 = vset.pattern.permute.xlu0 39
      %759 = vperm.xlu0 %758, %v275
      %v760 = vpop.permute.xlu0 %759
      %vm761 = vcmp.eq.s32.totalorder %v760, %v281
      %762 = vset.pattern.permute.xlu0 39
      %763 = vperm.xlu0 %762, %v276
      %v764 = vpop.permute.xlu0 %763
      %v766 = vsel %vm761, %v764, 0.0
      %v767 = vadd.f32 %v757, %v766
      %768 = vset.pattern.permute.xlu0 40
      %769 = vperm.xlu0 %768, %v275
      %v770 = vpop.permute.xlu0 %769
      %vm771 = vcmp.eq.s32.totalorder %v770, %v281
      %772 = vset.pattern.permute.xlu0 40
      %773 = vperm.xlu0 %772, %v276
      %v774 = vpop.permute.xlu0 %773
      %v776 = vsel %vm771, %v774, 0.0
      %v777 = vadd.f32 %v767, %v776
      %778 = vset.pattern.permute.xlu0 41
      %779 = vperm.xlu0 %778, %v275
      %v780 = vpop.permute.xlu0 %779
      %vm781 = vcmp.eq.s32.totalorder %v780, %v281
      %782 = vset.pattern.permute.xlu0 41
      %783 = vperm.xlu0 %782, %v276
      %v784 = vpop.permute.xlu0 %783
      %v786 = vsel %vm781, %v784, 0.0
      %v787 = vadd.f32 %v777, %v786
      %788 = vset.pattern.permute.xlu0 42
      %789 = vperm.xlu0 %788, %v275
      %v790 = vpop.permute.xlu0 %789
      %vm791 = vcmp.eq.s32.totalorder %v790, %v281
      %792 = vset.pattern.permute.xlu0 42
      %793 = vperm.xlu0 %792, %v276
      %v794 = vpop.permute.xlu0 %793
      %v796 = vsel %vm791, %v794, 0.0
      %v797 = vadd.f32 %v787, %v796
      %798 = vset.pattern.permute.xlu0 43
      %799 = vperm.xlu0 %798, %v275
      %v800 = vpop.permute.xlu0 %799
      %vm801 = vcmp.eq.s32.totalorder %v800, %v281
      %802 = vset.pattern.permute.xlu0 43
      %803 = vperm.xlu0 %802, %v276
      %v804 = vpop.permute.xlu0 %803
      %v806 = vsel %vm801, %v804, 0.0
      %v807 = vadd.f32 %v797, %v806
      %808 = vset.pattern.permute.xlu0 44
      %809 = vperm.xlu0 %808, %v275
      %v810 = vpop.permute.xlu0 %809
      %vm811 = vcmp.eq.s32.totalorder %v810, %v281
      %812 = vset.pattern.permute.xlu0 44
      %813 = vperm.xlu0 %812, %v276
      %v814 = vpop.permute.xlu0 %813
      %v816 = vsel %vm811, %v814, 0.0
      %v817 = vadd.f32 %v807, %v816
      %818 = vset.pattern.permute.xlu0 45
      %819 = vperm.xlu0 %818, %v275
      %v820 = vpop.permute.xlu0 %819
      %vm821 = vcmp.eq.s32.totalorder %v820, %v281
      %822 = vset.pattern.permute.xlu0 45
      %823 = vperm.xlu0 %822, %v276
      %v824 = vpop.permute.xlu0 %823
      %v826 = vsel %vm821, %v824, 0.0
      %v827 = vadd.f32 %v817, %v826
      %828 = vset.pattern.permute.xlu0 46
      %829 = vperm.xlu0 %828, %v275
      %v830 = vpop.permute.xlu0 %829
      %vm831 = vcmp.eq.s32.totalorder %v830, %v281
      %832 = vset.pattern.permute.xlu0 46
      %833 = vperm.xlu0 %832, %v276
      %v834 = vpop.permute.xlu0 %833
      %v836 = vsel %vm831, %v834, 0.0
      %v837 = vadd.f32 %v827, %v836
      %838 = vset.pattern.permute.xlu0 47
      %839 = vperm.xlu0 %838, %v275
      %v840 = vpop.permute.xlu0 %839
      %vm841 = vcmp.eq.s32.totalorder %v840, %v281
      %842 = vset.pattern.permute.xlu0 47
      %843 = vperm.xlu0 %842, %v276
      %v844 = vpop.permute.xlu0 %843
      %v846 = vsel %vm841, %v844, 0.0
      %v847 = vadd.f32 %v837, %v846
      %848 = vset.pattern.permute.xlu0 48
      %849 = vperm.xlu0 %848, %v275
      %v850 = vpop.permute.xlu0 %849
      %vm851 = vcmp.eq.s32.totalorder %v850, %v281
      %852 = vset.pattern.permute.xlu0 48
      %853 = vperm.xlu0 %852, %v276
      %v854 = vpop.permute.xlu0 %853
      %v856 = vsel %vm851, %v854, 0.0
      %v857 = vadd.f32 %v847, %v856
      %858 = vset.pattern.permute.xlu0 49
      %859 = vperm.xlu0 %858, %v275
      %v860 = vpop.permute.xlu0 %859
      %vm861 = vcmp.eq.s32.totalorder %v860, %v281
      %862 = vset.pattern.permute.xlu0 49
      %863 = vperm.xlu0 %862, %v276
      %v864 = vpop.permute.xlu0 %863
      %v866 = vsel %vm861, %v864, 0.0
      %v867 = vadd.f32 %v857, %v866
      %868 = vset.pattern.permute.xlu0 50
      %869 = vperm.xlu0 %868, %v275
      %v870 = vpop.permute.xlu0 %869
      %vm871 = vcmp.eq.s32.totalorder %v870, %v281
      %872 = vset.pattern.permute.xlu0 50
      %873 = vperm.xlu0 %872, %v276
      %v874 = vpop.permute.xlu0 %873
      %v876 = vsel %vm871, %v874, 0.0
      %v877 = vadd.f32 %v867, %v876
      %878 = vset.pattern.permute.xlu0 51
      %879 = vperm.xlu0 %878, %v275
      %v880 = vpop.permute.xlu0 %879
      %vm881 = vcmp.eq.s32.totalorder %v880, %v281
      %882 = vset.pattern.permute.xlu0 51
      %883 = vperm.xlu0 %882, %v276
      %v884 = vpop.permute.xlu0 %883
      %v886 = vsel %vm881, %v884, 0.0
      %v887 = vadd.f32 %v877, %v886
      %888 = vset.pattern.permute.xlu0 52
      %889 = vperm.xlu0 %888, %v275
      %v890 = vpop.permute.xlu0 %889
      %vm891 = vcmp.eq.s32.totalorder %v890, %v281
      %892 = vset.pattern.permute.xlu0 52
      %893 = vperm.xlu0 %892, %v276
      %v894 = vpop.permute.xlu0 %893
      %v896 = vsel %vm891, %v894, 0.0
      %v897 = vadd.f32 %v887, %v896
      %898 = vset.pattern.permute.xlu0 53
      %899 = vperm.xlu0 %898, %v275
      %v900 = vpop.permute.xlu0 %899
      %vm901 = vcmp.eq.s32.totalorder %v900, %v281
      %902 = vset.pattern.permute.xlu0 53
      %903 = vperm.xlu0 %902, %v276
      %v904 = vpop.permute.xlu0 %903
      %v906 = vsel %vm901, %v904, 0.0
      %v907 = vadd.f32 %v897, %v906
      %908 = vset.pattern.permute.xlu0 54
      %909 = vperm.xlu0 %908, %v275
      %v910 = vpop.permute.xlu0 %909
      %vm911 = vcmp.eq.s32.totalorder %v910, %v281
      %912 = vset.pattern.permute.xlu0 54
      %913 = vperm.xlu0 %912, %v276
      %v914 = vpop.permute.xlu0 %913
      %v916 = vsel %vm911, %v914, 0.0
      %v917 = vadd.f32 %v907, %v916
      %918 = vset.pattern.permute.xlu0 55
      %919 = vperm.xlu0 %918, %v275
      %v920 = vpop.permute.xlu0 %919
      %vm921 = vcmp.eq.s32.totalorder %v920, %v281
      %922 = vset.pattern.permute.xlu0 55
      %923 = vperm.xlu0 %922, %v276
      %v924 = vpop.permute.xlu0 %923
      %v926 = vsel %vm921, %v924, 0.0
      %v927 = vadd.f32 %v917, %v926
      %928 = vset.pattern.permute.xlu0 56
      %929 = vperm.xlu0 %928, %v275
      %v930 = vpop.permute.xlu0 %929
      %vm931 = vcmp.eq.s32.totalorder %v930, %v281
      %932 = vset.pattern.permute.xlu0 56
      %933 = vperm.xlu0 %932, %v276
      %v934 = vpop.permute.xlu0 %933
      %v936 = vsel %vm931, %v934, 0.0
      %v937 = vadd.f32 %v927, %v936
      %938 = vset.pattern.permute.xlu0 57
      %939 = vperm.xlu0 %938, %v275
      %v940 = vpop.permute.xlu0 %939
      %vm941 = vcmp.eq.s32.totalorder %v940, %v281
      %942 = vset.pattern.permute.xlu0 57
      %943 = vperm.xlu0 %942, %v276
      %v944 = vpop.permute.xlu0 %943
      %v946 = vsel %vm941, %v944, 0.0
      %v947 = vadd.f32 %v937, %v946
      %948 = vset.pattern.permute.xlu0 58
      %949 = vperm.xlu0 %948, %v275
      %v950 = vpop.permute.xlu0 %949
      %vm951 = vcmp.eq.s32.totalorder %v950, %v281
      %952 = vset.pattern.permute.xlu0 58
      %953 = vperm.xlu0 %952, %v276
      %v954 = vpop.permute.xlu0 %953
      %v956 = vsel %vm951, %v954, 0.0
      %v957 = vadd.f32 %v947, %v956
      %958 = vset.pattern.permute.xlu0 59
      %959 = vperm.xlu0 %958, %v275
      %v960 = vpop.permute.xlu0 %959
      %vm961 = vcmp.eq.s32.totalorder %v960, %v281
      %962 = vset.pattern.permute.xlu0 59
      %963 = vperm.xlu0 %962, %v276
      %v964 = vpop.permute.xlu0 %963
      %v966 = vsel %vm961, %v964, 0.0
      %v967 = vadd.f32 %v957, %v966
      %968 = vset.pattern.permute.xlu0 60
      %969 = vperm.xlu0 %968, %v275
      %v970 = vpop.permute.xlu0 %969
      %vm971 = vcmp.eq.s32.totalorder %v970, %v281
      %972 = vset.pattern.permute.xlu0 60
      %973 = vperm.xlu0 %972, %v276
      %v974 = vpop.permute.xlu0 %973
      %v976 = vsel %vm971, %v974, 0.0
      %v977 = vadd.f32 %v967, %v976
      %978 = vset.pattern.permute.xlu0 61
      %979 = vperm.xlu0 %978, %v275
      %v980 = vpop.permute.xlu0 %979
      %vm981 = vcmp.eq.s32.totalorder %v980, %v281
      %982 = vset.pattern.permute.xlu0 61
      %983 = vperm.xlu0 %982, %v276
      %v984 = vpop.permute.xlu0 %983
      %v986 = vsel %vm981, %v984, 0.0
      %v987 = vadd.f32 %v977, %v986
      %988 = vset.pattern.permute.xlu0 62
      %989 = vperm.xlu0 %988, %v275
      %v990 = vpop.permute.xlu0 %989
      %vm991 = vcmp.eq.s32.totalorder %v990, %v281
      %992 = vset.pattern.permute.xlu0 62
      %993 = vperm.xlu0 %992, %v276
      %v994 = vpop.permute.xlu0 %993
      %v996 = vsel %vm991, %v994, 0.0
      %v997 = vadd.f32 %v987, %v996
      %998 = vset.pattern.permute.xlu0 63
      %999 = vperm.xlu0 %998, %v275
      %v1000 = vpop.permute.xlu0 %999
      %vm1001 = vcmp.eq.s32.totalorder %v1000, %v281
      %1002 = vset.pattern.permute.xlu0 63
      %1003 = vperm.xlu0 %1002, %v276
      %v1004 = vpop.permute.xlu0 %1003
      %v1006 = vsel %vm1001, %v1004, 0.0
      %v1007 = vadd.f32 %v997, %v1006
      %s1008 = scalar_lea.vmem %s259, 40
      %v1009 = vld [vmem:[%s1008] sm:$0xf]
      %v1010 = vld [vmem:[%s1008 + $0x4] sm:$0xf]
      %v1011 = vld [vmem:[%s1008 + $0x8] sm:$0xf]
      %v1012 = vld [vmem:[%s1008 + $0xc] sm:$0xf]
      %v1013 = vld [vmem:[%s1008 + $0x10] sm:$0xf]
      %v1014 = vld [vmem:[%s1008 + $0x14] sm:$0xf]
      %v1015 = vld [vmem:[%s1008 + $0x18] sm:$0xf]
      %v1016 = vld [vmem:[%s1008 + $0x1c] sm:$0xf]
      %v1017 = vld [vmem:[%s1008 + $0x20] sm:$0xf]
      %v1018 = vld [vmem:[%s1008 + $0x24] sm:$0xf]
      %v1019 = vpack.c.bf16 %v1007, %v1007
      %v1030 = vunpack.c.l.b16 %v1009
      %v1031 = vunpack.c.l.b16 %v1010
      %v1032 = vunpack.c.l.b16 %v1011
      %v1033 = vunpack.c.l.b16 %v1012
      %v1034 = vunpack.c.l.b16 %v1013
      %v1035 = vunpack.c.l.b16 %v1014
      %v1036 = vunpack.c.l.b16 %v1015
      %v1037 = vunpack.c.l.b16 %v1016
      %v1038 = vunpack.c.l.b16 %v1017
      %v1039 = vunpack.c.l.b16 %v1018
      %v1040 = vpack.c.b16 %v1031, %v1030
      %v1041 = vpack.c.b16 %v1033, %v1032
      %v1042 = vpack.c.b16 %v1035, %v1034
      %v1043 = vpack.c.b16 %v1037, %v1036
      %v1044 = vpack.c.b16 %v1039, %v1038
      %v1051 = vsel %vm644, %v1019, 0
      %1053 = vmatprep.subr.bf16.mxu0 0
      %1054 = vmatpush1.bf16.msra.mxu0 %v1040
      %1055 = vmatprep.subr.bf16.mxu0 0
      %1056 = vmatpush1.bf16.msra.mxu0 %v1041
      %1057 = vmatprep.subr.bf16.mxu0 0
      %1058 = vmatpush1.bf16.msra.mxu0 %v1042
      %1059 = vmatprep.subr.bf16.mxu0 0
      %1060 = vmatpush1.bf16.msra.mxu0 %v1043
      %1061 = vmatprep.subr.bf16.mxu0 0
      %1062 = vmatpush1.bf16.msra.mxu0 %v1044
      %1063 = vmatprep.subr.bf16.mxu0 0
      %1064 = vmatpush1.bf16.msra.mxu0 0
      %1065 = vmatprep.subr.bf16.mxu0 0
      %1066 = vmatpush1.bf16.msra.mxu0 0
      %1067 = vmatprep.subr.bf16.mxu0 0
      %1068 = vmatpush1.bf16.msra.mxu0 0
      %1069 = vmatprep.subr.bf16.mxu0 0
      %1070 = vmatpush1.bf16.msra.mxu0 0
      %1071 = vmatprep.subr.bf16.mxu0 0
      %1072 = vmatpush1.bf16.msra.mxu0 0
      %1073 = vmatprep.subr.bf16.mxu0 0
      %1074 = vmatpush1.bf16.msra.mxu0 0
      %1075 = vmatprep.subr.bf16.mxu0 0
      %1076 = vmatpush1.bf16.msra.mxu0 0
      %1077 = vmatprep.subr.bf16.mxu0 0
      %1078 = vmatpush1.bf16.msra.mxu0 0
      %1079 = vmatprep.subr.bf16.mxu0 0
      %1080 = vmatpush1.bf16.msra.mxu0 0
      %1081 = vmatprep.subr.bf16.mxu0 0
      %1082 = vmatpush1.bf16.msra.mxu0 0
      %1083 = vmatprep.subr.bf16.mxu0 0
      %1084 = vmatpush1.bf16.msra.mxu0 0
      %1085 = vmatprep.mubr.bf16.mxu0 0
      %1086 = vmatmul.mubr.bf16.gmra.mrb[0].mxu0 %v1051
      %v1087 = vpop.f32.mrb[0].mxu0
      %v1088 = vadd.f32 0.0, %v1087
      %v1089 = vpop.f32.mrb[0].mxu0
      %v1090 = vpop.f32.mrb[0].mxu0
      %v1091 = vpop.f32.mrb[0].mxu0
      %1092 = vdwg.mxu0
      %1093 = vset.pattern.permute.xlu0 64
      %1094 = vperm.xlu0 %1093, %v275
      %v1095 = vpop.permute.xlu0 %1094
      %vm1096 = vcmp.eq.s32.totalorder %v1095, %v281
      %1097 = vset.pattern.permute.xlu0 64
      %1098 = vperm.xlu0 %1097, %v276
      %v1099 = vpop.permute.xlu0 %1098
      %v1101 = vsel %vm1096, %v1099, 0.0
      %v1102 = vadd.f32 %v1101, 0.0
      %1103 = vset.pattern.permute.xlu0 65
      %1104 = vperm.xlu0 %1103, %v275
      %v1105 = vpop.permute.xlu0 %1104
      %vm1106 = vcmp.eq.s32.totalorder %v1105, %v281
      %1107 = vset.pattern.permute.xlu0 65
      %1108 = vperm.xlu0 %1107, %v276
      %v1109 = vpop.permute.xlu0 %1108
      %v1111 = vsel %vm1106, %v1109, 0.0
      %v1112 = vadd.f32 %v1102, %v1111
      %1113 = vset.pattern.permute.xlu0 66
      %1114 = vperm.xlu0 %1113, %v275
      %v1115 = vpop.permute.xlu0 %1114
      %vm1116 = vcmp.eq.s32.totalorder %v1115, %v281
      %1117 = vset.pattern.permute.xlu0 66
      %1118 = vperm.xlu0 %1117, %v276
      %v1119 = vpop.permute.xlu0 %1118
      %v1121 = vsel %vm1116, %v1119, 0.0
      %v1122 = vadd.f32 %v1112, %v1121
      %1123 = vset.pattern.permute.xlu0 67
      %1124 = vperm.xlu0 %1123, %v275
      %v1125 = vpop.permute.xlu0 %1124
      %vm1126 = vcmp.eq.s32.totalorder %v1125, %v281
      %1127 = vset.pattern.permute.xlu0 67
      %1128 = vperm.xlu0 %1127, %v276
      %v1129 = vpop.permute.xlu0 %1128
      %v1131 = vsel %vm1126, %v1129, 0.0
      %v1132 = vadd.f32 %v1122, %v1131
      %1133 = vset.pattern.permute.xlu0 68
      %1134 = vperm.xlu0 %1133, %v275
      %v1135 = vpop.permute.xlu0 %1134
      %vm1136 = vcmp.eq.s32.totalorder %v1135, %v281
      %1137 = vset.pattern.permute.xlu0 68
      %1138 = vperm.xlu0 %1137, %v276
      %v1139 = vpop.permute.xlu0 %1138
      %v1141 = vsel %vm1136, %v1139, 0.0
      %v1142 = vadd.f32 %v1132, %v1141
      %1143 = vset.pattern.permute.xlu0 69
      %1144 = vperm.xlu0 %1143, %v275
      %v1145 = vpop.permute.xlu0 %1144
      %vm1146 = vcmp.eq.s32.totalorder %v1145, %v281
      %1147 = vset.pattern.permute.xlu0 69
      %1148 = vperm.xlu0 %1147, %v276
      %v1149 = vpop.permute.xlu0 %1148
      %v1151 = vsel %vm1146, %v1149, 0.0
      %v1152 = vadd.f32 %v1142, %v1151
      %1153 = vset.pattern.permute.xlu0 70
      %1154 = vperm.xlu0 %1153, %v275
      %v1155 = vpop.permute.xlu0 %1154
      %vm1156 = vcmp.eq.s32.totalorder %v1155, %v281
      %1157 = vset.pattern.permute.xlu0 70
      %1158 = vperm.xlu0 %1157, %v276
      %v1159 = vpop.permute.xlu0 %1158
      %v1161 = vsel %vm1156, %v1159, 0.0
      %v1162 = vadd.f32 %v1152, %v1161
      %1163 = vset.pattern.permute.xlu0 71
      %1164 = vperm.xlu0 %1163, %v275
      %v1165 = vpop.permute.xlu0 %1164
      %vm1166 = vcmp.eq.s32.totalorder %v1165, %v281
      %1167 = vset.pattern.permute.xlu0 71
      %1168 = vperm.xlu0 %1167, %v276
      %v1169 = vpop.permute.xlu0 %1168
      %v1171 = vsel %vm1166, %v1169, 0.0
      %v1172 = vadd.f32 %v1162, %v1171
      %1173 = vset.pattern.permute.xlu0 72
      %1174 = vperm.xlu0 %1173, %v275
      %v1175 = vpop.permute.xlu0 %1174
      %vm1176 = vcmp.eq.s32.totalorder %v1175, %v281
      %1177 = vset.pattern.permute.xlu0 72
      %1178 = vperm.xlu0 %1177, %v276
      %v1179 = vpop.permute.xlu0 %1178
      %v1181 = vsel %vm1176, %v1179, 0.0
      %v1182 = vadd.f32 %v1172, %v1181
      %1183 = vset.pattern.permute.xlu0 73
      %1184 = vperm.xlu0 %1183, %v275
      %v1185 = vpop.permute.xlu0 %1184
      %vm1186 = vcmp.eq.s32.totalorder %v1185, %v281
      %1187 = vset.pattern.permute.xlu0 73
      %1188 = vperm.xlu0 %1187, %v276
      %v1189 = vpop.permute.xlu0 %1188
      %v1191 = vsel %vm1186, %v1189, 0.0
      %v1192 = vadd.f32 %v1182, %v1191
      %1193 = vset.pattern.permute.xlu0 74
      %1194 = vperm.xlu0 %1193, %v275
      %v1195 = vpop.permute.xlu0 %1194
      %vm1196 = vcmp.eq.s32.totalorder %v1195, %v281
      %1197 = vset.pattern.permute.xlu0 74
      %1198 = vperm.xlu0 %1197, %v276
      %v1199 = vpop.permute.xlu0 %1198
      %v1201 = vsel %vm1196, %v1199, 0.0
      %v1202 = vadd.f32 %v1192, %v1201
      %1203 = vset.pattern.permute.xlu0 75
      %1204 = vperm.xlu0 %1203, %v275
      %v1205 = vpop.permute.xlu0 %1204
      %vm1206 = vcmp.eq.s32.totalorder %v1205, %v281
      %1207 = vset.pattern.permute.xlu0 75
      %1208 = vperm.xlu0 %1207, %v276
      %v1209 = vpop.permute.xlu0 %1208
      %v1211 = vsel %vm1206, %v1209, 0.0
      %v1212 = vadd.f32 %v1202, %v1211
      %1213 = vset.pattern.permute.xlu0 76
      %1214 = vperm.xlu0 %1213, %v275
      %v1215 = vpop.permute.xlu0 %1214
      %vm1216 = vcmp.eq.s32.totalorder %v1215, %v281
      %1217 = vset.pattern.permute.xlu0 76
      %1218 = vperm.xlu0 %1217, %v276
      %v1219 = vpop.permute.xlu0 %1218
      %v1221 = vsel %vm1216, %v1219, 0.0
      %v1222 = vadd.f32 %v1212, %v1221
      %1223 = vset.pattern.permute.xlu0 77
      %1224 = vperm.xlu0 %1223, %v275
      %v1225 = vpop.permute.xlu0 %1224
      %vm1226 = vcmp.eq.s32.totalorder %v1225, %v281
      %1227 = vset.pattern.permute.xlu0 77
      %1228 = vperm.xlu0 %1227, %v276
      %v1229 = vpop.permute.xlu0 %1228
      %v1231 = vsel %vm1226, %v1229, 0.0
      %v1232 = vadd.f32 %v1222, %v1231
      %1233 = vset.pattern.permute.xlu0 78
      %1234 = vperm.xlu0 %1233, %v275
      %v1235 = vpop.permute.xlu0 %1234
      %vm1236 = vcmp.eq.s32.totalorder %v1235, %v281
      %1237 = vset.pattern.permute.xlu0 78
      %1238 = vperm.xlu0 %1237, %v276
      %v1239 = vpop.permute.xlu0 %1238
      %v1241 = vsel %vm1236, %v1239, 0.0
      %v1242 = vadd.f32 %v1232, %v1241
      %1243 = vset.pattern.permute.xlu0 79
      %1244 = vperm.xlu0 %1243, %v275
      %v1245 = vpop.permute.xlu0 %1244
      %vm1246 = vcmp.eq.s32.totalorder %v1245, %v281
      %1247 = vset.pattern.permute.xlu0 79
      %1248 = vperm.xlu0 %1247, %v276
      %v1249 = vpop.permute.xlu0 %1248
      %v1251 = vsel %vm1246, %v1249, 0.0
      %v1252 = vadd.f32 %v1242, %v1251
      %1253 = vset.pattern.permute.xlu0 80
      %1254 = vperm.xlu0 %1253, %v275
      %v1255 = vpop.permute.xlu0 %1254
      %vm1256 = vcmp.eq.s32.totalorder %v1255, %v281
      %1257 = vset.pattern.permute.xlu0 80
      %1258 = vperm.xlu0 %1257, %v276
      %v1259 = vpop.permute.xlu0 %1258
      %v1261 = vsel %vm1256, %v1259, 0.0
      %v1262 = vadd.f32 %v1252, %v1261
      %1263 = vset.pattern.permute.xlu0 81
      %1264 = vperm.xlu0 %1263, %v275
      %v1265 = vpop.permute.xlu0 %1264
      %vm1266 = vcmp.eq.s32.totalorder %v1265, %v281
      %1267 = vset.pattern.permute.xlu0 81
      %1268 = vperm.xlu0 %1267, %v276
      %v1269 = vpop.permute.xlu0 %1268
      %v1271 = vsel %vm1266, %v1269, 0.0
      %v1272 = vadd.f32 %v1262, %v1271
      %1273 = vset.pattern.permute.xlu0 82
      %1274 = vperm.xlu0 %1273, %v275
      %v1275 = vpop.permute.xlu0 %1274
      %vm1276 = vcmp.eq.s32.totalorder %v1275, %v281
      %1277 = vset.pattern.permute.xlu0 82
      %1278 = vperm.xlu0 %1277, %v276
      %v1279 = vpop.permute.xlu0 %1278
      %v1281 = vsel %vm1276, %v1279, 0.0
      %v1282 = vadd.f32 %v1272, %v1281
      %1283 = vset.pattern.permute.xlu0 83
      %1284 = vperm.xlu0 %1283, %v275
      %v1285 = vpop.permute.xlu0 %1284
      %vm1286 = vcmp.eq.s32.totalorder %v1285, %v281
      %1287 = vset.pattern.permute.xlu0 83
      %1288 = vperm.xlu0 %1287, %v276
      %v1289 = vpop.permute.xlu0 %1288
      %v1291 = vsel %vm1286, %v1289, 0.0
      %v1292 = vadd.f32 %v1282, %v1291
      %1293 = vset.pattern.permute.xlu0 84
      %1294 = vperm.xlu0 %1293, %v275
      %v1295 = vpop.permute.xlu0 %1294
      %vm1296 = vcmp.eq.s32.totalorder %v1295, %v281
      %1297 = vset.pattern.permute.xlu0 84
      %1298 = vperm.xlu0 %1297, %v276
      %v1299 = vpop.permute.xlu0 %1298
      %v1301 = vsel %vm1296, %v1299, 0.0
      %v1302 = vadd.f32 %v1292, %v1301
      %1303 = vset.pattern.permute.xlu0 85
      %1304 = vperm.xlu0 %1303, %v275
      %v1305 = vpop.permute.xlu0 %1304
      %vm1306 = vcmp.eq.s32.totalorder %v1305, %v281
      %1307 = vset.pattern.permute.xlu0 85
      %1308 = vperm.xlu0 %1307, %v276
      %v1309 = vpop.permute.xlu0 %1308
      %v1311 = vsel %vm1306, %v1309, 0.0
      %v1312 = vadd.f32 %v1302, %v1311
      %1313 = vset.pattern.permute.xlu0 86
      %1314 = vperm.xlu0 %1313, %v275
      %v1315 = vpop.permute.xlu0 %1314
      %vm1316 = vcmp.eq.s32.totalorder %v1315, %v281
      %1317 = vset.pattern.permute.xlu0 86
      %1318 = vperm.xlu0 %1317, %v276
      %v1319 = vpop.permute.xlu0 %1318
      %v1321 = vsel %vm1316, %v1319, 0.0
      %v1322 = vadd.f32 %v1312, %v1321
      %1323 = vset.pattern.permute.xlu0 87
      %1324 = vperm.xlu0 %1323, %v275
      %v1325 = vpop.permute.xlu0 %1324
      %vm1326 = vcmp.eq.s32.totalorder %v1325, %v281
      %1327 = vset.pattern.permute.xlu0 87
      %1328 = vperm.xlu0 %1327, %v276
      %v1329 = vpop.permute.xlu0 %1328
      %v1331 = vsel %vm1326, %v1329, 0.0
      %v1332 = vadd.f32 %v1322, %v1331
      %1333 = vset.pattern.permute.xlu0 88
      %1334 = vperm.xlu0 %1333, %v275
      %v1335 = vpop.permute.xlu0 %1334
      %vm1336 = vcmp.eq.s32.totalorder %v1335, %v281
      %1337 = vset.pattern.permute.xlu0 88
      %1338 = vperm.xlu0 %1337, %v276
      %v1339 = vpop.permute.xlu0 %1338
      %v1341 = vsel %vm1336, %v1339, 0.0
      %v1342 = vadd.f32 %v1332, %v1341
      %1343 = vset.pattern.permute.xlu0 89
      %1344 = vperm.xlu0 %1343, %v275
      %v1345 = vpop.permute.xlu0 %1344
      %vm1346 = vcmp.eq.s32.totalorder %v1345, %v281
      %1347 = vset.pattern.permute.xlu0 89
      %1348 = vperm.xlu0 %1347, %v276
      %v1349 = vpop.permute.xlu0 %1348
      %v1351 = vsel %vm1346, %v1349, 0.0
      %v1352 = vadd.f32 %v1342, %v1351
      %1353 = vset.pattern.permute.xlu0 90
      %1354 = vperm.xlu0 %1353, %v275
      %v1355 = vpop.permute.xlu0 %1354
      %vm1356 = vcmp.eq.s32.totalorder %v1355, %v281
      %1357 = vset.pattern.permute.xlu0 90
      %1358 = vperm.xlu0 %1357, %v276
      %v1359 = vpop.permute.xlu0 %1358
      %v1361 = vsel %vm1356, %v1359, 0.0
      %v1362 = vadd.f32 %v1352, %v1361
      %1363 = vset.pattern.permute.xlu0 91
      %1364 = vperm.xlu0 %1363, %v275
      %v1365 = vpop.permute.xlu0 %1364
      %vm1366 = vcmp.eq.s32.totalorder %v1365, %v281
      %1367 = vset.pattern.permute.xlu0 91
      %1368 = vperm.xlu0 %1367, %v276
      %v1369 = vpop.permute.xlu0 %1368
      %v1371 = vsel %vm1366, %v1369, 0.0
      %v1372 = vadd.f32 %v1362, %v1371
      %1373 = vset.pattern.permute.xlu0 92
      %1374 = vperm.xlu0 %1373, %v275
      %v1375 = vpop.permute.xlu0 %1374
      %vm1376 = vcmp.eq.s32.totalorder %v1375, %v281
      %1377 = vset.pattern.permute.xlu0 92
      %1378 = vperm.xlu0 %1377, %v276
      %v1379 = vpop.permute.xlu0 %1378
      %v1381 = vsel %vm1376, %v1379, 0.0
      %v1382 = vadd.f32 %v1372, %v1381
      %1383 = vset.pattern.permute.xlu0 93
      %1384 = vperm.xlu0 %1383, %v275
      %v1385 = vpop.permute.xlu0 %1384
      %vm1386 = vcmp.eq.s32.totalorder %v1385, %v281
      %1387 = vset.pattern.permute.xlu0 93
      %1388 = vperm.xlu0 %1387, %v276
      %v1389 = vpop.permute.xlu0 %1388
      %v1391 = vsel %vm1386, %v1389, 0.0
      %v1392 = vadd.f32 %v1382, %v1391
      %1393 = vset.pattern.permute.xlu0 94
      %1394 = vperm.xlu0 %1393, %v275
      %v1395 = vpop.permute.xlu0 %1394
      %vm1396 = vcmp.eq.s32.totalorder %v1395, %v281
      %1397 = vset.pattern.permute.xlu0 94
      %1398 = vperm.xlu0 %1397, %v276
      %v1399 = vpop.permute.xlu0 %1398
      %v1401 = vsel %vm1396, %v1399, 0.0
      %v1402 = vadd.f32 %v1392, %v1401
      %1403 = vset.pattern.permute.xlu0 95
      %1404 = vperm.xlu0 %1403, %v275
      %v1405 = vpop.permute.xlu0 %1404
      %vm1406 = vcmp.eq.s32.totalorder %v1405, %v281
      %1407 = vset.pattern.permute.xlu0 95
      %1408 = vperm.xlu0 %1407, %v276
      %v1409 = vpop.permute.xlu0 %1408
      %v1411 = vsel %vm1406, %v1409, 0.0
      %v1412 = vadd.f32 %v1402, %v1411
      %s1413 = scalar_lea.vmem %s259, 80
      %v1414 = vld [vmem:[%s1413] sm:$0xf]
      %v1415 = vld [vmem:[%s1413 + $0x4] sm:$0xf]
      %v1416 = vld [vmem:[%s1413 + $0x8] sm:$0xf]
      %v1417 = vld [vmem:[%s1413 + $0xc] sm:$0xf]
      %v1418 = vld [vmem:[%s1413 + $0x10] sm:$0xf]
      %v1419 = vld [vmem:[%s1413 + $0x14] sm:$0xf]
      %v1420 = vld [vmem:[%s1413 + $0x18] sm:$0xf]
      %v1421 = vld [vmem:[%s1413 + $0x1c] sm:$0xf]
      %v1422 = vld [vmem:[%s1413 + $0x20] sm:$0xf]
      %v1423 = vld [vmem:[%s1413 + $0x24] sm:$0xf]
      %v1424 = vpack.c.bf16 %v1412, %v1412
      %v1435 = vunpack.c.l.b16 %v1414
      %v1436 = vunpack.c.l.b16 %v1415
      %v1437 = vunpack.c.l.b16 %v1416
      %v1438 = vunpack.c.l.b16 %v1417
      %v1439 = vunpack.c.l.b16 %v1418
      %v1440 = vunpack.c.l.b16 %v1419
      %v1441 = vunpack.c.l.b16 %v1420
      %v1442 = vunpack.c.l.b16 %v1421
      %v1443 = vunpack.c.l.b16 %v1422
      %v1444 = vunpack.c.l.b16 %v1423
      %v1445 = vpack.c.b16 %v1436, %v1435
      %v1446 = vpack.c.b16 %v1438, %v1437
      %v1447 = vpack.c.b16 %v1440, %v1439
      %v1448 = vpack.c.b16 %v1442, %v1441
      %v1449 = vpack.c.b16 %v1444, %v1443
      %v1456 = vsel %vm644, %v1424, 0
      %1458 = vmatprep.subr.bf16.mxu0 0
      %1459 = vmatpush1.bf16.msra.mxu0 %v1445
      %1460 = vmatprep.subr.bf16.mxu0 0
      %1461 = vmatpush1.bf16.msra.mxu0 %v1446
      %1462 = vmatprep.subr.bf16.mxu0 0
      %1463 = vmatpush1.bf16.msra.mxu0 %v1447
      %1464 = vmatprep.subr.bf16.mxu0 0
      %1465 = vmatpush1.bf16.msra.mxu0 %v1448
      %1466 = vmatprep.subr.bf16.mxu0 0
      %1467 = vmatpush1.bf16.msra.mxu0 %v1449
      %1468 = vmatprep.subr.bf16.mxu0 0
      %1469 = vmatpush1.bf16.msra.mxu0 0
      %1470 = vmatprep.subr.bf16.mxu0 0
      %1471 = vmatpush1.bf16.msra.mxu0 0
      %1472 = vmatprep.subr.bf16.mxu0 0
      %1473 = vmatpush1.bf16.msra.mxu0 0
      %1474 = vmatprep.subr.bf16.mxu0 0
      %1475 = vmatpush1.bf16.msra.mxu0 0
      %1476 = vmatprep.subr.bf16.mxu0 0
      %1477 = vmatpush1.bf16.msra.mxu0 0
      %1478 = vmatprep.subr.bf16.mxu0 0
      %1479 = vmatpush1.bf16.msra.mxu0 0
      %1480 = vmatprep.subr.bf16.mxu0 0
      %1481 = vmatpush1.bf16.msra.mxu0 0
      %1482 = vmatprep.subr.bf16.mxu0 0
      %1483 = vmatpush1.bf16.msra.mxu0 0
      %1484 = vmatprep.subr.bf16.mxu0 0
      %1485 = vmatpush1.bf16.msra.mxu0 0
      %1486 = vmatprep.subr.bf16.mxu0 0
      %1487 = vmatpush1.bf16.msra.mxu0 0
      %1488 = vmatprep.subr.bf16.mxu0 0
      %1489 = vmatpush1.bf16.msra.mxu0 0
      %1490 = vmatprep.mubr.bf16.mxu0 0
      %1491 = vmatmul.mubr.bf16.gmra.mrb[0].mxu0 %v1456
      %v1492 = vpop.f32.mrb[0].mxu0
      %v1493 = vadd.f32 0.0, %v1492
      %v1494 = vpop.f32.mrb[0].mxu0
      %v1495 = vpop.f32.mrb[0].mxu0
      %v1496 = vpop.f32.mrb[0].mxu0
      %1497 = vdwg.mxu0
      %1498 = vset.pattern.permute.xlu0 96
      %1499 = vperm.xlu0 %1498, %v275
      %v1500 = vpop.permute.xlu0 %1499
      %vm1501 = vcmp.eq.s32.totalorder %v1500, %v281
      %1502 = vset.pattern.permute.xlu0 96
      %1503 = vperm.xlu0 %1502, %v276
      %v1504 = vpop.permute.xlu0 %1503
      %v1506 = vsel %vm1501, %v1504, 0.0
      %v1507 = vadd.f32 %v1506, 0.0
      %1508 = vset.pattern.permute.xlu0 97
      %1509 = vperm.xlu0 %1508, %v275
      %v1510 = vpop.permute.xlu0 %1509
      %vm1511 = vcmp.eq.s32.totalorder %v1510, %v281
      %1512 = vset.pattern.permute.xlu0 97
      %1513 = vperm.xlu0 %1512, %v276
      %v1514 = vpop.permute.xlu0 %1513
      %v1516 = vsel %vm1511, %v1514, 0.0
      %v1517 = vadd.f32 %v1507, %v1516
      %1518 = vset.pattern.permute.xlu0 98
      %1519 = vperm.xlu0 %1518, %v275
      %v1520 = vpop.permute.xlu0 %1519
      %vm1521 = vcmp.eq.s32.totalorder %v1520, %v281
      %1522 = vset.pattern.permute.xlu0 98
      %1523 = vperm.xlu0 %1522, %v276
      %v1524 = vpop.permute.xlu0 %1523
      %v1526 = vsel %vm1521, %v1524, 0.0
      %v1527 = vadd.f32 %v1517, %v1526
      %1528 = vset.pattern.permute.xlu0 99
      %1529 = vperm.xlu0 %1528, %v275
      %v1530 = vpop.permute.xlu0 %1529
      %vm1531 = vcmp.eq.s32.totalorder %v1530, %v281
      %1532 = vset.pattern.permute.xlu0 99
      %1533 = vperm.xlu0 %1532, %v276
      %v1534 = vpop.permute.xlu0 %1533
      %v1536 = vsel %vm1531, %v1534, 0.0
      %v1537 = vadd.f32 %v1527, %v1536
      %1538 = vset.pattern.permute.xlu0 100
      %1539 = vperm.xlu0 %1538, %v275
      %v1540 = vpop.permute.xlu0 %1539
      %vm1541 = vcmp.eq.s32.totalorder %v1540, %v281
      %1542 = vset.pattern.permute.xlu0 100
      %1543 = vperm.xlu0 %1542, %v276
      %v1544 = vpop.permute.xlu0 %1543
      %v1546 = vsel %vm1541, %v1544, 0.0
      %v1547 = vadd.f32 %v1537, %v1546
      %1548 = vset.pattern.permute.xlu0 101
      %1549 = vperm.xlu0 %1548, %v275
      %v1550 = vpop.permute.xlu0 %1549
      %vm1551 = vcmp.eq.s32.totalorder %v1550, %v281
      %1552 = vset.pattern.permute.xlu0 101
      %1553 = vperm.xlu0 %1552, %v276
      %v1554 = vpop.permute.xlu0 %1553
      %v1556 = vsel %vm1551, %v1554, 0.0
      %v1557 = vadd.f32 %v1547, %v1556
      %1558 = vset.pattern.permute.xlu0 102
      %1559 = vperm.xlu0 %1558, %v275
      %v1560 = vpop.permute.xlu0 %1559
      %vm1561 = vcmp.eq.s32.totalorder %v1560, %v281
      %1562 = vset.pattern.permute.xlu0 102
      %1563 = vperm.xlu0 %1562, %v276
      %v1564 = vpop.permute.xlu0 %1563
      %v1566 = vsel %vm1561, %v1564, 0.0
      %v1567 = vadd.f32 %v1557, %v1566
      %1568 = vset.pattern.permute.xlu0 103
      %1569 = vperm.xlu0 %1568, %v275
      %v1570 = vpop.permute.xlu0 %1569
      %vm1571 = vcmp.eq.s32.totalorder %v1570, %v281
      %1572 = vset.pattern.permute.xlu0 103
      %1573 = vperm.xlu0 %1572, %v276
      %v1574 = vpop.permute.xlu0 %1573
      %v1576 = vsel %vm1571, %v1574, 0.0
      %v1577 = vadd.f32 %v1567, %v1576
      %1578 = vset.pattern.permute.xlu0 104
      %1579 = vperm.xlu0 %1578, %v275
      %v1580 = vpop.permute.xlu0 %1579
      %vm1581 = vcmp.eq.s32.totalorder %v1580, %v281
      %1582 = vset.pattern.permute.xlu0 104
      %1583 = vperm.xlu0 %1582, %v276
      %v1584 = vpop.permute.xlu0 %1583
      %v1586 = vsel %vm1581, %v1584, 0.0
      %v1587 = vadd.f32 %v1577, %v1586
      %1588 = vset.pattern.permute.xlu0 105
      %1589 = vperm.xlu0 %1588, %v275
      %v1590 = vpop.permute.xlu0 %1589
      %vm1591 = vcmp.eq.s32.totalorder %v1590, %v281
      %1592 = vset.pattern.permute.xlu0 105
      %1593 = vperm.xlu0 %1592, %v276
      %v1594 = vpop.permute.xlu0 %1593
      %v1596 = vsel %vm1591, %v1594, 0.0
      %v1597 = vadd.f32 %v1587, %v1596
      %1598 = vset.pattern.permute.xlu0 106
      %1599 = vperm.xlu0 %1598, %v275
      %v1600 = vpop.permute.xlu0 %1599
      %vm1601 = vcmp.eq.s32.totalorder %v1600, %v281
      %1602 = vset.pattern.permute.xlu0 106
      %1603 = vperm.xlu0 %1602, %v276
      %v1604 = vpop.permute.xlu0 %1603
      %v1606 = vsel %vm1601, %v1604, 0.0
      %v1607 = vadd.f32 %v1597, %v1606
      %1608 = vset.pattern.permute.xlu0 107
      %1609 = vperm.xlu0 %1608, %v275
      %v1610 = vpop.permute.xlu0 %1609
      %vm1611 = vcmp.eq.s32.totalorder %v1610, %v281
      %1612 = vset.pattern.permute.xlu0 107
      %1613 = vperm.xlu0 %1612, %v276
      %v1614 = vpop.permute.xlu0 %1613
      %v1616 = vsel %vm1611, %v1614, 0.0
      %v1617 = vadd.f32 %v1607, %v1616
      %1618 = vset.pattern.permute.xlu0 108
      %1619 = vperm.xlu0 %1618, %v275
      %v1620 = vpop.permute.xlu0 %1619
      %vm1621 = vcmp.eq.s32.totalorder %v1620, %v281
      %1622 = vset.pattern.permute.xlu0 108
      %1623 = vperm.xlu0 %1622, %v276
      %v1624 = vpop.permute.xlu0 %1623
      %v1626 = vsel %vm1621, %v1624, 0.0
      %v1627 = vadd.f32 %v1617, %v1626
      %1628 = vset.pattern.permute.xlu0 109
      %1629 = vperm.xlu0 %1628, %v275
      %v1630 = vpop.permute.xlu0 %1629
      %vm1631 = vcmp.eq.s32.totalorder %v1630, %v281
      %1632 = vset.pattern.permute.xlu0 109
      %1633 = vperm.xlu0 %1632, %v276
      %v1634 = vpop.permute.xlu0 %1633
      %v1636 = vsel %vm1631, %v1634, 0.0
      %v1637 = vadd.f32 %v1627, %v1636
      %1638 = vset.pattern.permute.xlu0 110
      %1639 = vperm.xlu0 %1638, %v275
      %v1640 = vpop.permute.xlu0 %1639
      %vm1641 = vcmp.eq.s32.totalorder %v1640, %v281
      %1642 = vset.pattern.permute.xlu0 110
      %1643 = vperm.xlu0 %1642, %v276
      %v1644 = vpop.permute.xlu0 %1643
      %v1646 = vsel %vm1641, %v1644, 0.0
      %v1647 = vadd.f32 %v1637, %v1646
      %1648 = vset.pattern.permute.xlu0 111
      %1649 = vperm.xlu0 %1648, %v275
      %v1650 = vpop.permute.xlu0 %1649
      %vm1651 = vcmp.eq.s32.totalorder %v1650, %v281
      %1652 = vset.pattern.permute.xlu0 111
      %1653 = vperm.xlu0 %1652, %v276
      %v1654 = vpop.permute.xlu0 %1653
      %v1656 = vsel %vm1651, %v1654, 0.0
      %v1657 = vadd.f32 %v1647, %v1656
      %1658 = vset.pattern.permute.xlu0 112
      %1659 = vperm.xlu0 %1658, %v275
      %v1660 = vpop.permute.xlu0 %1659
      %vm1661 = vcmp.eq.s32.totalorder %v1660, %v281
      %1662 = vset.pattern.permute.xlu0 112
      %1663 = vperm.xlu0 %1662, %v276
      %v1664 = vpop.permute.xlu0 %1663
      %v1666 = vsel %vm1661, %v1664, 0.0
      %v1667 = vadd.f32 %v1657, %v1666
      %1668 = vset.pattern.permute.xlu0 113
      %1669 = vperm.xlu0 %1668, %v275
      %v1670 = vpop.permute.xlu0 %1669
      %vm1671 = vcmp.eq.s32.totalorder %v1670, %v281
      %1672 = vset.pattern.permute.xlu0 113
      %1673 = vperm.xlu0 %1672, %v276
      %v1674 = vpop.permute.xlu0 %1673
      %v1676 = vsel %vm1671, %v1674, 0.0
      %v1677 = vadd.f32 %v1667, %v1676
      %1678 = vset.pattern.permute.xlu0 114
      %1679 = vperm.xlu0 %1678, %v275
      %v1680 = vpop.permute.xlu0 %1679
      %vm1681 = vcmp.eq.s32.totalorder %v1680, %v281
      %1682 = vset.pattern.permute.xlu0 114
      %1683 = vperm.xlu0 %1682, %v276
      %v1684 = vpop.permute.xlu0 %1683
      %v1686 = vsel %vm1681, %v1684, 0.0
      %v1687 = vadd.f32 %v1677, %v1686
      %1688 = vset.pattern.permute.xlu0 115
      %1689 = vperm.xlu0 %1688, %v275
      %v1690 = vpop.permute.xlu0 %1689
      %vm1691 = vcmp.eq.s32.totalorder %v1690, %v281
      %1692 = vset.pattern.permute.xlu0 115
      %1693 = vperm.xlu0 %1692, %v276
      %v1694 = vpop.permute.xlu0 %1693
      %v1696 = vsel %vm1691, %v1694, 0.0
      %v1697 = vadd.f32 %v1687, %v1696
      %1698 = vset.pattern.permute.xlu0 116
      %1699 = vperm.xlu0 %1698, %v275
      %v1700 = vpop.permute.xlu0 %1699
      %vm1701 = vcmp.eq.s32.totalorder %v1700, %v281
      %1702 = vset.pattern.permute.xlu0 116
      %1703 = vperm.xlu0 %1702, %v276
      %v1704 = vpop.permute.xlu0 %1703
      %v1706 = vsel %vm1701, %v1704, 0.0
      %v1707 = vadd.f32 %v1697, %v1706
      %1708 = vset.pattern.permute.xlu0 117
      %1709 = vperm.xlu0 %1708, %v275
      %v1710 = vpop.permute.xlu0 %1709
      %vm1711 = vcmp.eq.s32.totalorder %v1710, %v281
      %1712 = vset.pattern.permute.xlu0 117
      %1713 = vperm.xlu0 %1712, %v276
      %v1714 = vpop.permute.xlu0 %1713
      %v1716 = vsel %vm1711, %v1714, 0.0
      %v1717 = vadd.f32 %v1707, %v1716
      %1718 = vset.pattern.permute.xlu0 118
      %1719 = vperm.xlu0 %1718, %v275
      %v1720 = vpop.permute.xlu0 %1719
      %vm1721 = vcmp.eq.s32.totalorder %v1720, %v281
      %1722 = vset.pattern.permute.xlu0 118
      %1723 = vperm.xlu0 %1722, %v276
      %v1724 = vpop.permute.xlu0 %1723
      %v1726 = vsel %vm1721, %v1724, 0.0
      %v1727 = vadd.f32 %v1717, %v1726
      %1728 = vset.pattern.permute.xlu0 119
      %1729 = vperm.xlu0 %1728, %v275
      %v1730 = vpop.permute.xlu0 %1729
      %vm1731 = vcmp.eq.s32.totalorder %v1730, %v281
      %1732 = vset.pattern.permute.xlu0 119
      %1733 = vperm.xlu0 %1732, %v276
      %v1734 = vpop.permute.xlu0 %1733
      %v1736 = vsel %vm1731, %v1734, 0.0
      %v1737 = vadd.f32 %v1727, %v1736
      %1738 = vset.pattern.permute.xlu0 120
      %1739 = vperm.xlu0 %1738, %v275
      %v1740 = vpop.permute.xlu0 %1739
      %vm1741 = vcmp.eq.s32.totalorder %v1740, %v281
      %1742 = vset.pattern.permute.xlu0 120
      %1743 = vperm.xlu0 %1742, %v276
      %v1744 = vpop.permute.xlu0 %1743
      %v1746 = vsel %vm1741, %v1744, 0.0
      %v1747 = vadd.f32 %v1737, %v1746
      %1748 = vset.pattern.permute.xlu0 121
      %1749 = vperm.xlu0 %1748, %v275
      %v1750 = vpop.permute.xlu0 %1749
      %vm1751 = vcmp.eq.s32.totalorder %v1750, %v281
      %1752 = vset.pattern.permute.xlu0 121
      %1753 = vperm.xlu0 %1752, %v276
      %v1754 = vpop.permute.xlu0 %1753
      %v1756 = vsel %vm1751, %v1754, 0.0
      %v1757 = vadd.f32 %v1747, %v1756
      %1758 = vset.pattern.permute.xlu0 122
      %1759 = vperm.xlu0 %1758, %v275
      %v1760 = vpop.permute.xlu0 %1759
      %vm1761 = vcmp.eq.s32.totalorder %v1760, %v281
      %1762 = vset.pattern.permute.xlu0 122
      %1763 = vperm.xlu0 %1762, %v276
      %v1764 = vpop.permute.xlu0 %1763
      %v1766 = vsel %vm1761, %v1764, 0.0
      %v1767 = vadd.f32 %v1757, %v1766
      %1768 = vset.pattern.permute.xlu0 123
      %1769 = vperm.xlu0 %1768, %v275
      %v1770 = vpop.permute.xlu0 %1769
      %vm1771 = vcmp.eq.s32.totalorder %v1770, %v281
      %1772 = vset.pattern.permute.xlu0 123
      %1773 = vperm.xlu0 %1772, %v276
      %v1774 = vpop.permute.xlu0 %1773
      %v1776 = vsel %vm1771, %v1774, 0.0
      %v1777 = vadd.f32 %v1767, %v1776
      %1778 = vset.pattern.permute.xlu0 124
      %1779 = vperm.xlu0 %1778, %v275
      %v1780 = vpop.permute.xlu0 %1779
      %vm1781 = vcmp.eq.s32.totalorder %v1780, %v281
      %1782 = vset.pattern.permute.xlu0 124
      %1783 = vperm.xlu0 %1782, %v276
      %v1784 = vpop.permute.xlu0 %1783
      %v1786 = vsel %vm1781, %v1784, 0.0
      %v1787 = vadd.f32 %v1777, %v1786
      %1788 = vset.pattern.permute.xlu0 125
      %1789 = vperm.xlu0 %1788, %v275
      %v1790 = vpop.permute.xlu0 %1789
      %vm1791 = vcmp.eq.s32.totalorder %v1790, %v281
      %1792 = vset.pattern.permute.xlu0 125
      %1793 = vperm.xlu0 %1792, %v276
      %v1794 = vpop.permute.xlu0 %1793
      %v1796 = vsel %vm1791, %v1794, 0.0
      %v1797 = vadd.f32 %v1787, %v1796
      %1798 = vset.pattern.permute.xlu0 126
      %1799 = vperm.xlu0 %1798, %v275
      %v1800 = vpop.permute.xlu0 %1799
      %vm1801 = vcmp.eq.s32.totalorder %v1800, %v281
      %1802 = vset.pattern.permute.xlu0 126
      %1803 = vperm.xlu0 %1802, %v276
      %v1804 = vpop.permute.xlu0 %1803
      %v1806 = vsel %vm1801, %v1804, 0.0
      %v1807 = vadd.f32 %v1797, %v1806
      %1808 = vset.pattern.permute.xlu0 127
      %1809 = vperm.xlu0 %1808, %v275
      %v1810 = vpop.permute.xlu0 %1809
      %vm1811 = vcmp.eq.s32.totalorder %v1810, %v281
      %1812 = vset.pattern.permute.xlu0 127
      %1813 = vperm.xlu0 %1812, %v276
      %v1814 = vpop.permute.xlu0 %1813
      %v1816 = vsel %vm1811, %v1814, 0.0
      %v1817 = vadd.f32 %v1807, %v1816
      %s1818 = scalar_lea.vmem %s259, 120
      %v1819 = vld [vmem:[%s1818] sm:$0xf]
      %v1820 = vld [vmem:[%s1818 + $0x4] sm:$0xf]
      %v1821 = vld [vmem:[%s1818 + $0x8] sm:$0xf]
      %v1822 = vld [vmem:[%s1818 + $0xc] sm:$0xf]
      %v1823 = vld [vmem:[%s1818 + $0x10] sm:$0xf]
      %v1824 = vld [vmem:[%s1818 + $0x14] sm:$0xf]
      %v1825 = vld [vmem:[%s1818 + $0x18] sm:$0xf]
      %v1826 = vld [vmem:[%s1818 + $0x1c] sm:$0xf]
      %v1827 = vld [vmem:[%s1818 + $0x20] sm:$0xf]
      %v1828 = vld [vmem:[%s1818 + $0x24] sm:$0xf]
      %v1829 = vpack.c.bf16 %v1817, %v1817
      %v1840 = vunpack.c.l.b16 %v1819
      %v1841 = vunpack.c.l.b16 %v1820
      %v1842 = vunpack.c.l.b16 %v1821
      %v1843 = vunpack.c.l.b16 %v1822
      %v1844 = vunpack.c.l.b16 %v1823
      %v1845 = vunpack.c.l.b16 %v1824
      %v1846 = vunpack.c.l.b16 %v1825
      %v1847 = vunpack.c.l.b16 %v1826
      %v1848 = vunpack.c.l.b16 %v1827
      %v1849 = vunpack.c.l.b16 %v1828
      %v1850 = vpack.c.b16 %v1841, %v1840
      %v1851 = vpack.c.b16 %v1843, %v1842
      %v1852 = vpack.c.b16 %v1845, %v1844
      %v1853 = vpack.c.b16 %v1847, %v1846
      %v1854 = vpack.c.b16 %v1849, %v1848
      %v1861 = vsel %vm644, %v1829, 0
      %1863 = vmatprep.subr.bf16.mxu0 0
      %1864 = vmatpush1.bf16.msra.mxu0 %v1850
      %1865 = vmatprep.subr.bf16.mxu0 0
      %1866 = vmatpush1.bf16.msra.mxu0 %v1851
      %1867 = vmatprep.subr.bf16.mxu0 0
      %1868 = vmatpush1.bf16.msra.mxu0 %v1852
      %1869 = vmatprep.subr.bf16.mxu0 0
      %1870 = vmatpush1.bf16.msra.mxu0 %v1853
      %1871 = vmatprep.subr.bf16.mxu0 0
      %1872 = vmatpush1.bf16.msra.mxu0 %v1854
      %1873 = vmatprep.subr.bf16.mxu0 0
      %1874 = vmatpush1.bf16.msra.mxu0 0
      %1875 = vmatprep.subr.bf16.mxu0 0
      %1876 = vmatpush1.bf16.msra.mxu0 0
      %1877 = vmatprep.subr.bf16.mxu0 0
      %1878 = vmatpush1.bf16.msra.mxu0 0
      %1879 = vmatprep.subr.bf16.mxu0 0
      %1880 = vmatpush1.bf16.msra.mxu0 0
      %1881 = vmatprep.subr.bf16.mxu0 0
      %1882 = vmatpush1.bf16.msra.mxu0 0
      %1883 = vmatprep.subr.bf16.mxu0 0
      %1884 = vmatpush1.bf16.msra.mxu0 0
      %1885 = vmatprep.subr.bf16.mxu0 0
      %1886 = vmatpush1.bf16.msra.mxu0 0
      %1887 = vmatprep.subr.bf16.mxu0 0
      %1888 = vmatpush1.bf16.msra.mxu0 0
      %1889 = vmatprep.subr.bf16.mxu0 0
      %1890 = vmatpush1.bf16.msra.mxu0 0
      %1891 = vmatprep.subr.bf16.mxu0 0
      %1892 = vmatpush1.bf16.msra.mxu0 0
      %1893 = vmatprep.subr.bf16.mxu0 0
      %1894 = vmatpush1.bf16.msra.mxu0 0
      %1895 = vmatprep.mubr.bf16.mxu0 0
      %1896 = vmatmul.mubr.bf16.gmra.mrb[0].mxu0 %v1861
      %v1897 = vpop.f32.mrb[0].mxu0
      %v1898 = vadd.f32 0.0, %v1897
      %v1899 = vpop.f32.mrb[0].mxu0
      %v1900 = vpop.f32.mrb[0].mxu0
      %v1901 = vpop.f32.mrb[0].mxu0
      %1902 = vdwg.mxu0
      %v1903 = vld [vmem:[#allocation2] sm:$0xff]
      %1905 = vrot.lane.b32.xlu0 %v1088, 8
      %v1906 = vpop.permute.xlu0 %1905
      %1909 = vrot.lane.b32.xlu0 %v1493, 16
      %v1910 = vpop.permute.xlu0 %1909
      %1913 = vrot.lane.b32.xlu0 %v1898, 24
      %v1914 = vpop.permute.xlu0 %1913
      %vm1916 = vcmask 64512
      %v1917 = vsel %vm1916, %v683, %v1906
      %vm1918 = vcmask 130048
      %v1919 = vsel %vm1918, %v1917, %v1910
      %vm1920 = vcmask 195584
      %v1921 = vsel %vm1920, %v1919, %v1914
      %v1922 = vadd.f32 %v1903, %v1921
      %vm1923 = vcmask 261120
      %1924 = vst.msk [vmem:[#allocation2] sm:$0xff] %vm1923, %v1922
      // Predicated region
      $region37: #{run.9} parent=31 // pred_check
        %p1925 = pneg %p269
      $region38: #{run.9} parent=31 // pred_check_branch
        %1927 = sbr.rel (%p1925) target = $region40
      $region39: #{run.9} parent=31 // pred_region
        %v1928 = vld [vmem:[#allocation2] sm:$0xff]
        %1929 = vst.msk [vmem:[%s267] sm:$0xff] %vm1923, %v1928
      $region40: #{run.9} parent=31 // pred_fallthru
        _
      %p1930 = scmp.lt.s32.totalorder %s19, 3
      %s1931 = scalar_select %p1930, %s19, 3
      %p1932 = scmp.lt.s32.totalorder %s20, 0
      %s1933 = scalar_select %p1932, %s20, 0
      %s1934 = sadd.s32 %s1933, %s1931
      %s1935 = smul.addr %s1934, 8
      %s1936 = scalar_lea.vmem %s3, %s1935
      // Predicated region
      $region41: #{run.9} parent=31 // pred_check
        %p1937 = pneg %p137
      $region42: #{run.9} parent=31 // pred_check_branch
        %1939 = sbr.rel (%p1937) target = $region44
      $region43: #{run.9} parent=31 // pred_region
        _
      $region44: #{run.9} parent=31 // pred_fallthru
        _
    $region32: #{run.9} parent=5 // pred_fallthru
      _
    %p1940 = scmp.le.s32.totalorder 2, %s9
    // Predicated region
    $region45: #{run.9} parent=5 // pred_check
      %p1941 = pneg %p1940
    $region46: #{run.9} parent=5 // pred_check_branch
      %1943 = sbr.rel (%p1941) target = $region48
    $region47: #{run.9} parent=5 // pred_region
      %s1944 = ssub.s32 %s9, 2
      // Predicated region
      $region49: #{run.9} parent=47 // pred_check
        %p1945 = pneg %p143
      $region50: #{run.9} parent=47 // pred_check_branch
        %1947 = sbr.rel (%p1945) target = $region52
      $region51: #{run.9} parent=47 // pred_region
        %p1948 = scmp.lt.s32.totalorder %s22, 3
        %s1949 = scalar_select %p1948, %s22, 3
        %p1950 = scmp.lt.s32.totalorder %s23, 0
        %s1951 = scalar_select %p1950, %s23, 0
        %s1952 = sadd.s32 %s1951, %s1949
        %s1953 = smul.addr %s1952, 8
        %s1954 = scalar_lea.vmem %s3, %s1953
      $region52: #{run.9} parent=47 // pred_fallthru
        _
    $region48: #{run.9} parent=5 // pred_fallthru
      _
  $region6: #{run.9} parent=0 // loop_footer
    %s13 = sadd.s32 1, %s9
  $region7: #{run.9} parent=0 // loop_footer_branch
    %8 = sbr.rel target = $region3
  $region8: #{run.9} parent=0 // loop_exit
    _

</llo_original>
